<compile_context>
chip_gen: v6e
topology: v6e:2x2x1
jax: 0.10.0
libtpu: 0.0.40
codegen_flags: <defaults>
</compile_context>

<pallas_src>
import jax
import jax.numpy as jnp
from jax.experimental import pallas as pl
from jax.experimental.pallas import tpu as pltpu


# ----------------------------- Pallas kernel -----------------------------
def bottleneck_kernel(x_up_ref, x_ref, x_dn_ref,
                      w1_ref, b1_ref, w2_ref, b2_ref, w3_ref, b3_ref,
                      out_ref, ypad_ref):
    # x_ref:    (TH, W, Cin)   current row tile (batch dim squeezed)
    # x_up_ref: (1,  W, Cin)   row above the tile (clamped at the top image edge)
    # x_dn_ref: (1,  W, Cin)   row below the tile (clamped at the bottom image edge)
    # w1_ref: (Cin, Cmid) bf16   w2_ref: (9*Cmid, Cmid) bf16   w3_ref: (Cmid, Cout) bf16
    # biases: (1, C) f32.  ypad_ref: (TH+2, W+2, Cmid) bf16 staging scratch for the 3x3 conv.
    TH, W, Cin = x_ref.shape
    Cmid = w1_ref.shape[1]
    Cout = w3_ref.shape[1]

    i = pl.program_id(1)
    last = pl.num_programs(1) - 1

    # ---- stage 1: 1x1 conv (BN1 folded) + bias + ReLU, written straight into the padded scratch ----
    # body rows
    xb = x_ref[...].reshape(TH * W, Cin).astype(jnp.bfloat16)
    y1b = jnp.dot(xb, w1_ref[...], preferred_element_type=jnp.float32)
    y1b = jnp.maximum(y1b + b1_ref[...], 0.0)
    ypad_ref[pl.ds(1, TH), pl.ds(1, W), :] = y1b.reshape(TH, W, Cmid).astype(jnp.bfloat16)

    # top halo row (overwritten with zeros at the top image edge below)
    xu = x_up_ref[...].reshape(W, Cin).astype(jnp.bfloat16)
    y1u = jnp.dot(xu, w1_ref[...], preferred_element_type=jnp.float32)
    y1u = jnp.maximum(y1u + b1_ref[...], 0.0)
    ypad_ref[pl.ds(0, 1), pl.ds(1, W), :] = y1u.reshape(1, W, Cmid).astype(jnp.bfloat16)

    # bottom halo row (overwritten with zeros at the bottom image edge below)
    xd = x_dn_ref[...].reshape(W, Cin).astype(jnp.bfloat16)
    y1d = jnp.dot(xd, w1_ref[...], preferred_element_type=jnp.float32)
    y1d = jnp.maximum(y1d + b1_ref[...], 0.0)
    ypad_ref[pl.ds(TH + 1, 1), pl.ds(1, W), :] = y1d.reshape(1, W, Cmid).astype(jnp.bfloat16)

    # zero-padding columns of the 3x3 conv (re-zeroed every step: scratch is per-core persistent)
    zcol = jnp.zeros((TH + 2, 1, Cmid), jnp.bfloat16)
    ypad_ref[pl.ds(0, TH + 2), pl.ds(0, 1), :] = zcol
    ypad_ref[pl.ds(0, TH + 2), pl.ds(W + 1, 1), :] = zcol

    zrow = jnp.zeros((1, W + 2, Cmid), jnp.bfloat16)

    @pl.when(i == 0)           # top image edge: halo row is the 3x3 conv's zero padding
    def _():
        ypad_ref[pl.ds(0, 1), pl.ds(0, W + 2), :] = zrow

    @pl.when(i == last)        # bottom image edge
    def _():
        ypad_ref[pl.ds(TH + 1, 1), pl.ds(0, W + 2), :] = zrow

    # ---- stage 2: 3x3 conv (BN2 folded) as ONE im2col matmul, f32 accumulation ----
    patches = []
    for kh in range(3):
        for kw in range(3):
            patches.append(ypad_ref[pl.ds(kh, TH), pl.ds(kw, W), :].reshape(TH * W, Cmid))
    xcol = jnp.concatenate(patches, axis=-1)                     # (TH*W, 9*Cmid) bf16
    y2 = jnp.dot(xcol, w2_ref[...], preferred_element_type=jnp.float32)
    y2 = jnp.maximum(y2 + b2_ref[...], 0.0)

    # ---- stage 3: 1x1 expansion (BN3 folded) + bias, identity residual, ReLU ----
    y3 = jnp.dot(y2.astype(jnp.bfloat16), w3_ref[...], preferred_element_type=jnp.float32)
    y3 = y3 + b3_ref[...]
    res = x_ref[...].reshape(TH * W, Cout)           # identity shortcut (Cin == Cout), f32
    out = jnp.maximum(y3 + res, 0.0)
    out_ref[...] = out.reshape(TH, W, Cout).astype(out_ref.dtype)


# ----------------------------- wrapper -----------------------------
def bottleneck_forward(x_nchw, params, tile_rows=None):
    w1, s1, b1, w2, s2, b2, w3, s3, b3 = params
    x = jnp.transpose(x_nchw, (0, 2, 3, 1))          # NCHW -> NHWC (channels on lanes)
    N, H, W, Cin = x.shape
    Cmid = w1.shape[1]
    Cout = w3.shape[1]
    assert Cin == Cout, "identity shortcut requires inchannel == outchannel*4"

    # Fold BN scales into the conv weights; cast weights to bf16 for the MXU.
    w1f = (w1 * s1).astype(jnp.bfloat16)                                     # (Cin, Cmid)
    w2f = (w2 * s2.reshape(1, 1, Cmid)).astype(jnp.bfloat16)                 # (9, Cmid, Cmid)
    w2f = w2f.reshape(9 * Cmid, Cmid)                                        # im2col layout (K, Cmid)
    w3f = (w3 * s3).astype(jnp.bfloat16)                                     # (Cmid, Cout)
    b1f = b1.astype(jnp.float32)
    b2f = b2.astype(jnp.float32)
    b3f = b3.astype(jnp.float32)

    # --- generation-aware VMEM budget (v5e/v6e: 128 MiB, v7x: 64 MiB per TensorCore) ---
    try:
        vmem_phys = int(pltpu.get_tpu_info().vmem_capacity_bytes)
    except Exception:
        vmem_phys = 64 << 20                          # conservative fallback (v7x per-TC)
    vmem_budget = vmem_phys // 3                      # tile-selection budget (headroom for dbl-buffers)

    itemsize = x.dtype.itemsize

    def vmem_estimate(th):
        bytes_x = (th + 2) * W * Cin * itemsize       # tile + 2 halo-row blocks
        bytes_out = th * W * Cout * itemsize
        bytes_w = 2 * (w1f.size + w2f.size + w3f.size) + 4 * (b1f.size + b2f.size + b3f.size)
        bytes_scr = (th + 2) * (W + 2) * Cmid * 2     # bf16 staging scratch
        bytes_col = th * W * 9 * Cmid * 2             # im2col operand (bf16)
        bytes_tmp = 2 * th * W * max(Cmid, Cout) * 4  # f32 intermediates headroom
        return 2 * (bytes_x + bytes_out) + 2 * bytes_w + bytes_scr + bytes_col + bytes_tmp

    # Row tile: take the whole image's rows when it fits the budget (amortizes halo recompute and
    # per-step pipeline overhead), otherwise the largest divisor of H that fits.
    if tile_rows is None:
        TH = 1
        for d in range(H, 0, -1):
            if H % d == 0 and vmem_estimate(d) <= vmem_budget:
                TH = d
                break
    else:
        TH = max(1, min(int(tile_rows), H))
        while H % TH:
            TH -= 1
    n_row_tiles = H // TH

    # v7x megacore: make sure the (parallel) grid has >= 2 total steps so both TCs get work.
    if N * n_row_tiles < 2 and H >= 2:
        TH = H // 2
        while H % TH:
            TH -= 1
        n_row_tiles = H // TH

    est = vmem_estimate(TH)
    vmem_limit = int(min((vmem_phys * 3) // 4, max(16 << 20, 3 * est)))

    def const_spec(a):
        nd = a.ndim
        return pl.BlockSpec(a.shape, lambda n, i, _nd=nd: (0,) * _nd)

    out = pl.pallas_call(
        bottleneck_kernel,
        out_shape=jax.ShapeDtypeStruct((N, H, W, Cout), x.dtype),
        grid=(N, n_row_tiles),
        in_specs=[
            # 1-row halo above (clamped at the top edge; replaced by zeros in-kernel there)
            pl.BlockSpec((None, 1, W, Cin),
                         lambda n, i: (n, jnp.maximum(i * TH - 1, 0), 0, 0)),
            # current TH-row tile
            pl.BlockSpec((None, TH, W, Cin), lambda n, i: (n, i, 0, 0)),
            # 1-row halo below (clamped at the bottom edge; replaced by zeros in-kernel there)
            pl.BlockSpec((None, 1, W, Cin),
                         lambda n, i: (n, jnp.minimum((i + 1) * TH, H - 1), 0, 0)),
            const_spec(w1f), const_spec(b1f),
            const_spec(w2f), const_spec(b2f),
            const_spec(w3f), const_spec(b3f),
        ],
        out_specs=pl.BlockSpec((None, TH, W, Cout), lambda n, i: (n, i, 0, 0)),
        scratch_shapes=[pltpu.VMEM((TH + 2, W + 2, Cmid), jnp.bfloat16)],
        compiler_params=pltpu.CompilerParams(
            dimension_semantics=("parallel", "parallel"),
            vmem_limit_bytes=vmem_limit),
    )(x, x, x, w1f, b1f, w2f, b2f, w3f, b3f)
    return jnp.transpose(out, (0, 3, 1, 2))          # NHWC -> NCHW


# ----------------------------- params (deterministic, synthetic) -----------------------------
def make_params(key, inchannel, outchannel):
    cmid = outchannel
    cout = outchannel * 4
    ks = jax.random.split(key, 15)

    def bn_fold(k0, k1, k2, k3, c):
        gamma = jax.random.uniform(k0, (c,), jnp.float32, 0.5, 1.5)
        beta = 0.1 * jax.random.normal(k1, (c,), jnp.float32)
        mean = 0.1 * jax.random.normal(k2, (c,), jnp.float32)
        var = jax.random.uniform(k3, (c,), jnp.float32, 0.5, 1.5)
        scale = gamma / jnp.sqrt(var + 1e-5)
        bias = beta - mean * scale
        return scale.reshape(1, c), bias.reshape(1, c)

    w1 = 0.2 * jax.random.normal(ks[0], (inchannel, cmid), jnp.float32)       # 1x1 conv: (Cin, Cmid)
    s1, b1 = bn_fold(ks[1], ks[2], ks[3], ks[4], cmid)
    w2 = 0.2 * jax.random.normal(ks[5], (9, cmid, cmid), jnp.float32)         # 3x3 taps, (kh*3+kw, I, O)
    s2, b2 = bn_fold(ks[6], ks[7], ks[8], ks[9], cmid)
    w3 = 0.2 * jax.random.normal(ks[10], (cmid, cout), jnp.float32)           # 1x1 conv: (Cmid, Cout)
    s3, b3 = bn_fold(ks[11], ks[12], ks[13], ks[14], cout)
    return (w1, s1, b1, w2, s2, b2, w3, s3, b3)


# ----------------------------- pure-JAX reference (f32) -----------------------------
def bottleneck_reference(x_nchw, params):
    w1, s1, b1, w2, s2, b2, w3, s3, b3 = params
    x = jnp.transpose(x_nchw, (0, 2, 3, 1))
    dn = ('NHWC', 'HWIO', 'NHWC')
    cin, cmid = w1.shape
    cout = w3.shape[1]
    y = jax.lax.conv_general_dilated(x, w1.reshape(1, 1, cin, cmid), (1, 1), 'VALID',
                                     dimension_numbers=dn)
    y = jnp.maximum(y * s1.reshape(1, 1, 1, -1) + b1.reshape(1, 1, 1, -1), 0.0)
    y = jax.lax.conv_general_dilated(y, w2.reshape(3, 3, cmid, cmid), (1, 1),
                                     ((1, 1), (1, 1)), dimension_numbers=dn)
    y = jnp.maximum(y * s2.reshape(1, 1, 1, -1) + b2.reshape(1, 1, 1, -1), 0.0)
    y = jax.lax.conv_general_dilated(y, w3.reshape(1, 1, cmid, cout), (1, 1), 'VALID',
                                     dimension_numbers=dn)
    y = y * s3.reshape(1, 1, 1, -1) + b3.reshape(1, 1, 1, -1)
    y = jnp.maximum(y + x, 0.0)
    return jnp.transpose(y, (0, 3, 1, 2))


if __name__ == "__main__":
    # small but lane-friendly shapes: batch=2, outchannel=32 -> inchannel = 4*32 = 128, spatial 16x16.
    # Default tiling takes the whole image per step (grid = (2, 1) = 2 parallel steps); also run a
    # tiled variant (tile_rows=8) so the halo path across row tiles is exercised.
    N, outchannel, H, W = 2, 32, 16, 16
    inchannel = outchannel * 4

    key = jax.random.PRNGKey(0)
    kx, kp = jax.random.split(key)
    x = jax.random.normal(kx, (N, inchannel, H, W), jnp.float32)   # NCHW like PyTorch
    params = make_params(kp, inchannel, outchannel)

    ref = bottleneck_reference(x, params)

    for tr in (None, 8):
        out = jax.block_until_ready(bottleneck_forward(x, params, tile_rows=tr))
        assert out.shape == (N, outchannel * 4, H, W)
        max_err = float(jnp.max(jnp.abs(out - ref)))
        rel_err = float(jnp.linalg.norm(out - ref) / jnp.linalg.norm(ref))
        # bf16 MXU inputs (f32 accumulation) vs the pure-f32 reference
        assert rel_err < 1e-2 and max_err < 0.25, \
            f"mismatch vs reference (tile_rows={tr}): rel={rel_err}, max={max_err}"
    print("KERNEL_OK")
</pallas_src>

<mosaic_0001>
module attributes {stable_mosaic.version = 11 : i64} {
  func.func @bottleneck_kernel(%arg0: i32, %arg1: i32, %arg2: memref<1x1x16x128xf32, #tpu.memory_space<vmem>>, %arg3: memref<1x16x16x128xf32, #tpu.memory_space<vmem>>, %arg4: memref<1x1x16x128xf32, #tpu.memory_space<vmem>>, %arg5: memref<128x32xbf16, #tpu.memory_space<vmem>>, %arg6: memref<1x32xf32, #tpu.memory_space<vmem>>, %arg7: memref<288x32xbf16, #tpu.memory_space<vmem>>, %arg8: memref<1x32xf32, #tpu.memory_space<vmem>>, %arg9: memref<32x128xbf16, #tpu.memory_space<vmem>>, %arg10: memref<1x128xf32, #tpu.memory_space<vmem>>, %arg11: memref<1x16x16x128xf32, #tpu.memory_space<vmem>>, %arg12: memref<18x18x32xbf16, #tpu.memory_space<vmem>>) attributes {dimension_semantics = [#tpu.dimension_semantics<parallel>, #tpu.dimension_semantics<parallel>], iteration_bounds = array<i64: 2, 1>, scalar_prefetch = 0 : i64, scratch_operands = 1 : i64, tpu.core_type = #tpu.core_type<tc>, window_params = [{transform_indices = @transform_0, window_bounds = array<i64: 1, 1, 16, 128>}, {transform_indices = @transform_1, window_bounds = array<i64: 1, 16, 16, 128>}, {transform_indices = @transform_2, window_bounds = array<i64: 1, 1, 16, 128>}, {pipeline_mode = #tpu.pipeline_mode<synchronous>, transform_indices = @transform_3, window_bounds = array<i64: 128, 32>}, {pipeline_mode = #tpu.pipeline_mode<synchronous>, transform_indices = @transform_4, window_bounds = array<i64: 1, 32>}, {pipeline_mode = #tpu.pipeline_mode<synchronous>, transform_indices = @transform_5, window_bounds = array<i64: 288, 32>}, {pipeline_mode = #tpu.pipeline_mode<synchronous>, transform_indices = @transform_6, window_bounds = array<i64: 1, 32>}, {pipeline_mode = #tpu.pipeline_mode<synchronous>, transform_indices = @transform_7, window_bounds = array<i64: 32, 128>}, {pipeline_mode = #tpu.pipeline_mode<synchronous>, transform_indices = @transform_8, window_bounds = array<i64: 1, 128>}, {transform_indices = @transform_9, window_bounds = array<i64: 1, 16, 16, 128>}]} {
    %c0 = arith.constant 0 : index
    %c0_0 = arith.constant 0 : index
    %c0_1 = arith.constant 0 : index
    %c0_2 = arith.constant 0 : index
    %0 = vector.load %arg3[%c0, %c0_0, %c0_1, %c0_2] : memref<1x16x16x128xf32, #tpu.memory_space<vmem>>, vector<1x16x16x128xf32>
    %1 = vector.shape_cast %0 : vector<1x16x16x128xf32> to vector<16x16x128xf32>
    %2 = vector.shape_cast %1 : vector<16x16x128xf32> to vector<256x128xf32>
    %3 = arith.truncf %2 : vector<256x128xf32> to vector<256x128xbf16>
    %c0_3 = arith.constant 0 : index
    %c0_4 = arith.constant 0 : index
    %4 = vector.load %arg5[%c0_3, %c0_4] : memref<128x32xbf16, #tpu.memory_space<vmem>>, vector<128x32xbf16>
    %cst = arith.constant dense<0.000000e+00> : vector<256x32xf32>
    %5 = tpu.matmul %3, %4, %cst {dimension_numbers = #tpu.dot_dimension_numbers<[1], [0], [0], [1], [0, 0, 1, 1], [], []>} : vector<256x128xbf16>, vector<128x32xbf16>, vector<256x32xf32> -> vector<256x32xf32>
    %c0_5 = arith.constant 0 : index
    %c0_6 = arith.constant 0 : index
    %6 = vector.load %arg6[%c0_5, %c0_6] : memref<1x32xf32, #tpu.memory_space<vmem>>, vector<1x32xf32>
    %7 = vector.broadcast %6 : vector<1x32xf32> to vector<256x32xf32>
    %8 = arith.addf %5, %7 : vector<256x32xf32>
    %cst_7 = arith.constant 0.000000e+00 : f32
    %9 = vector.broadcast %cst_7 : f32 to vector<256x32xf32>
    %10 = arith.maximumf %8, %9 : vector<256x32xf32>
    %11 = vector.shape_cast %10 : vector<256x32xf32> to vector<16x16x32xf32>
    %12 = arith.truncf %11 : vector<16x16x32xf32> to vector<16x16x32xbf16>
    %c1 = arith.constant 1 : index
    %c1_8 = arith.constant 1 : index
    %c0_9 = arith.constant 0 : index
    %13 = vector.load %arg12[%c1, %c1_8, %c0_9] : memref<18x18x32xbf16, #tpu.memory_space<vmem>>, vector<16x16x32xbf16>
    tpu.vector_store %arg12[%c1, %c1_8, %c0_9], %12 {strides = array<i32>} : memref<18x18x32xbf16, #tpu.memory_space<vmem>>, vector<16x16x32xbf16>,
    %c0_10 = arith.constant 0 : index
    %c0_11 = arith.constant 0 : index
    %c0_12 = arith.constant 0 : index
    %c0_13 = arith.constant 0 : index
    %14 = vector.load %arg2[%c0_10, %c0_11, %c0_12, %c0_13] : memref<1x1x16x128xf32, #tpu.memory_space<vmem>>, vector<1x1x16x128xf32>
    %15 = vector.shape_cast %14 : vector<1x1x16x128xf32> to vector<1x16x128xf32>
    %16 = vector.shape_cast %15 : vector<1x16x128xf32> to vector<16x128xf32>
    %17 = arith.truncf %16 : vector<16x128xf32> to vector<16x128xbf16>
    %c0_14 = arith.constant 0 : index
    %c0_15 = arith.constant 0 : index
    %18 = vector.load %arg5[%c0_14, %c0_15] : memref<128x32xbf16, #tpu.memory_space<vmem>>, vector<128x32xbf16>
    %cst_16 = arith.constant dense<0.000000e+00> : vector<16x32xf32>
    %19 = tpu.matmul %17, %18, %cst_16 {dimension_numbers = #tpu.dot_dimension_numbers<[1], [0], [0], [1], [0, 0, 1, 1], [], []>} : vector<16x128xbf16>, vector<128x32xbf16>, vector<16x32xf32> -> vector<16x32xf32>
    %c0_17 = arith.constant 0 : index
    %c0_18 = arith.constant 0 : index
    %20 = vector.load %arg6[%c0_17, %c0_18] : memref<1x32xf32, #tpu.memory_space<vmem>>, vector<1x32xf32>
    %21 = vector.broadcast %20 : vector<1x32xf32> to vector<16x32xf32>
    %22 = arith.addf %19, %21 : vector<16x32xf32>
    %cst_19 = arith.constant 0.000000e+00 : f32
    %23 = vector.broadcast %cst_19 : f32 to vector<16x32xf32>
    %24 = arith.maximumf %22, %23 : vector<16x32xf32>
    %25 = vector.shape_cast %24 : vector<16x32xf32> to vector<1x16x32xf32>
    %26 = arith.truncf %25 : vector<1x16x32xf32> to vector<1x16x32xbf16>
    %c0_20 = arith.constant 0 : index
    %c1_21 = arith.constant 1 : index
    %c0_22 = arith.constant 0 : index
    %27 = vector.load %arg12[%c0_20, %c1_21, %c0_22] : memref<18x18x32xbf16, #tpu.memory_space<vmem>>, vector<1x16x32xbf16>
    tpu.vector_store %arg12[%c0_20, %c1_21, %c0_22], %26 {strides = array<i32>} : memref<18x18x32xbf16, #tpu.memory_space<vmem>>, vector<1x16x32xbf16>,
    %c0_23 = arith.constant 0 : index
    %c0_24 = arith.constant 0 : index
    %c0_25 = arith.constant 0 : index
    %c0_26 = arith.constant 0 : index
    %28 = vector.load %arg4[%c0_23, %c0_24, %c0_25, %c0_26] : memref<1x1x16x128xf32, #tpu.memory_space<vmem>>, vector<1x1x16x128xf32>
    %29 = vector.shape_cast %28 : vector<1x1x16x128xf32> to vector<1x16x128xf32>
    %30 = vector.shape_cast %29 : vector<1x16x128xf32> to vector<16x128xf32>
    %31 = arith.truncf %30 : vector<16x128xf32> to vector<16x128xbf16>
    %c0_27 = arith.constant 0 : index
    %c0_28 = arith.constant 0 : index
    %32 = vector.load %arg5[%c0_27, %c0_28] : memref<128x32xbf16, #tpu.memory_space<vmem>>, vector<128x32xbf16>
    %cst_29 = arith.constant dense<0.000000e+00> : vector<16x32xf32>
    %33 = tpu.matmul %31, %32, %cst_29 {dimension_numbers = #tpu.dot_dimension_numbers<[1], [0], [0], [1], [0, 0, 1, 1], [], []>} : vector<16x128xbf16>, vector<128x32xbf16>, vector<16x32xf32> -> vector<16x32xf32>
    %c0_30 = arith.constant 0 : index
    %c0_31 = arith.constant 0 : index
    %34 = vector.load %arg6[%c0_30, %c0_31] : memref<1x32xf32, #tpu.memory_space<vmem>>, vector<1x32xf32>
    %35 = vector.broadcast %34 : vector<1x32xf32> to vector<16x32xf32>
    %36 = arith.addf %33, %35 : vector<16x32xf32>
    %cst_32 = arith.constant 0.000000e+00 : f32
    %37 = vector.broadcast %cst_32 : f32 to vector<16x32xf32>
    %38 = arith.maximumf %36, %37 : vector<16x32xf32>
    %39 = vector.shape_cast %38 : vector<16x32xf32> to vector<1x16x32xf32>
    %40 = arith.truncf %39 : vector<1x16x32xf32> to vector<1x16x32xbf16>
    %c17 = arith.constant 17 : index
    %c1_33 = arith.constant 1 : index
    %c0_34 = arith.constant 0 : index
    %41 = vector.load %arg12[%c17, %c1_33, %c0_34] : memref<18x18x32xbf16, #tpu.memory_space<vmem>>, vector<1x16x32xbf16>
    tpu.vector_store %arg12[%c17, %c1_33, %c0_34], %40 {strides = array<i32>} : memref<18x18x32xbf16, #tpu.memory_space<vmem>>, vector<1x16x32xbf16>,
    %cst_35 = arith.constant 0.000000e+00 : bf16
    %42 = vector.broadcast %cst_35 : bf16 to vector<18x1x32xbf16>
    %c0_36 = arith.constant 0 : index
    %c0_37 = arith.constant 0 : index
    %c0_38 = arith.constant 0 : index
    %43 = vector.load %arg12[%c0_36, %c0_37, %c0_38] : memref<18x18x32xbf16, #tpu.memory_space<vmem>>, vector<18x1x32xbf16>
    tpu.vector_store %arg12[%c0_36, %c0_37, %c0_38], %42 {strides = array<i32>} : memref<18x18x32xbf16, #tpu.memory_space<vmem>>, vector<18x1x32xbf16>,
    %c0_39 = arith.constant 0 : index
    %c17_40 = arith.constant 17 : index
    %c0_41 = arith.constant 0 : index
    %44 = vector.load %arg12[%c0_39, %c17_40, %c0_41] : memref<18x18x32xbf16, #tpu.memory_space<vmem>>, vector<18x1x32xbf16>
    tpu.vector_store %arg12[%c0_39, %c17_40, %c0_41], %42 {strides = array<i32>} : memref<18x18x32xbf16, #tpu.memory_space<vmem>>, vector<18x1x32xbf16>,
    %cst_42 = arith.constant 0.000000e+00 : bf16
    %45 = vector.broadcast %cst_42 : bf16 to vector<1x18x32xbf16>
    %c0_i32 = arith.constant 0 : i32
    %46 = arith.cmpi eq, %arg1, %c0_i32 : i32
    %47 = arith.extui %46 : i1 to i32
    %c0_i32_43 = arith.constant 0 : i32
    %48 = arith.cmpi ne, %47, %c0_i32_43 : i32
    scf.if %48 {
      %c0_92 = arith.constant 0 : index
      %c0_93 = arith.constant 0 : index
      %c0_94 = arith.constant 0 : index
      %94 = vector.load %arg12[%c0_92, %c0_93, %c0_94] : memref<18x18x32xbf16, #tpu.memory_space<vmem>>, vector<1x18x32xbf16>
      tpu.vector_store %arg12[%c0_92, %c0_93, %c0_94], %45 {strides = array<i32>} : memref<18x18x32xbf16, #tpu.memory_space<vmem>>, vector<1x18x32xbf16>,
    } else {
    }
    %c0_i32_44 = arith.constant 0 : i32
    %49 = arith.cmpi eq, %arg1, %c0_i32_44 : i32
    %50 = arith.extui %49 : i1 to i32
    %c0_i32_45 = arith.constant 0 : i32
    %51 = arith.cmpi ne, %50, %c0_i32_45 : i32
    scf.if %51 {
      %c17_92 = arith.constant 17 : index
      %c0_93 = arith.constant 0 : index
      %c0_94 = arith.constant 0 : index
      %94 = vector.load %arg12[%c17_92, %c0_93, %c0_94] : memref<18x18x32xbf16, #tpu.memory_space<vmem>>, vector<1x18x32xbf16>
      tpu.vector_store %arg12[%c17_92, %c0_93, %c0_94], %45 {strides = array<i32>} : memref<18x18x32xbf16, #tpu.memory_space<vmem>>, vector<1x18x32xbf16>,
    } else {
    }
    %c0_46 = arith.constant 0 : index
    %c0_47 = arith.constant 0 : index
    %c0_48 = arith.constant 0 : index
    %52 = vector.load %arg12[%c0_46, %c0_47, %c0_48] : memref<18x18x32xbf16, #tpu.memory_space<vmem>>, vector<16x16x32xbf16>
    %53 = vector.shape_cast %52 : vector<16x16x32xbf16> to vector<256x32xbf16>
    %c0_49 = arith.constant 0 : index
    %c1_50 = arith.constant 1 : index
    %c0_51 = arith.constant 0 : index
    %54 = vector.load %arg12[%c0_49, %c1_50, %c0_51] : memref<18x18x32xbf16, #tpu.memory_space<vmem>>, vector<16x16x32xbf16>
    %55 = vector.shape_cast %54 : vector<16x16x32xbf16> to vector<256x32xbf16>
    %c0_52 = arith.constant 0 : index
    %c2 = arith.constant 2 : index
    %c0_53 = arith.constant 0 : index
    %56 = vector.load %arg12[%c0_52, %c2, %c0_53] : memref<18x18x32xbf16, #tpu.memory_space<vmem>>, vector<16x16x32xbf16>
    %57 = vector.shape_cast %56 : vector<16x16x32xbf16> to vector<256x32xbf16>
    %c1_54 = arith.constant 1 : index
    %c0_55 = arith.constant 0 : index
    %c0_56 = arith.constant 0 : index
    %58 = vector.load %arg12[%c1_54, %c0_55, %c0_56] : memref<18x18x32xbf16, #tpu.memory_space<vmem>>, vector<16x16x32xbf16>
    %59 = vector.shape_cast %58 : vector<16x16x32xbf16> to vector<256x32xbf16>
    %c1_57 = arith.constant 1 : index
    %c1_58 = arith.constant 1 : index
    %c0_59 = arith.constant 0 : index
    %60 = vector.load %arg12[%c1_57, %c1_58, %c0_59] : memref<18x18x32xbf16, #tpu.memory_space<vmem>>, vector<16x16x32xbf16>
    %61 = vector.shape_cast %60 : vector<16x16x32xbf16> to vector<256x32xbf16>
    %c1_60 = arith.constant 1 : index
    %c2_61 = arith.constant 2 : index
    %c0_62 = arith.constant 0 : index
    %62 = vector.load %arg12[%c1_60, %c2_61, %c0_62] : memref<18x18x32xbf16, #tpu.memory_space<vmem>>, vector<16x16x32xbf16>
    %63 = vector.shape_cast %62 : vector<16x16x32xbf16> to vector<256x32xbf16>
    %c2_63 = arith.constant 2 : index
    %c0_64 = arith.constant 0 : index
    %c0_65 = arith.constant 0 : index
    %64 = vector.load %arg12[%c2_63, %c0_64, %c0_65] : memref<18x18x32xbf16, #tpu.memory_space<vmem>>, vector<16x16x32xbf16>
    %65 = vector.shape_cast %64 : vector<16x16x32xbf16> to vector<256x32xbf16>
    %c2_66 = arith.constant 2 : index
    %c1_67 = arith.constant 1 : index
    %c0_68 = arith.constant 0 : index
    %66 = vector.load %arg12[%c2_66, %c1_67, %c0_68] : memref<18x18x32xbf16, #tpu.memory_space<vmem>>, vector<16x16x32xbf16>
    %67 = vector.shape_cast %66 : vector<16x16x32xbf16> to vector<256x32xbf16>
    %c2_69 = arith.constant 2 : index
    %c2_70 = arith.constant 2 : index
    %c0_71 = arith.constant 0 : index
    %68 = vector.load %arg12[%c2_69, %c2_70, %c0_71] : memref<18x18x32xbf16, #tpu.memory_space<vmem>>, vector<16x16x32xbf16>
    %69 = vector.shape_cast %68 : vector<16x16x32xbf16> to vector<256x32xbf16>
    %70 = tpu.concatenate %53, %55, %57, %59, %61, %63, %65, %67, %69 in 1 : vector<256x32xbf16>, vector<256x32xbf16>, vector<256x32xbf16>, vector<256x32xbf16>, vector<256x32xbf16>, vector<256x32xbf16>, vector<256x32xbf16>, vector<256x32xbf16>, vector<256x32xbf16> -> vector<256x288xbf16>
    %c0_72 = arith.constant 0 : index
    %c0_73 = arith.constant 0 : index
    %71 = vector.load %arg7[%c0_72, %c0_73] : memref<288x32xbf16, #tpu.memory_space<vmem>>, vector<288x32xbf16>
    %cst_74 = arith.constant dense<0.000000e+00> : vector<256x32xf32>
    %72 = tpu.matmul %70, %71, %cst_74 {dimension_numbers = #tpu.dot_dimension_numbers<[1], [0], [0], [1], [0, 0, 1, 1], [], []>} : vector<256x288xbf16>, vector<288x32xbf16>, vector<256x32xf32> -> vector<256x32xf32>
    %c0_75 = arith.constant 0 : index
    %c0_76 = arith.constant 0 : index
    %73 = vector.load %arg8[%c0_75, %c0_76] : memref<1x32xf32, #tpu.memory_space<vmem>>, vector<1x32xf32>
    %74 = vector.broadcast %73 : vector<1x32xf32> to vector<256x32xf32>
    %75 = arith.addf %72, %74 : vector<256x32xf32>
    %cst_77 = arith.constant 0.000000e+00 : f32
    %76 = vector.broadcast %cst_77 : f32 to vector<256x32xf32>
    %77 = arith.maximumf %75, %76 : vector<256x32xf32>
    %78 = arith.truncf %77 : vector<256x32xf32> to vector<256x32xbf16>
    %c0_78 = arith.constant 0 : index
    %c0_79 = arith.constant 0 : index
    %79 = vector.load %arg9[%c0_78, %c0_79] : memref<32x128xbf16, #tpu.memory_space<vmem>>, vector<32x128xbf16>
    %cst_80 = arith.constant dense<0.000000e+00> : vector<256x128xf32>
    %80 = tpu.matmul %78, %79, %cst_80 {dimension_numbers = #tpu.dot_dimension_numbers<[1], [0], [0], [1], [0, 0, 1, 1], [], []>} : vector<256x32xbf16>, vector<32x128xbf16>, vector<256x128xf32> -> vector<256x128xf32>
    %c0_81 = arith.constant 0 : index
    %c0_82 = arith.constant 0 : index
    %81 = vector.load %arg10[%c0_81, %c0_82] : memref<1x128xf32, #tpu.memory_space<vmem>>, vector<1x128xf32>
    %82 = vector.broadcast %81 : vector<1x128xf32> to vector<256x128xf32>
    %83 = arith.addf %80, %82 : vector<256x128xf32>
    %c0_83 = arith.constant 0 : index
    %c0_84 = arith.constant 0 : index
    %c0_85 = arith.constant 0 : index
    %c0_86 = arith.constant 0 : index
    %84 = vector.load %arg3[%c0_83, %c0_84, %c0_85, %c0_86] : memref<1x16x16x128xf32, #tpu.memory_space<vmem>>, vector<1x16x16x128xf32>
    %85 = vector.shape_cast %84 : vector<1x16x16x128xf32> to vector<16x16x128xf32>
    %86 = vector.shape_cast %85 : vector<16x16x128xf32> to vector<256x128xf32>
    %87 = arith.addf %83, %86 : vector<256x128xf32>
    %cst_87 = arith.constant 0.000000e+00 : f32
    %88 = vector.broadcast %cst_87 : f32 to vector<256x128xf32>
    %89 = arith.maximumf %87, %88 : vector<256x128xf32>
    %90 = vector.shape_cast %89 : vector<256x128xf32> to vector<16x16x128xf32>
    %c0_88 = arith.constant 0 : index
    %c0_89 = arith.constant 0 : index
    %c0_90 = arith.constant 0 : index
    %c0_91 = arith.constant 0 : index
    %91 = vector.load %arg11[%c0_88, %c0_89, %c0_90, %c0_91] : memref<1x16x16x128xf32, #tpu.memory_space<vmem>>, vector<1x16x16x128xf32>
    %92 = vector.shape_cast %91 : vector<1x16x16x128xf32> to vector<16x16x128xf32>
    %93 = vector.shape_cast %90 : vector<16x16x128xf32> to vector<1x16x16x128xf32>
    tpu.vector_store %arg11[%c0_88, %c0_89, %c0_90, %c0_91], %93 {strides = array<i32>} : memref<1x16x16x128xf32, #tpu.memory_space<vmem>>, vector<1x16x16x128xf32>,
    return
  }
  func.func @transform_0(%arg0: i32, %arg1: i32) -> (i32, i32, i32, i32) {
    %c16_i32 = arith.constant 16 : i32
    %0 = arith.muli %arg1, %c16_i32 : i32
    %c1_i32 = arith.constant 1 : i32
    %1 = arith.subi %0, %c1_i32 : i32
    %c0_i32 = arith.constant 0 : i32
    %2 = arith.maxsi %1, %c0_i32 : i32
    %c0_i32_0 = arith.constant 0 : i32
    %c0_i32_1 = arith.constant 0 : i32
    %c0_i32_2 = arith.constant 0 : i32
    return %arg0, %2, %c0_i32_0, %c0_i32_1 : i32, i32, i32, i32
  }
  func.func @transform_1(%arg0: i32, %arg1: i32) -> (i32, i32, i32, i32) {
    %c0_i32 = arith.constant 0 : i32
    %c0_i32_0 = arith.constant 0 : i32
    %c0_i32_1 = arith.constant 0 : i32
    return %arg0, %arg1, %c0_i32, %c0_i32_0 : i32, i32, i32, i32
  }
  func.func @transform_2(%arg0: i32, %arg1: i32) -> (i32, i32, i32, i32) {
    %c1_i32 = arith.constant 1 : i32
    %0 = arith.addi %arg1, %c1_i32 : i32
    %c16_i32 = arith.constant 16 : i32
    %1 = arith.muli %0, %c16_i32 : i32
    %c15_i32 = arith.constant 15 : i32
    %2 = arith.minsi %1, %c15_i32 : i32
    %c0_i32 = arith.constant 0 : i32
    %c0_i32_0 = arith.constant 0 : i32
    %c0_i32_1 = arith.constant 0 : i32
    return %arg0, %2, %c0_i32, %c0_i32_0 : i32, i32, i32, i32
  }
  func.func @transform_3(%arg0: i32, %arg1: i32) -> (i32, i32) {
    %c0_i32 = arith.constant 0 : i32
    %c0_i32_0 = arith.constant 0 : i32
    %c0_i32_1 = arith.constant 0 : i32
    return %c0_i32, %c0_i32_0 : i32, i32
  }
  func.func @transform_4(%arg0: i32, %arg1: i32) -> (i32, i32) {
    %c0_i32 = arith.constant 0 : i32
    %c0_i32_0 = arith.constant 0 : i32
    %c0_i32_1 = arith.constant 0 : i32
    return %c0_i32, %c0_i32_0 : i32, i32
  }
  func.func @transform_5(%arg0: i32, %arg1: i32) -> (i32, i32) {
    %c0_i32 = arith.constant 0 : i32
    %c0_i32_0 = arith.constant 0 : i32
    %c0_i32_1 = arith.constant 0 : i32
    return %c0_i32, %c0_i32_0 : i32, i32
  }
  func.func @transform_6(%arg0: i32, %arg1: i32) -> (i32, i32) {
    %c0_i32 = arith.constant 0 : i32
    %c0_i32_0 = arith.constant 0 : i32
    %c0_i32_1 = arith.constant 0 : i32
    return %c0_i32, %c0_i32_0 : i32, i32
  }
  func.func @transform_7(%arg0: i32, %arg1: i32) -> (i32, i32) {
    %c0_i32 = arith.constant 0 : i32
    %c0_i32_0 = arith.constant 0 : i32
    %c0_i32_1 = arith.constant 0 : i32
    return %c0_i32, %c0_i32_0 : i32, i32
  }
  func.func @transform_8(%arg0: i32, %arg1: i32) -> (i32, i32) {
    %c0_i32 = arith.constant 0 : i32
    %c0_i32_0 = arith.constant 0 : i32
    %c0_i32_1 = arith.constant 0 : i32
    return %c0_i32, %c0_i32_0 : i32, i32
  }
  func.func @transform_9(%arg0: i32, %arg1: i32) -> (i32, i32, i32, i32) {
    %c0_i32 = arith.constant 0 : i32
    %c0_i32_0 = arith.constant 0 : i32
    %c0_i32_1 = arith.constant 0 : i32
    return %arg0, %arg1, %c0_i32, %c0_i32_0 : i32, i32, i32, i32
  }
}

</mosaic_0001>

<llo_original>
// kernel: tpu_custom_call.1
$region0: #{tpu_custom_call.1}
  #allocation0 [shape = 'u32[]', space=smem, size = 0x4, offset = 0x4, fixed_abs, tag = 'smem constant byte address 0x4 - core index']
  #allocation1 [shape = 'u32[144,128]{1,0:T(1,128)}', space=vmem, size = 0x12000, scoped, tag = 'internal scratch']
  #allocation2 [shape = 'bf16[18,18,32]{2,1,0:T(8,128)(2,1)}', space=vmem, size = 0x1b000, scoped, tag = 'scratch operand']
  %s0 = inlined_call_operand.hbm [shape: f32[2,16,16,128], index: 0, kind: input, shape index: {}]
  %s1 = inlined_call_operand.hbm [shape: f32[2,16,16,128], index: 1, kind: input, shape index: {}]
  %s2 = inlined_call_operand.hbm [shape: f32[2,16,16,128], index: 2, kind: input, shape index: {}]
  %s3 = inlined_call_operand.vmem [shape: bf16[128,32], index: 3, kind: input, shape index: {}]
  %s4 = inlined_call_operand.vmem [shape: f32[1,32], index: 4, kind: input, shape index: {}]
  %s5 = inlined_call_operand.vmem [shape: bf16[288,32], index: 5, kind: input, shape index: {}]
  %s6 = inlined_call_operand.vmem [shape: f32[1,32], index: 6, kind: input, shape index: {}]
  %s7 = inlined_call_operand.vmem [shape: bf16[32,128], index: 7, kind: input, shape index: {}]
  %s8 = inlined_call_operand.vmem [shape: f32[1,128], index: 8, kind: input, shape index: {}]
  %s9 = inlined_call_operand.hbm [shape: f32[2,16,16,128], index: 9, kind: output, shape index: {}]
  %s10 = sld [smem:[#allocation0]]
  $region85: #{tpu_custom_call.1} parent=0
    _
  %s12 = ssub.s32 1, %s10
  %s13 = scalar_select 0, %s12, %s10
  $region1: #{tpu_custom_call.1} parent=0
    #allocation3 [shape = 'u8[16384]{0}', space=vmem, size = 0x4000, scoped, tag = 'input window, operand 0']
    #allocation4 [shape = 's32[2]{0}', space=sflag, size = 0x8, scoped, tag = 'scoped memory for tpu_custom_call.1']
    #allocation5 [shape = 's32[2]{0}', space=sflag, size = 0x8, scoped, tag = 'scoped memory for tpu_custom_call.1']
    #allocation6 [shape = 'u8[262144]{0}', space=vmem, size = 0x40000, scoped, tag = 'input window, operand 1']
    #allocation7 [shape = 's32[2]{0}', space=sflag, size = 0x8, scoped, tag = 'scoped memory for tpu_custom_call.1']
    #allocation8 [shape = 'u8[16384]{0}', space=vmem, size = 0x4000, scoped, tag = 'input window, operand 2']
    #allocation9 [shape = 'u8[262144]{0}', space=vmem, size = 0x40000, scoped, tag = 'output window, operand 0']
    %14 = vsyncpa [#allocation4], 0
    %s15 = scalar_lea.sflag [#allocation4], 1
    %16 = vsyncpa %s15, 0
    %17 = vsyncpa [#allocation7], 0
    %s18 = scalar_lea.sflag [#allocation7], 1
    %19 = vsyncpa %s18, 0
    %20 = vsyncpa [#allocation5], 0
    %s21 = scalar_lea.sflag [#allocation5], 1
    %22 = vsyncpa %s21, 0
    loop: start=0, step=1, limit=4
    $region2: #{tpu_custom_call.1} parent=1 // loop_pre_header
      _
    $region3: #{tpu_custom_call.1} parent=1 // loop_header
      %s24 = sphi 0, %s28
      %p25 = scmp.ge.s32.totalorder %s24, 4
      %s31 = sphi 0, %s43
      %s32 = sphi 0, %s39
      %s33 = sphi 0, %s31
      %s34 = sphi 0, %s32
      %s35 = sphi 0, %s33
      %s36 = sphi 0, %s34
      %s56 = sphi 0, %s58
      %s59 = sphi 0, %s56
      %s60 = sphi 0, %s59
      %s76 = sphi 0, %s60
      %s84 = sphi 0, %s86
      %s87 = sphi 0, %s84
      %s88 = sphi 0, %s87
      %s104 = sphi 0, %s88
      %s120 = sphi 0, %s122
      %s123 = sphi 0, %s120
      %s124 = sphi 0, %s123
      %s140 = sphi 0, %s124
      %s144 = sphi 0, %s144
      %s146 = sphi 0, %s144
      %s147 = sphi 0, %s146
      %s161 = sphi 0, %s147
      %s165 = sphi 0, %s165
      %s167 = sphi 0, %s165
      %s168 = sphi 0, %s167
      %s182 = sphi 0, %s168
      %s186 = sphi 0, %s186
      %s188 = sphi 0, %s186
      %s189 = sphi 0, %s188
      %s203 = sphi 0, %s189
      %s207 = sphi 0, %s207
      %s209 = sphi 0, %s207
      %s210 = sphi 0, %s209
      %s224 = sphi 0, %s210
      %s228 = sphi 0, %s228
      %s230 = sphi 0, %s228
      %s231 = sphi 0, %s230
      %s245 = sphi 0, %s231
      %s249 = sphi 0, %s249
      %s251 = sphi 0, %s249
      %s252 = sphi 0, %s251
      %s266 = sphi 0, %s252
      %s274 = sphi 0, %s276
      %s277 = sphi 0, %s274
      %s278 = sphi 0, %s277
      %s294 = sphi 0, %s278
    $region4: #{tpu_custom_call.1} parent=1 // loop_header_branch
      %27 = sbr.rel (%p25) target = $region8
    $region5: #{tpu_custom_call.1} parent=1 // loop_body
      %s29 = ssub.s32 %s24, 1
      %s30 = ssub.s32 %s24, 2
      %s37 = sadd.s32 1, %s32
      %p38 = scmp.ge.s32.totalorder %s37, 1
      %s39 = scalar_select %p38, 0, %s37
      %s40 = sadd.s32 1, %s31
      %s41 = scalar_select %p38, %s40, %s31
      %p42 = scmp.ge.s32.totalorder %s41, 2
      %s43 = scalar_select %p42, 0, %s41
      %s44 = smul.u32 %s32, 16
      %s45 = ssub.s32 %s44, 1
      %p46 = scmp.gt.s32.totalorder %s45, 0
      %s47 = scalar_select %p46, %s45, 0
      %s48 = smul.u32 %s39, 16
      %s49 = ssub.s32 %s48, 1
      %p50 = scmp.gt.s32.totalorder %s49, 0
      %s51 = scalar_select %p50, %s49, 0
      %s52 = ssub.s32 %s31, %s43
      %s53 = ssub.s32 %s47, %s51
      %s54 = sor.u32 %s52, %s53
      %p55 = scmp.eq.s32.totalorder %s54, 0
      %s57 = sadd.s32 %s56, 1
      %s58 = scalar_select %p55, %s56, %s57
      %p61 = pneg %p55
      %p62 = scmp.eq.s32.totalorder %s24, 1
      %p63 = por %p61, %p62
      %p64 = scmp.ne.s32.totalorder %s56, %s59
      %p65 = scmp.eq.s32.totalorder %s24, 0
      %p66 = por %p64, %p65
      %p67 = scmp.ne.s32.totalorder %s56, %s59
      %p68 = scmp.eq.s32.totalorder %s29, 1
      %p69 = por %p67, %p68
      %p70 = scmp.ne.s32.totalorder %s59, %s60
      %p71 = scmp.eq.s32.totalorder %s29, 0
      %p72 = por %p70, %p71
      %p73 = scmp.ne.s32.totalorder %s59, %s60
      %p74 = scmp.eq.s32.totalorder %s30, 1
      %p75 = por %p73, %p74
      %p77 = scmp.ne.s32.totalorder %s60, %s76
      %p78 = scmp.eq.s32.totalorder %s30, 0
      %p79 = por %p77, %p78
      %s80 = ssub.s32 %s31, %s43
      %s81 = ssub.s32 %s32, %s39
      %s82 = sor.u32 %s80, %s81
      %p83 = scmp.eq.s32.totalorder %s82, 0
      %s85 = sadd.s32 %s84, 1
      %s86 = scalar_select %p83, %s84, %s85
      %p89 = pneg %p83
      %p90 = scmp.eq.s32.totalorder %s24, 1
      %p91 = por %p89, %p90
      %p92 = scmp.ne.s32.totalorder %s84, %s87
      %p93 = scmp.eq.s32.totalorder %s24, 0
      %p94 = por %p92, %p93
      %p95 = scmp.ne.s32.totalorder %s84, %s87
      %p96 = scmp.eq.s32.totalorder %s29, 1
      %p97 = por %p95, %p96
      %p98 = scmp.ne.s32.totalorder %s87, %s88
      %p99 = scmp.eq.s32.totalorder %s29, 0
      %p100 = por %p98, %p99
      %p101 = scmp.ne.s32.totalorder %s87, %s88
      %p102 = scmp.eq.s32.totalorder %s30, 1
      %p103 = por %p101, %p102
      %p105 = scmp.ne.s32.totalorder %s88, %s104
      %p106 = scmp.eq.s32.totalorder %s30, 0
      %p107 = por %p105, %p106
      %s108 = sadd.s32 %s32, 1
      %s109 = smul.u32 %s108, 16
      %p110 = scmp.lt.s32.totalorder %s109, 15
      %s111 = scalar_select %p110, %s109, 15
      %s112 = sadd.s32 %s39, 1
      %s113 = smul.u32 %s112, 16
      %p114 = scmp.lt.s32.totalorder %s113, 15
      %s115 = scalar_select %p114, %s113, 15
      %s116 = ssub.s32 %s31, %s43
      %s117 = ssub.s32 %s111, %s115
      %s118 = sor.u32 %s116, %s117
      %p119 = scmp.eq.s32.totalorder %s118, 0
      %s121 = sadd.s32 %s120, 1
      %s122 = scalar_select %p119, %s120, %s121
      %p125 = pneg %p119
      %p126 = scmp.eq.s32.totalorder %s24, 1
      %p127 = por %p125, %p126
      %p128 = scmp.ne.s32.totalorder %s120, %s123
      %p129 = scmp.eq.s32.totalorder %s24, 0
      %p130 = por %p128, %p129
      %p131 = scmp.ne.s32.totalorder %s120, %s123
      %p132 = scmp.eq.s32.totalorder %s29, 1
      %p133 = por %p131, %p132
      %p134 = scmp.ne.s32.totalorder %s123, %s124
      %p135 = scmp.eq.s32.totalorder %s29, 0
      %p136 = por %p134, %p135
      %p137 = scmp.ne.s32.totalorder %s123, %s124
      %p138 = scmp.eq.s32.totalorder %s30, 1
      %p139 = por %p137, %p138
      %p141 = scmp.ne.s32.totalorder %s124, %s140
      %p142 = scmp.eq.s32.totalorder %s30, 0
      %p143 = por %p141, %p142
      %s145 = sadd.s32 %s144, 1
      %p148 = scmp.eq.s32.totalorder %s24, 1
      %p149 = scmp.ne.s32.totalorder %s144, %s146
      %p150 = scmp.eq.s32.totalorder %s24, 0
      %p151 = por %p149, %p150
      %p152 = scmp.ne.s32.totalorder %s144, %s146
      %p153 = scmp.eq.s32.totalorder %s29, 1
      %p154 = por %p152, %p153
      %p155 = scmp.ne.s32.totalorder %s146, %s147
      %p156 = scmp.eq.s32.totalorder %s29, 0
      %p157 = por %p155, %p156
      %p158 = scmp.ne.s32.totalorder %s146, %s147
      %p159 = scmp.eq.s32.totalorder %s30, 1
      %p160 = por %p158, %p159
      %p162 = scmp.ne.s32.totalorder %s147, %s161
      %p163 = scmp.eq.s32.totalorder %s30, 0
      %p164 = por %p162, %p163
      %s166 = sadd.s32 %s165, 1
      %p169 = scmp.eq.s32.totalorder %s24, 1
      %p170 = scmp.ne.s32.totalorder %s165, %s167
      %p171 = scmp.eq.s32.totalorder %s24, 0
      %p172 = por %p170, %p171
      %p173 = scmp.ne.s32.totalorder %s165, %s167
      %p174 = scmp.eq.s32.totalorder %s29, 1
      %p175 = por %p173, %p174
      %p176 = scmp.ne.s32.totalorder %s167, %s168
      %p177 = scmp.eq.s32.totalorder %s29, 0
      %p178 = por %p176, %p177
      %p179 = scmp.ne.s32.totalorder %s167, %s168
      %p180 = scmp.eq.s32.totalorder %s30, 1
      %p181 = por %p179, %p180
      %p183 = scmp.ne.s32.totalorder %s168, %s182
      %p184 = scmp.eq.s32.totalorder %s30, 0
      %p185 = por %p183, %p184
      %s187 = sadd.s32 %s186, 1
      %p190 = scmp.eq.s32.totalorder %s24, 1
      %p191 = scmp.ne.s32.totalorder %s186, %s188
      %p192 = scmp.eq.s32.totalorder %s24, 0
      %p193 = por %p191, %p192
      %p194 = scmp.ne.s32.totalorder %s186, %s188
      %p195 = scmp.eq.s32.totalorder %s29, 1
      %p196 = por %p194, %p195
      %p197 = scmp.ne.s32.totalorder %s188, %s189
      %p198 = scmp.eq.s32.totalorder %s29, 0
      %p199 = por %p197, %p198
      %p200 = scmp.ne.s32.totalorder %s188, %s189
      %p201 = scmp.eq.s32.totalorder %s30, 1
      %p202 = por %p200, %p201
      %p204 = scmp.ne.s32.totalorder %s189, %s203
      %p205 = scmp.eq.s32.totalorder %s30, 0
      %p206 = por %p204, %p205
      %s208 = sadd.s32 %s207, 1
      %p211 = scmp.eq.s32.totalorder %s24, 1
      %p212 = scmp.ne.s32.totalorder %s207, %s209
      %p213 = scmp.eq.s32.totalorder %s24, 0
      %p214 = por %p212, %p213
      %p215 = scmp.ne.s32.totalorder %s207, %s209
      %p216 = scmp.eq.s32.totalorder %s29, 1
      %p217 = por %p215, %p216
      %p218 = scmp.ne.s32.totalorder %s209, %s210
      %p219 = scmp.eq.s32.totalorder %s29, 0
      %p220 = por %p218, %p219
      %p221 = scmp.ne.s32.totalorder %s209, %s210
      %p222 = scmp.eq.s32.totalorder %s30, 1
      %p223 = por %p221, %p222
      %p225 = scmp.ne.s32.totalorder %s210, %s224
      %p226 = scmp.eq.s32.totalorder %s30, 0
      %p227 = por %p225, %p226
      %s229 = sadd.s32 %s228, 1
      %p232 = scmp.eq.s32.totalorder %s24, 1
      %p233 = scmp.ne.s32.totalorder %s228, %s230
      %p234 = scmp.eq.s32.totalorder %s24, 0
      %p235 = por %p233, %p234
      %p236 = scmp.ne.s32.totalorder %s228, %s230
      %p237 = scmp.eq.s32.totalorder %s29, 1
      %p238 = por %p236, %p237
      %p239 = scmp.ne.s32.totalorder %s230, %s231
      %p240 = scmp.eq.s32.totalorder %s29, 0
      %p241 = por %p239, %p240
      %p242 = scmp.ne.s32.totalorder %s230, %s231
      %p243 = scmp.eq.s32.totalorder %s30, 1
      %p244 = por %p242, %p243
      %p246 = scmp.ne.s32.totalorder %s231, %s245
      %p247 = scmp.eq.s32.totalorder %s30, 0
      %p248 = por %p246, %p247
      %s250 = sadd.s32 %s249, 1
      %p253 = scmp.eq.s32.totalorder %s24, 1
      %p254 = scmp.ne.s32.totalorder %s249, %s251
      %p255 = scmp.eq.s32.totalorder %s24, 0
      %p256 = por %p254, %p255
      %p257 = scmp.ne.s32.totalorder %s249, %s251
      %p258 = scmp.eq.s32.totalorder %s29, 1
      %p259 = por %p257, %p258
      %p260 = scmp.ne.s32.totalorder %s251, %s252
      %p261 = scmp.eq.s32.totalorder %s29, 0
      %p262 = por %p260, %p261
      %p263 = scmp.ne.s32.totalorder %s251, %s252
      %p264 = scmp.eq.s32.totalorder %s30, 1
      %p265 = por %p263, %p264
      %p267 = scmp.ne.s32.totalorder %s252, %s266
      %p268 = scmp.eq.s32.totalorder %s30, 0
      %p269 = por %p267, %p268
      %s270 = ssub.s32 %s31, %s43
      %s271 = ssub.s32 %s32, %s39
      %s272 = sor.u32 %s270, %s271
      %p273 = scmp.eq.s32.totalorder %s272, 0
      %s275 = sadd.s32 %s274, 1
      %s276 = scalar_select %p273, %s274, %s275
      %p279 = pneg %p273
      %p280 = scmp.eq.s32.totalorder %s24, 1
      %p281 = por %p279, %p280
      %p282 = scmp.ne.s32.totalorder %s274, %s277
      %p283 = scmp.eq.s32.totalorder %s24, 0
      %p284 = por %p282, %p283
      %p285 = scmp.ne.s32.totalorder %s274, %s277
      %p286 = scmp.eq.s32.totalorder %s29, 1
      %p287 = por %p285, %p286
      %p288 = scmp.ne.s32.totalorder %s277, %s278
      %p289 = scmp.eq.s32.totalorder %s29, 0
      %p290 = por %p288, %p289
      %p291 = scmp.ne.s32.totalorder %s277, %s278
      %p292 = scmp.eq.s32.totalorder %s30, 1
      %p293 = por %p291, %p292
      %p295 = scmp.ne.s32.totalorder %s278, %s294
      %p296 = scmp.eq.s32.totalorder %s30, 0
      %p297 = por %p295, %p296
      %p298 = scmp.le.s32.totalorder 1, %s24
      %p299 = scmp.lt.s32.totalorder %s24, 3
      %p300 = pnand %p298, %p299
      %p301 = pneg %p300
      // Predicated region
      $region9: #{tpu_custom_call.1} parent=5 // pred_check
        _
      $region10: #{tpu_custom_call.1} parent=5 // pred_check_branch
        %303 = sbr.rel (%p300) target = $region12
      $region11: #{tpu_custom_call.1} parent=5 // pred_region
        %s304 = ssub.s32 %s24, 1
        // Predicated region
        $region13: #{tpu_custom_call.1} parent=11 // pred_check
          %p305 = pneg %p157
        $region14: #{tpu_custom_call.1} parent=11 // pred_check_branch
          %307 = sbr.rel (%p305) target = $region16
        $region15: #{tpu_custom_call.1} parent=11 // pred_region
          _
        $region16: #{tpu_custom_call.1} parent=11 // pred_fallthru
          _
        // Predicated region
        $region17: #{tpu_custom_call.1} parent=11 // pred_check
          %p308 = pneg %p178
        $region18: #{tpu_custom_call.1} parent=11 // pred_check_branch
          %310 = sbr.rel (%p308) target = $region20
        $region19: #{tpu_custom_call.1} parent=11 // pred_region
          _
        $region20: #{tpu_custom_call.1} parent=11 // pred_fallthru
          _
        // Predicated region
        $region21: #{tpu_custom_call.1} parent=11 // pred_check
          %p311 = pneg %p199
        $region22: #{tpu_custom_call.1} parent=11 // pred_check_branch
          %313 = sbr.rel (%p311) target = $region24
        $region23: #{tpu_custom_call.1} parent=11 // pred_region
          _
        $region24: #{tpu_custom_call.1} parent=11 // pred_fallthru
          _
        // Predicated region
        $region25: #{tpu_custom_call.1} parent=11 // pred_check
          %p314 = pneg %p220
        $region26: #{tpu_custom_call.1} parent=11 // pred_check_branch
          %316 = sbr.rel (%p314) target = $region28
        $region27: #{tpu_custom_call.1} parent=11 // pred_region
          _
        $region28: #{tpu_custom_call.1} parent=11 // pred_fallthru
          _
        // Predicated region
        $region29: #{tpu_custom_call.1} parent=11 // pred_check
          %p317 = pneg %p241
        $region30: #{tpu_custom_call.1} parent=11 // pred_check_branch
          %319 = sbr.rel (%p317) target = $region32
        $region31: #{tpu_custom_call.1} parent=11 // pred_region
          _
        $region32: #{tpu_custom_call.1} parent=11 // pred_fallthru
          _
        // Predicated region
        $region33: #{tpu_custom_call.1} parent=11 // pred_check
          %p320 = pneg %p262
        $region34: #{tpu_custom_call.1} parent=11 // pred_check_branch
          %322 = sbr.rel (%p320) target = $region36
        $region35: #{tpu_custom_call.1} parent=11 // pred_region
          _
        $region36: #{tpu_custom_call.1} parent=11 // pred_fallthru
          _
      $region12: #{tpu_custom_call.1} parent=5 // pred_fallthru
        _
      %p323 = scmp.lt.s32.totalorder %s24, 2
      // Predicated region
      $region37: #{tpu_custom_call.1} parent=5 // pred_check
        %p324 = pneg %p323
      $region38: #{tpu_custom_call.1} parent=5 // pred_check_branch
        %326 = sbr.rel (%p324) target = $region40
      $region39: #{tpu_custom_call.1} parent=5 // pred_region
        // Predicated region
        $region41: #{tpu_custom_call.1} parent=39 // pred_check
          %p327 = pneg %p66
        $region42: #{tpu_custom_call.1} parent=39 // pred_check_branch
          %329 = sbr.rel (%p327) target = $region44
        $region43: #{tpu_custom_call.1} parent=39 // pred_region
          %s330 = sand.u32 %s56, 1
          %s331 = scalar_lea.sflag [#allocation4], %s330
          %s332 = sand.u32 %s56, 1
          %s333 = smul.addr %s332, 16
          %s334 = scalar_lea.vmem [#allocation3], %s333
          %s335 = smul.u32 %s32, 16
          %s336 = ssub.s32 %s335, 1
          %p337 = scmp.gt.s32.totalorder %s336, 0
          %s338 = scalar_select %p337, %s336, 0
          %s340 = ssub.s32 256, 256
          %341 = vsyncadd %s331, %s340
          %s342 = smul.addr %s338, 2
          %s343 = smul.addr %s31, 32
          %s344 = sadd.s32 %s342, %s343
          %s345 = smul.addr %s344, 128
          %s346 = scalar_lea.hbm %s0, %s345
          %s347 = sshll.u32 %s334, 4
          %s348 = int_to_ptr.vmem [resolvable:$true] %s347
          %353 = dma.hbm_to_vmem [thread:$0]  %s346, 256, %s348, %s331, 128, 128, 8
        $region44: #{tpu_custom_call.1} parent=39 // pred_fallthru
          _
        // Predicated region
        $region45: #{tpu_custom_call.1} parent=39 // pred_check
          %p354 = pneg %p94
        $region46: #{tpu_custom_call.1} parent=39 // pred_check_branch
          %356 = sbr.rel (%p354) target = $region48
        $region47: #{tpu_custom_call.1} parent=39 // pred_region
          %s357 = sand.u32 %s24, 1
          %s358 = scalar_lea.sflag [#allocation7], %s357
          %s359 = sand.u32 %s84, 1
          %s360 = smul.addr %s359, 256
          %s361 = scalar_lea.vmem [#allocation6], %s360
          %s362 = smul.u32 16, %s32
          %s364 = ssub.s32 4096, 4096
          %365 = vsyncadd %s358, %s364
          %s366 = smul.addr %s362, 2
          %s367 = smul.addr %s31, 32
          %s368 = sadd.s32 %s366, %s367
          %s369 = smul.addr %s368, 128
          %s370 = scalar_lea.hbm %s1, %s369
          %s371 = sshll.u32 %s361, 4
          %s372 = int_to_ptr.vmem [resolvable:$true] %s371
          %377 = dma.hbm_to_vmem [thread:$0]  %s370, 4096, %s372, %s358, 128, 128, 8
        $region48: #{tpu_custom_call.1} parent=39 // pred_fallthru
          _
        // Predicated region
        $region49: #{tpu_custom_call.1} parent=39 // pred_check
          %p378 = pneg %p130
        $region50: #{tpu_custom_call.1} parent=39 // pred_check_branch
          %380 = sbr.rel (%p378) target = $region52
        $region51: #{tpu_custom_call.1} parent=39 // pred_region
          %s381 = sand.u32 %s24, 1
          %s382 = scalar_lea.sflag [#allocation7], %s381
          %s383 = sand.u32 %s120, 1
          %s384 = smul.addr %s383, 16
          %s385 = scalar_lea.vmem [#allocation8], %s384
          %s386 = sadd.s32 %s32, 1
          %s387 = smul.u32 %s386, 16
          %p388 = scmp.lt.s32.totalorder %s387, 15
          %s389 = scalar_select %p388, %s387, 15
          %s391 = ssub.s32 256, 256
          %392 = vsyncadd %s382, %s391
          %s393 = smul.addr %s389, 2
          %s394 = smul.addr %s31, 32
          %s395 = sadd.s32 %s393, %s394
          %s396 = smul.addr %s395, 128
          %s397 = scalar_lea.hbm %s2, %s396
          %s398 = sshll.u32 %s385, 4
          %s399 = int_to_ptr.vmem [resolvable:$true] %s398
          %404 = dma.hbm_to_vmem [thread:$0]  %s397, 256, %s399, %s382, 128, 128, 8
        $region52: #{tpu_custom_call.1} parent=39 // pred_fallthru
          _
      $region40: #{tpu_custom_call.1} parent=5 // pred_fallthru
        _
      %p405 = scmp.le.s32.totalorder 1, %s24
      %p406 = scmp.lt.s32.totalorder %s24, 3
      %p407 = pnand %p405, %p406
      %p408 = pneg %p407
      // Predicated region
      $region53: #{tpu_custom_call.1} parent=5 // pred_check
        _
      $region54: #{tpu_custom_call.1} parent=5 // pred_check_branch
        %410 = sbr.rel (%p407) target = $region56
      $region55: #{tpu_custom_call.1} parent=5 // pred_region
        %s411 = ssub.s32 %s24, 1
        %s412 = sand.u32 %s59, 1
        %s413 = scalar_lea.sflag [#allocation4], %s412
        %s414 = sand.u32 %s59, 1
        %s415 = smul.addr %s414, 16
        %s416 = scalar_lea.vmem [#allocation3], %s415
        // Predicated region
        $region57: #{tpu_custom_call.1} parent=55 // pred_check
          %p417 = pneg %p72
        $region58: #{tpu_custom_call.1} parent=55 // pred_check_branch
          %419 = sbr.rel (%p417) target = $region60
        $region59: #{tpu_custom_call.1} parent=55 // pred_region
          %420 = dma.done %s413, 256
        $region60: #{tpu_custom_call.1} parent=55 // pred_fallthru
          _
        %s421 = sand.u32 %s29, 1
        %s422 = scalar_lea.sflag [#allocation7], %s421
        %s423 = sand.u32 %s87, 1
        %s424 = smul.addr %s423, 256
        %s425 = scalar_lea.vmem [#allocation6], %s424
        // Predicated region
        $region61: #{tpu_custom_call.1} parent=55 // pred_check
          %p426 = pneg %p100
        $region62: #{tpu_custom_call.1} parent=55 // pred_check_branch
          %428 = sbr.rel (%p426) target = $region64
        $region63: #{tpu_custom_call.1} parent=55 // pred_region
          %429 = dma.done %s422, 4096
        $region64: #{tpu_custom_call.1} parent=55 // pred_fallthru
          _
        %s430 = sand.u32 %s29, 1
        %s431 = scalar_lea.sflag [#allocation7], %s430
        %s432 = sand.u32 %s123, 1
        %s433 = smul.addr %s432, 16
        %s434 = scalar_lea.vmem [#allocation8], %s433
        // Predicated region
        $region65: #{tpu_custom_call.1} parent=55 // pred_check
          %p435 = pneg %p136
        $region66: #{tpu_custom_call.1} parent=55 // pred_check_branch
          %437 = sbr.rel (%p435) target = $region68
        $region67: #{tpu_custom_call.1} parent=55 // pred_region
          %438 = dma.done %s431, 256
        $region68: #{tpu_custom_call.1} parent=55 // pred_fallthru
          _
        %s439 = sand.u32 %s59, 1
        %s440 = scalar_lea.sflag [#allocation4], %s439
        %s441 = sand.u32 %s59, 1
        %s442 = smul.addr %s441, 16
        %s443 = scalar_lea.vmem [#allocation3], %s442
        %p444 = pneg %p72
        %p445 = pneg %p69
        %s446 = sand.u32 %s29, 1
        %s447 = scalar_lea.sflag [#allocation7], %s446
        %s448 = sand.u32 %s87, 1
        %s449 = smul.addr %s448, 256
        %s450 = scalar_lea.vmem [#allocation6], %s449
        %p451 = pneg %p100
        %p452 = pneg %p97
        %s453 = sand.u32 %s29, 1
        %s454 = scalar_lea.sflag [#allocation7], %s453
        %s455 = sand.u32 %s123, 1
        %s456 = smul.addr %s455, 16
        %s457 = scalar_lea.vmem [#allocation8], %s456
        %p458 = pneg %p136
        %p459 = pneg %p133
        %p460 = pneg %p157
        %p461 = pneg %p154
        %p462 = pneg %p178
        %p463 = pneg %p175
        %p464 = pneg %p199
        %p465 = pneg %p196
        %p466 = pneg %p220
        %p467 = pneg %p217
        %p468 = pneg %p241
        %p469 = pneg %p238
        %p470 = pneg %p262
        %p471 = pneg %p259
        %p472 = pneg %p290
        %p473 = pneg %p287
        %s474 = sand.u32 %s277, 1
        %s475 = scalar_lea.sflag [#allocation5], %s474
        %s476 = sand.u32 %s277, 1
        %s477 = smul.addr %s476, 256
        %s478 = scalar_lea.vmem [#allocation9], %s477
        %s479 = smul.u32 %s34, 16
        %s480 = ssub.s32 %s479, 1
        %p481 = scmp.gt.s32.totalorder %s480, 0
        %s482 = scalar_select %p481, %s480, 0
        %s483 = smul.u32 16, %s34
        %s484 = sadd.s32 %s34, 1
        %s485 = smul.u32 %s484, 16
        %p486 = scmp.lt.s32.totalorder %s485, 15
        %s487 = scalar_select %p486, %s485, 15
        %s488 = smul.u32 16, %s34
        %v490 = vld [vmem:[%s425] sm:$0xff]
        %v491 = vld [vmem:[%s425 + $0x8] sm:$0xff]
        %v492 = vld [vmem:[%s425 + $0x10] sm:$0xff]
        %v493 = vld [vmem:[%s425 + $0x18] sm:$0xff]
        %v494 = vld [vmem:[%s425 + $0x20] sm:$0xff]
        %v495 = vld [vmem:[%s425 + $0x28] sm:$0xff]
        %v496 = vld [vmem:[%s425 + $0x30] sm:$0xff]
        %v497 = vld [vmem:[%s425 + $0x38] sm:$0xff]
        %v498 = vld [vmem:[%s425 + $0x40] sm:$0xff]
        %v499 = vld [vmem:[%s425 + $0x48] sm:$0xff]
        %v500 = vld [vmem:[%s425 + $0x50] sm:$0xff]
        %v501 = vld [vmem:[%s425 + $0x58] sm:$0xff]
        %v502 = vld [vmem:[%s425 + $0x60] sm:$0xff]
        %v503 = vld [vmem:[%s425 + $0x68] sm:$0xff]
        %v504 = vld [vmem:[%s425 + $0x70] sm:$0xff]
        %v505 = vld [vmem:[%s425 + $0x78] sm:$0xff]
        %v506 = vld [vmem:[%s425 + $0x80] sm:$0xff]
        %v507 = vld [vmem:[%s425 + $0x88] sm:$0xff]
        %v508 = vld [vmem:[%s425 + $0x90] sm:$0xff]
        %v509 = vld [vmem:[%s425 + $0x98] sm:$0xff]
        %v510 = vld [vmem:[%s425 + $0xa0] sm:$0xff]
        %v511 = vld [vmem:[%s425 + $0xa8] sm:$0xff]
        %v512 = vld [vmem:[%s425 + $0xb0] sm:$0xff]
        %v513 = vld [vmem:[%s425 + $0xb8] sm:$0xff]
        %v514 = vld [vmem:[%s425 + $0xc0] sm:$0xff]
        %v515 = vld [vmem:[%s425 + $0xc8] sm:$0xff]
        %v516 = vld [vmem:[%s425 + $0xd0] sm:$0xff]
        %v517 = vld [vmem:[%s425 + $0xd8] sm:$0xff]
        %v518 = vld [vmem:[%s425 + $0xe0] sm:$0xff]
        %v519 = vld [vmem:[%s425 + $0xe8] sm:$0xff]
        %v520 = vld [vmem:[%s425 + $0xf0] sm:$0xff]
        %v521 = vld [vmem:[%s425 + $0xf8] sm:$0xff]
        %v522 = vpack.c.bf16 %v491, %v490
        %v523 = vpack.c.bf16 %v493, %v492
        %v524 = vpack.c.bf16 %v495, %v494
        %v525 = vpack.c.bf16 %v497, %v496
        %v526 = vpack.c.bf16 %v499, %v498
        %v527 = vpack.c.bf16 %v501, %v500
        %v528 = vpack.c.bf16 %v503, %v502
        %v529 = vpack.c.bf16 %v505, %v504
        %v530 = vpack.c.bf16 %v507, %v506
        %v531 = vpack.c.bf16 %v509, %v508
        %v532 = vpack.c.bf16 %v511, %v510
        %v533 = vpack.c.bf16 %v513, %v512
        %v534 = vpack.c.bf16 %v515, %v514
        %v535 = vpack.c.bf16 %v517, %v516
        %v536 = vpack.c.bf16 %v519, %v518
        %v537 = vpack.c.bf16 %v521, %v520
        %v538 = vld [vmem:[%s3] sm:$0xf]
        %v539 = vld [vmem:[%s3 + $0x4] sm:$0xf]
        %v540 = vld [vmem:[%s3 + $0x8] sm:$0xf]
        %v541 = vld [vmem:[%s3 + $0xc] sm:$0xf]
        %v542 = vld [vmem:[%s3 + $0x10] sm:$0xf]
        %v543 = vld [vmem:[%s3 + $0x14] sm:$0xf]
        %v544 = vld [vmem:[%s3 + $0x18] sm:$0xf]
        %v545 = vld [vmem:[%s3 + $0x1c] sm:$0xf]
        %v546 = vld [vmem:[%s3 + $0x20] sm:$0xf]
        %v547 = vld [vmem:[%s3 + $0x24] sm:$0xf]
        %v548 = vld [vmem:[%s3 + $0x28] sm:$0xf]
        %v549 = vld [vmem:[%s3 + $0x2c] sm:$0xf]
        %v550 = vld [vmem:[%s3 + $0x30] sm:$0xf]
        %v551 = vld [vmem:[%s3 + $0x34] sm:$0xf]
        %v552 = vld [vmem:[%s3 + $0x38] sm:$0xf]
        %v553 = vld [vmem:[%s3 + $0x3c] sm:$0xf]
        %v554 = vld [vmem:[%s4] sm:$0x1]
        %v556 = vlaneseq
        %v557 = vshrl.u32 %v556, 7
        %v558 = vsub.s32 0, %v557
        %v559 = vrot.slane %v554, %v558
        %v577 = vunpack.c.l.b16 %v538
        %v578 = vunpack.c.l.b16 %v539
        %v579 = vunpack.c.l.b16 %v540
        %v580 = vunpack.c.l.b16 %v541
        %v581 = vunpack.c.l.b16 %v542
        %v582 = vunpack.c.l.b16 %v543
        %v583 = vunpack.c.l.b16 %v544
        %v584 = vunpack.c.l.b16 %v545
        %v585 = vunpack.c.l.b16 %v546
        %v586 = vunpack.c.l.b16 %v547
        %v587 = vunpack.c.l.b16 %v548
        %v588 = vunpack.c.l.b16 %v549
        %v589 = vunpack.c.l.b16 %v550
        %v590 = vunpack.c.l.b16 %v551
        %v591 = vunpack.c.l.b16 %v552
        %v592 = vunpack.c.l.b16 %v553
        %v593 = vpack.c.b16 %v578, %v577
        %v594 = vpack.c.b16 %v580, %v579
        %v595 = vpack.c.b16 %v582, %v581
        %v596 = vpack.c.b16 %v584, %v583
        %v597 = vpack.c.b16 %v586, %v585
        %v598 = vpack.c.b16 %v588, %v587
        %v599 = vpack.c.b16 %v590, %v589
        %v600 = vpack.c.b16 %v592, %v591
        %609 = vmatprep.subr.bf16.mxu0 0
        %610 = vmatpush1.bf16.msra.mxu0 %v600
        %611 = vmatprep.subr.bf16.mxu0 0
        %612 = vmatpush1.bf16.msra.mxu0 %v599
        %613 = vmatprep.subr.bf16.mxu0 0
        %614 = vmatpush1.bf16.msra.mxu0 %v598
        %615 = vmatprep.subr.bf16.mxu0 0
        %616 = vmatpush1.bf16.msra.mxu0 %v597
        %617 = vmatprep.subr.bf16.mxu0 0
        %618 = vmatpush1.bf16.msra.mxu0 %v596
        %619 = vmatprep.subr.bf16.mxu0 0
        %620 = vmatpush1.bf16.msra.mxu0 %v595
        %621 = vmatprep.subr.bf16.mxu0 0
        %622 = vmatpush1.bf16.msra.mxu0 %v594
        %623 = vmatprep.subr.bf16.mxu0 0
        %624 = vmatpush1.bf16.msra.mxu0 %v593
        %625 = vmatprep.subr.bf16.mxu0 0
        %626 = vmatpush2.bf16.msra.mxu0 0
        %627 = vmatprep.subr.bf16.mxu0 0
        %628 = vmatpush2.bf16.msra.mxu0 0
        %629 = vmatprep.subr.bf16.mxu0 0
        %630 = vmatpush2.bf16.msra.mxu0 0
        %631 = vmatprep.subr.bf16.mxu0 0
        %632 = vmatpush2.bf16.msra.mxu0 0
        %633 = vmatprep.subr.bf16.mxu0 0
        %634 = vmatpush2.bf16.msra.mxu0 0
        %635 = vmatprep.subr.bf16.mxu0 0
        %636 = vmatpush2.bf16.msra.mxu0 0
        %637 = vmatprep.subr.bf16.mxu0 0
        %638 = vmatpush2.bf16.msra.mxu0 0
        %639 = vmatprep.subr.bf16.mxu0 0
        %640 = vmatpush2.bf16.msra.mxu0 0
        %641 = vmatprep.mubr.bf16.mxu0 0
        %642 = vmatmul.mubr.bf16.gmra.mxu0 %v522
        %v643 = vpop.f32.mrf.mxu0
        %v644 = vadd.f32 %v559, %v643
        %v645 = vpop.f32.mrf.mxu0
        %v646 = vpop.f32.mrf.mxu0
        %v647 = vadd.f32 %v559, %v646
        %v648 = vpop.f32.mrf.mxu0
        %649 = vmatprep.mubr.bf16.mxu0 0
        %650 = vmatmul.mubr.bf16.gmra.mxu0 %v523
        %v651 = vpop.f32.mrf.mxu0
        %v652 = vadd.f32 %v559, %v651
        %v653 = vpop.f32.mrf.mxu0
        %v654 = vpop.f32.mrf.mxu0
        %v655 = vadd.f32 %v559, %v654
        %v656 = vpop.f32.mrf.mxu0
        %657 = vmatprep.mubr.bf16.mxu0 0
        %658 = vmatmul.mubr.bf16.gmra.mxu0 %v524
        %v659 = vpop.f32.mrf.mxu0
        %v660 = vadd.f32 %v559, %v659
        %v661 = vpop.f32.mrf.mxu0
        %v662 = vpop.f32.mrf.mxu0
        %v663 = vadd.f32 %v559, %v662
        %v664 = vpop.f32.mrf.mxu0
        %665 = vmatprep.mubr.bf16.mxu0 0
        %666 = vmatmul.mubr.bf16.gmra.mxu0 %v525
        %v667 = vpop.f32.mrf.mxu0
        %v668 = vadd.f32 %v559, %v667
        %v669 = vpop.f32.mrf.mxu0
        %v670 = vpop.f32.mrf.mxu0
        %v671 = vadd.f32 %v559, %v670
        %v672 = vpop.f32.mrf.mxu0
        %673 = vmatprep.mubr.bf16.mxu0 0
        %674 = vmatmul.mubr.bf16.gmra.mxu0 %v526
        %v675 = vpop.f32.mrf.mxu0
        %v676 = vadd.f32 %v559, %v675
        %v677 = vpop.f32.mrf.mxu0
        %v678 = vpop.f32.mrf.mxu0
        %v679 = vadd.f32 %v559, %v678
        %v680 = vpop.f32.mrf.mxu0
        %681 = vmatprep.mubr.bf16.mxu0 0
        %682 = vmatmul.mubr.bf16.gmra.mxu0 %v527
        %v683 = vpop.f32.mrf.mxu0
        %v684 = vadd.f32 %v559, %v683
        %v685 = vpop.f32.mrf.mxu0
        %v686 = vpop.f32.mrf.mxu0
        %v687 = vadd.f32 %v559, %v686
        %v688 = vpop.f32.mrf.mxu0
        %689 = vmatprep.mubr.bf16.mxu0 0
        %690 = vmatmul.mubr.bf16.gmra.mxu0 %v528
        %v691 = vpop.f32.mrf.mxu0
        %v692 = vadd.f32 %v559, %v691
        %v693 = vpop.f32.mrf.mxu0
        %v694 = vpop.f32.mrf.mxu0
        %v695 = vadd.f32 %v559, %v694
        %v696 = vpop.f32.mrf.mxu0
        %697 = vmatprep.mubr.bf16.mxu0 0
        %698 = vmatmul.mubr.bf16.gmra.mxu0 %v529
        %v699 = vpop.f32.mrf.mxu0
        %v700 = vadd.f32 %v559, %v699
        %v701 = vpop.f32.mrf.mxu0
        %v702 = vpop.f32.mrf.mxu0
        %v703 = vadd.f32 %v559, %v702
        %v704 = vpop.f32.mrf.mxu0
        %705 = vmatprep.mubr.bf16.mxu0 0
        %706 = vmatmul.mubr.bf16.gmra.mxu0 %v530
        %v707 = vpop.f32.mrf.mxu0
        %v708 = vadd.f32 %v559, %v707
        %v709 = vpop.f32.mrf.mxu0
        %v710 = vpop.f32.mrf.mxu0
        %v711 = vadd.f32 %v559, %v710
        %v712 = vpop.f32.mrf.mxu0
        %713 = vmatprep.mubr.bf16.mxu0 0
        %714 = vmatmul.mubr.bf16.gmra.mxu0 %v531
        %v715 = vpop.f32.mrf.mxu0
        %v716 = vadd.f32 %v559, %v715
        %v717 = vpop.f32.mrf.mxu0
        %v718 = vpop.f32.mrf.mxu0
        %v719 = vadd.f32 %v559, %v718
        %v720 = vpop.f32.mrf.mxu0
        %721 = vmatprep.mubr.bf16.mxu0 0
        %722 = vmatmul.mubr.bf16.gmra.mxu0 %v532
        %v723 = vpop.f32.mrf.mxu0
        %v724 = vadd.f32 %v559, %v723
        %v725 = vpop.f32.mrf.mxu0
        %v726 = vpop.f32.mrf.mxu0
        %v727 = vadd.f32 %v559, %v726
        %v728 = vpop.f32.mrf.mxu0
        %729 = vmatprep.mubr.bf16.mxu0 0
        %730 = vmatmul.mubr.bf16.gmra.mxu0 %v533
        %v731 = vpop.f32.mrf.mxu0
        %v732 = vadd.f32 %v559, %v731
        %v733 = vpop.f32.mrf.mxu0
        %v734 = vpop.f32.mrf.mxu0
        %v735 = vadd.f32 %v559, %v734
        %v736 = vpop.f32.mrf.mxu0
        %737 = vmatprep.mubr.bf16.mxu0 0
        %738 = vmatmul.mubr.bf16.gmra.mxu0 %v534
        %v739 = vpop.f32.mrf.mxu0
        %v740 = vadd.f32 %v559, %v739
        %v741 = vpop.f32.mrf.mxu0
        %v742 = vpop.f32.mrf.mxu0
        %v743 = vadd.f32 %v559, %v742
        %v744 = vpop.f32.mrf.mxu0
        %745 = vmatprep.mubr.bf16.mxu0 0
        %746 = vmatmul.mubr.bf16.gmra.mxu0 %v535
        %v747 = vpop.f32.mrf.mxu0
        %v748 = vadd.f32 %v559, %v747
        %v749 = vpop.f32.mrf.mxu0
        %v750 = vpop.f32.mrf.mxu0
        %v751 = vadd.f32 %v559, %v750
        %v752 = vpop.f32.mrf.mxu0
        %753 = vmatprep.mubr.bf16.mxu0 0
        %754 = vmatmul.mubr.bf16.gmra.mxu0 %v536
        %v755 = vpop.f32.mrf.mxu0
        %v756 = vadd.f32 %v559, %v755
        %v757 = vpop.f32.mrf.mxu0
        %v758 = vpop.f32.mrf.mxu0
        %v759 = vadd.f32 %v559, %v758
        %v760 = vpop.f32.mrf.mxu0
        %761 = vmatprep.mubr.bf16.mxu0 0
        %762 = vmatmul.mubr.bf16.gmra.mxu0 %v537
        %v763 = vpop.f32.mrf.mxu0
        %v764 = vadd.f32 %v559, %v763
        %v765 = vpop.f32.mrf.mxu0
        %v766 = vpop.f32.mrf.mxu0
        %v767 = vadd.f32 %v559, %v766
        %v768 = vpop.f32.mrf.mxu0
        %769 = vdwg.mxu0
        %v770 = vmax.f32 %v644, 0.0
        %v771 = vmax.f32 %v647, 0.0
        %v772 = vmax.f32 %v652, 0.0
        %v773 = vmax.f32 %v655, 0.0
        %v774 = vmax.f32 %v660, 0.0
        %v775 = vmax.f32 %v663, 0.0
        %v776 = vmax.f32 %v668, 0.0
        %v777 = vmax.f32 %v671, 0.0
        %v778 = vmax.f32 %v676, 0.0
        %v779 = vmax.f32 %v679, 0.0
        %v780 = vmax.f32 %v684, 0.0
        %v781 = vmax.f32 %v687, 0.0
        %v782 = vmax.f32 %v692, 0.0
        %v783 = vmax.f32 %v695, 0.0
        %v784 = vmax.f32 %v700, 0.0
        %v785 = vmax.f32 %v703, 0.0
        %v786 = vmax.f32 %v708, 0.0
        %v787 = vmax.f32 %v711, 0.0
        %v788 = vmax.f32 %v716, 0.0
        %v789 = vmax.f32 %v719, 0.0
        %v790 = vmax.f32 %v724, 0.0
        %v791 = vmax.f32 %v727, 0.0
        %v792 = vmax.f32 %v732, 0.0
        %v793 = vmax.f32 %v735, 0.0
        %v794 = vmax.f32 %v740, 0.0
        %v795 = vmax.f32 %v743, 0.0
        %v796 = vmax.f32 %v748, 0.0
        %v797 = vmax.f32 %v751, 0.0
        %v798 = vmax.f32 %v756, 0.0
        %v799 = vmax.f32 %v759, 0.0
        %v800 = vmax.f32 %v764, 0.0
        %v801 = vmax.f32 %v767, 0.0
        %v802 = vpack.c.bf16 %v771, %v770
        %v803 = vpack.c.bf16 %v773, %v772
        %v804 = vpack.c.bf16 %v775, %v774
        %v805 = vpack.c.bf16 %v777, %v776
        %v806 = vpack.c.bf16 %v779, %v778
        %v807 = vpack.c.bf16 %v781, %v780
        %v808 = vpack.c.bf16 %v783, %v782
        %v809 = vpack.c.bf16 %v785, %v784
        %v810 = vpack.c.bf16 %v787, %v786
        %v811 = vpack.c.bf16 %v789, %v788
        %v812 = vpack.c.bf16 %v791, %v790
        %v813 = vpack.c.bf16 %v793, %v792
        %v814 = vpack.c.bf16 %v795, %v794
        %v815 = vpack.c.bf16 %v797, %v796
        %v816 = vpack.c.bf16 %v799, %v798
        %v817 = vpack.c.bf16 %v801, %v800
        %v834 = vunpack.c.l.b16 %v802
        %v835 = vunpack.c.h.b16 %v802
        %v836 = vunpack.c.l.b16 %v803
        %v837 = vunpack.c.h.b16 %v803
        %v838 = vunpack.c.l.b16 %v804
        %v839 = vunpack.c.h.b16 %v804
        %v840 = vunpack.c.l.b16 %v805
        %v841 = vunpack.c.h.b16 %v805
        %v842 = vunpack.c.l.b16 %v806
        %v843 = vunpack.c.h.b16 %v806
        %v844 = vunpack.c.l.b16 %v807
        %v845 = vunpack.c.h.b16 %v807
        %v846 = vunpack.c.l.b16 %v808
        %v847 = vunpack.c.h.b16 %v808
        %v848 = vunpack.c.l.b16 %v809
        %v849 = vunpack.c.h.b16 %v809
        %v850 = vunpack.c.l.b16 %v810
        %v851 = vunpack.c.h.b16 %v810
        %v852 = vunpack.c.l.b16 %v811
        %v853 = vunpack.c.h.b16 %v811
        %v854 = vunpack.c.l.b16 %v812
        %v855 = vunpack.c.h.b16 %v812
        %v856 = vunpack.c.l.b16 %v813
        %v857 = vunpack.c.h.b16 %v813
        %v858 = vunpack.c.l.b16 %v814
        %v859 = vunpack.c.h.b16 %v814
        %v860 = vunpack.c.l.b16 %v815
        %v861 = vunpack.c.h.b16 %v815
        %v862 = vunpack.c.l.b16 %v816
        %v863 = vunpack.c.h.b16 %v816
        %v864 = vunpack.c.l.b16 %v817
        %v865 = vunpack.c.h.b16 %v817
        %v866 = vpack.c.b16 %v834, %v834
        %v867 = vpack.c.b16 %v835, %v835
        %v868 = vpack.c.b16 %v836, %v836
        %v869 = vpack.c.b16 %v837, %v837
        %v870 = vpack.c.b16 %v838, %v838
        %v871 = vpack.c.b16 %v839, %v839
        %v872 = vpack.c.b16 %v840, %v840
        %v873 = vpack.c.b16 %v841, %v841
        %v874 = vpack.c.b16 %v842, %v842
        %v875 = vpack.c.b16 %v843, %v843
        %v876 = vpack.c.b16 %v844, %v844
        %v877 = vpack.c.b16 %v845, %v845
        %v878 = vpack.c.b16 %v846, %v846
        %v879 = vpack.c.b16 %v847, %v847
        %v880 = vpack.c.b16 %v848, %v848
        %v881 = vpack.c.b16 %v849, %v849
        %v882 = vpack.c.b16 %v850, %v850
        %v883 = vpack.c.b16 %v851, %v851
        %v884 = vpack.c.b16 %v852, %v852
        %v885 = vpack.c.b16 %v853, %v853
        %v886 = vpack.c.b16 %v854, %v854
        %v887 = vpack.c.b16 %v855, %v855
        %v888 = vpack.c.b16 %v856, %v856
        %v889 = vpack.c.b16 %v857, %v857
        %v890 = vpack.c.b16 %v858, %v858
        %v891 = vpack.c.b16 %v859, %v859
        %v892 = vpack.c.b16 %v860, %v860
        %v893 = vpack.c.b16 %v861, %v861
        %v894 = vpack.c.b16 %v862, %v862
        %v895 = vpack.c.b16 %v863, %v863
        %v896 = vpack.c.b16 %v864, %v864
        %v897 = vpack.c.b16 %v865, %v865
        %vm898 = vsmask.f32 256
        %vm899 = vsmask.f32 4368
        %vm900 = vmor %vm898, %vm899
        %v902 = vshrl.u32 %v866, 16
        %v904 = vrot.slane %v902, 7
        %v905 = vshll.u32 %v866, 16
        %v907 = vor.u32 %v904, %v905
        %v908 = vrot.slane %v904, 4
        %v910 = vshrl.u32 %v867, 16
        %v912 = vrot.slane %v910, 7
        %v913 = vshll.u32 %v867, 16
        %v915 = vor.u32 %v912, %v913
        %v916 = vsel %vm900, %v908, %v915
        %v917 = vrot.slane %v912, 4
        %v919 = vshrl.u32 %v868, 16
        %v921 = vrot.slane %v919, 7
        %v922 = vshll.u32 %v868, 16
        %v924 = vor.u32 %v921, %v922
        %v925 = vrot.slane %v921, 4
        %v927 = vshrl.u32 %v869, 16
        %v929 = vrot.slane %v927, 7
        %v930 = vshll.u32 %v869, 16
        %v932 = vor.u32 %v929, %v930
        %v933 = vsel %vm900, %v925, %v932
        %v934 = vrot.slane %v929, 4
        %v936 = vshrl.u32 %v870, 16
        %v938 = vrot.slane %v936, 7
        %v939 = vshll.u32 %v870, 16
        %v941 = vor.u32 %v938, %v939
        %v942 = vrot.slane %v938, 4
        %v944 = vshrl.u32 %v871, 16
        %v946 = vrot.slane %v944, 7
        %v947 = vshll.u32 %v871, 16
        %v949 = vor.u32 %v946, %v947
        %v950 = vsel %vm900, %v942, %v949
        %v951 = vrot.slane %v946, 4
        %v953 = vshrl.u32 %v872, 16
        %v955 = vrot.slane %v953, 7
        %v956 = vshll.u32 %v872, 16
        %v958 = vor.u32 %v955, %v956
        %v959 = vrot.slane %v955, 4
        %v961 = vshrl.u32 %v873, 16
        %v963 = vrot.slane %v961, 7
        %v964 = vshll.u32 %v873, 16
        %v966 = vor.u32 %v963, %v964
        %v967 = vsel %vm900, %v959, %v966
        %v968 = vrot.slane %v963, 4
        %v970 = vshrl.u32 %v874, 16
        %v972 = vrot.slane %v970, 7
        %v973 = vshll.u32 %v874, 16
        %v975 = vor.u32 %v972, %v973
        %v976 = vrot.slane %v972, 4
        %v978 = vshrl.u32 %v875, 16
        %v980 = vrot.slane %v978, 7
        %v981 = vshll.u32 %v875, 16
        %v983 = vor.u32 %v980, %v981
        %v984 = vsel %vm900, %v976, %v983
        %v985 = vrot.slane %v980, 4
        %v987 = vshrl.u32 %v876, 16
        %v989 = vrot.slane %v987, 7
        %v990 = vshll.u32 %v876, 16
        %v992 = vor.u32 %v989, %v990
        %v993 = vrot.slane %v989, 4
        %v995 = vshrl.u32 %v877, 16
        %v997 = vrot.slane %v995, 7
        %v998 = vshll.u32 %v877, 16
        %v1000 = vor.u32 %v997, %v998
        %v1001 = vsel %vm900, %v993, %v1000
        %v1002 = vrot.slane %v997, 4
        %v1004 = vshrl.u32 %v878, 16
        %v1006 = vrot.slane %v1004, 7
        %v1007 = vshll.u32 %v878, 16
        %v1009 = vor.u32 %v1006, %v1007
        %v1010 = vrot.slane %v1006, 4
        %v1012 = vshrl.u32 %v879, 16
        %v1014 = vrot.slane %v1012, 7
        %v1015 = vshll.u32 %v879, 16
        %v1017 = vor.u32 %v1014, %v1015
        %v1018 = vsel %vm900, %v1010, %v1017
        %v1019 = vrot.slane %v1014, 4
        %v1021 = vshrl.u32 %v880, 16
        %v1023 = vrot.slane %v1021, 7
        %v1024 = vshll.u32 %v880, 16
        %v1026 = vor.u32 %v1023, %v1024
        %v1027 = vrot.slane %v1023, 4
        %v1029 = vshrl.u32 %v881, 16
        %v1031 = vrot.slane %v1029, 7
        %v1032 = vshll.u32 %v881, 16
        %v1034 = vor.u32 %v1031, %v1032
        %v1035 = vsel %vm900, %v1027, %v1034
        %v1036 = vrot.slane %v1031, 4
        %v1038 = vshrl.u32 %v882, 16
        %v1040 = vrot.slane %v1038, 7
        %v1041 = vshll.u32 %v882, 16
        %v1043 = vor.u32 %v1040, %v1041
        %v1044 = vrot.slane %v1040, 4
        %v1046 = vshrl.u32 %v883, 16
        %v1048 = vrot.slane %v1046, 7
        %v1049 = vshll.u32 %v883, 16
        %v1051 = vor.u32 %v1048, %v1049
        %v1052 = vsel %vm900, %v1044, %v1051
        %v1053 = vrot.slane %v1048, 4
        %v1055 = vshrl.u32 %v884, 16
        %v1057 = vrot.slane %v1055, 7
        %v1058 = vshll.u32 %v884, 16
        %v1060 = vor.u32 %v1057, %v1058
        %v1061 = vrot.slane %v1057, 4
        %v1063 = vshrl.u32 %v885, 16
        %v1065 = vrot.slane %v1063, 7
        %v1066 = vshll.u32 %v885, 16
        %v1068 = vor.u32 %v1065, %v1066
        %v1069 = vsel %vm900, %v1061, %v1068
        %v1070 = vrot.slane %v1065, 4
        %v1072 = vshrl.u32 %v886, 16
        %v1074 = vrot.slane %v1072, 7
        %v1075 = vshll.u32 %v886, 16
        %v1077 = vor.u32 %v1074, %v1075
        %v1078 = vrot.slane %v1074, 4
        %v1080 = vshrl.u32 %v887, 16
        %v1082 = vrot.slane %v1080, 7
        %v1083 = vshll.u32 %v887, 16
        %v1085 = vor.u32 %v1082, %v1083
        %v1086 = vsel %vm900, %v1078, %v1085
        %v1087 = vrot.slane %v1082, 4
        %v1089 = vshrl.u32 %v888, 16
        %v1091 = vrot.slane %v1089, 7
        %v1092 = vshll.u32 %v888, 16
        %v1094 = vor.u32 %v1091, %v1092
        %v1095 = vrot.slane %v1091, 4
        %v1097 = vshrl.u32 %v889, 16
        %v1099 = vrot.slane %v1097, 7
        %v1100 = vshll.u32 %v889, 16
        %v1102 = vor.u32 %v1099, %v1100
        %v1103 = vsel %vm900, %v1095, %v1102
        %v1104 = vrot.slane %v1099, 4
        %v1106 = vshrl.u32 %v890, 16
        %v1108 = vrot.slane %v1106, 7
        %v1109 = vshll.u32 %v890, 16
        %v1111 = vor.u32 %v1108, %v1109
        %v1112 = vrot.slane %v1108, 4
        %v1114 = vshrl.u32 %v891, 16
        %v1116 = vrot.slane %v1114, 7
        %v1117 = vshll.u32 %v891, 16
        %v1119 = vor.u32 %v1116, %v1117
        %v1120 = vsel %vm900, %v1112, %v1119
        %v1121 = vrot.slane %v1116, 4
        %v1123 = vshrl.u32 %v892, 16
        %v1125 = vrot.slane %v1123, 7
        %v1126 = vshll.u32 %v892, 16
        %v1128 = vor.u32 %v1125, %v1126
        %v1129 = vrot.slane %v1125, 4
        %v1131 = vshrl.u32 %v893, 16
        %v1133 = vrot.slane %v1131, 7
        %v1134 = vshll.u32 %v893, 16
        %v1136 = vor.u32 %v1133, %v1134
        %v1137 = vsel %vm900, %v1129, %v1136
        %v1138 = vrot.slane %v1133, 4
        %v1140 = vshrl.u32 %v894, 16
        %v1142 = vrot.slane %v1140, 7
        %v1143 = vshll.u32 %v894, 16
        %v1145 = vor.u32 %v1142, %v1143
        %v1146 = vrot.slane %v1142, 4
        %v1148 = vshrl.u32 %v895, 16
        %v1150 = vrot.slane %v1148, 7
        %v1151 = vshll.u32 %v895, 16
        %v1153 = vor.u32 %v1150, %v1151
        %v1154 = vsel %vm900, %v1146, %v1153
        %v1155 = vrot.slane %v1150, 4
        %v1157 = vshrl.u32 %v896, 16
        %v1159 = vrot.slane %v1157, 7
        %v1160 = vshll.u32 %v896, 16
        %v1162 = vor.u32 %v1159, %v1160
        %v1163 = vrot.slane %v1159, 4
        %v1165 = vshrl.u32 %v897, 16
        %v1167 = vrot.slane %v1165, 7
        %v1168 = vshll.u32 %v897, 16
        %v1170 = vor.u32 %v1167, %v1168
        %v1171 = vsel %vm900, %v1163, %v1170
        %v1172 = vrot.slane %v1167, 4
        %s1221 = scalar_lea.vmem [#allocation2], 12
        %vm1222 = vcmask 257024
        %vm1223 = vsmask.f32 7938
        %vm1224 = vmand %vm1222, %vm1223
        %v1225 = vld [vmem:[%s1221] sm:$0xf]
        %v1226 = vsel %vm1224, %v907, %v1225
        %1227 = vst [vmem:[%s1221] sm:$0xf] %v1226
        %vm1228 = vcmask 257024
        %1229 = vst.msk [vmem:[%s1221 + $0x4] sm:$0xf] %vm1228, %v916
        %vm1230 = vcmask 253952
        %vm1231 = vmand %vm1230, %vm898
        %v1232 = vld [vmem:[%s1221 + $0x8] sm:$0x1]
        %v1233 = vsel %vm1231, %v917, %v1232
        %1234 = vst [vmem:[%s1221 + $0x8] sm:$0x1] %v1233
        %v1235 = vld [vmem:[%s1221 + $0xc] sm:$0xf]
        %v1236 = vsel %vm1224, %v924, %v1235
        %1237 = vst [vmem:[%s1221 + $0xc] sm:$0xf] %v1236
        %1238 = vst.msk [vmem:[%s1221 + $0x10] sm:$0xf] %vm1228, %v933
        %v1239 = vld [vmem:[%s1221 + $0x14] sm:$0x1]
        %v1240 = vsel %vm1231, %v934, %v1239
        %1241 = vst [vmem:[%s1221 + $0x14] sm:$0x1] %v1240
        %v1242 = vld [vmem:[%s1221 + $0x18] sm:$0xf]
        %v1243 = vsel %vm1224, %v941, %v1242
        %1244 = vst [vmem:[%s1221 + $0x18] sm:$0xf] %v1243
        %1245 = vst.msk [vmem:[%s1221 + $0x1c] sm:$0xf] %vm1228, %v950
        %v1246 = vld [vmem:[%s1221 + $0x20] sm:$0x1]
        %v1247 = vsel %vm1231, %v951, %v1246
        %1248 = vst [vmem:[%s1221 + $0x20] sm:$0x1] %v1247
        %v1249 = vld [vmem:[%s1221 + $0x24] sm:$0xf]
        %v1250 = vsel %vm1224, %v958, %v1249
        %1251 = vst [vmem:[%s1221 + $0x24] sm:$0xf] %v1250
        %1252 = vst.msk [vmem:[%s1221 + $0x28] sm:$0xf] %vm1228, %v967
        %v1253 = vld [vmem:[%s1221 + $0x2c] sm:$0x1]
        %v1254 = vsel %vm1231, %v968, %v1253
        %1255 = vst [vmem:[%s1221 + $0x2c] sm:$0x1] %v1254
        %v1256 = vld [vmem:[%s1221 + $0x30] sm:$0xf]
        %v1257 = vsel %vm1224, %v975, %v1256
        %1258 = vst [vmem:[%s1221 + $0x30] sm:$0xf] %v1257
        %1259 = vst.msk [vmem:[%s1221 + $0x34] sm:$0xf] %vm1228, %v984
        %v1260 = vld [vmem:[%s1221 + $0x38] sm:$0x1]
        %v1261 = vsel %vm1231, %v985, %v1260
        %1262 = vst [vmem:[%s1221 + $0x38] sm:$0x1] %v1261
        %v1263 = vld [vmem:[%s1221 + $0x3c] sm:$0xf]
        %v1264 = vsel %vm1224, %v992, %v1263
        %1265 = vst [vmem:[%s1221 + $0x3c] sm:$0xf] %v1264
        %1266 = vst.msk [vmem:[%s1221 + $0x40] sm:$0xf] %vm1228, %v1001
        %v1267 = vld [vmem:[%s1221 + $0x44] sm:$0x1]
        %v1268 = vsel %vm1231, %v1002, %v1267
        %1269 = vst [vmem:[%s1221 + $0x44] sm:$0x1] %v1268
        %v1270 = vld [vmem:[%s1221 + $0x48] sm:$0xf]
        %v1271 = vsel %vm1224, %v1009, %v1270
        %1272 = vst [vmem:[%s1221 + $0x48] sm:$0xf] %v1271
        %1273 = vst.msk [vmem:[%s1221 + $0x4c] sm:$0xf] %vm1228, %v1018
        %v1274 = vld [vmem:[%s1221 + $0x50] sm:$0x1]
        %v1275 = vsel %vm1231, %v1019, %v1274
        %1276 = vst [vmem:[%s1221 + $0x50] sm:$0x1] %v1275
        %v1277 = vld [vmem:[%s1221 + $0x54] sm:$0xf]
        %v1278 = vsel %vm1224, %v1026, %v1277
        %1279 = vst [vmem:[%s1221 + $0x54] sm:$0xf] %v1278
        %1280 = vst.msk [vmem:[%s1221 + $0x58] sm:$0xf] %vm1228, %v1035
        %v1281 = vld [vmem:[%s1221 + $0x5c] sm:$0x1]
        %v1282 = vsel %vm1231, %v1036, %v1281
        %1283 = vst [vmem:[%s1221 + $0x5c] sm:$0x1] %v1282
        %v1284 = vld [vmem:[%s1221 + $0x60] sm:$0xf]
        %v1285 = vsel %vm1224, %v1043, %v1284
        %1286 = vst [vmem:[%s1221 + $0x60] sm:$0xf] %v1285
        %1287 = vst.msk [vmem:[%s1221 + $0x64] sm:$0xf] %vm1228, %v1052
        %v1288 = vld [vmem:[%s1221 + $0x68] sm:$0x1]
        %v1289 = vsel %vm1231, %v1053, %v1288
        %1290 = vst [vmem:[%s1221 + $0x68] sm:$0x1] %v1289
        %v1291 = vld [vmem:[%s1221 + $0x6c] sm:$0xf]
        %v1292 = vsel %vm1224, %v1060, %v1291
        %1293 = vst [vmem:[%s1221 + $0x6c] sm:$0xf] %v1292
        %1294 = vst.msk [vmem:[%s1221 + $0x70] sm:$0xf] %vm1228, %v1069
        %v1295 = vld [vmem:[%s1221 + $0x74] sm:$0x1]
        %v1296 = vsel %vm1231, %v1070, %v1295
        %1297 = vst [vmem:[%s1221 + $0x74] sm:$0x1] %v1296
        %v1298 = vld [vmem:[%s1221 + $0x78] sm:$0xf]
        %v1299 = vsel %vm1224, %v1077, %v1298
        %1300 = vst [vmem:[%s1221 + $0x78] sm:$0xf] %v1299
        %1301 = vst.msk [vmem:[%s1221 + $0x7c] sm:$0xf] %vm1228, %v1086
        %v1302 = vld [vmem:[%s1221 + $0x80] sm:$0x1]
        %v1303 = vsel %vm1231, %v1087, %v1302
        %1304 = vst [vmem:[%s1221 + $0x80] sm:$0x1] %v1303
        %v1305 = vld [vmem:[%s1221 + $0x84] sm:$0xf]
        %v1306 = vsel %vm1224, %v1094, %v1305
        %1307 = vst [vmem:[%s1221 + $0x84] sm:$0xf] %v1306
        %1308 = vst.msk [vmem:[%s1221 + $0x88] sm:$0xf] %vm1228, %v1103
        %v1309 = vld [vmem:[%s1221 + $0x8c] sm:$0x1]
        %v1310 = vsel %vm1231, %v1104, %v1309
        %1311 = vst [vmem:[%s1221 + $0x8c] sm:$0x1] %v1310
        %v1312 = vld [vmem:[%s1221 + $0x90] sm:$0xf]
        %v1313 = vsel %vm1224, %v1111, %v1312
        %1314 = vst [vmem:[%s1221 + $0x90] sm:$0xf] %v1313
        %1315 = vst.msk [vmem:[%s1221 + $0x94] sm:$0xf] %vm1228, %v1120
        %v1316 = vld [vmem:[%s1221 + $0x98] sm:$0x1]
        %v1317 = vsel %vm1231, %v1121, %v1316
        %1318 = vst [vmem:[%s1221 + $0x98] sm:$0x1] %v1317
        %v1319 = vld [vmem:[%s1221 + $0x9c] sm:$0xf]
        %v1320 = vsel %vm1224, %v1128, %v1319
        %1321 = vst [vmem:[%s1221 + $0x9c] sm:$0xf] %v1320
        %1322 = vst.msk [vmem:[%s1221 + $0xa0] sm:$0xf] %vm1228, %v1137
        %v1323 = vld [vmem:[%s1221 + $0xa4] sm:$0x1]
        %v1324 = vsel %vm1231, %v1138, %v1323
        %1325 = vst [vmem:[%s1221 + $0xa4] sm:$0x1] %v1324
        %v1326 = vld [vmem:[%s1221 + $0xa8] sm:$0xf]
        %v1327 = vsel %vm1224, %v1145, %v1326
        %1328 = vst [vmem:[%s1221 + $0xa8] sm:$0xf] %v1327
        %1329 = vst.msk [vmem:[%s1221 + $0xac] sm:$0xf] %vm1228, %v1154
        %v1330 = vld [vmem:[%s1221 + $0xb0] sm:$0x1]
        %v1331 = vsel %vm1231, %v1155, %v1330
        %1332 = vst [vmem:[%s1221 + $0xb0] sm:$0x1] %v1331
        %v1333 = vld [vmem:[%s1221 + $0xb4] sm:$0xf]
        %v1334 = vsel %vm1224, %v1162, %v1333
        %1335 = vst [vmem:[%s1221 + $0xb4] sm:$0xf] %v1334
        %1336 = vst.msk [vmem:[%s1221 + $0xb8] sm:$0xf] %vm1228, %v1171
        %v1337 = vld [vmem:[%s1221 + $0xbc] sm:$0x1]
        %v1338 = vsel %vm1231, %v1172, %v1337
        %1339 = vst [vmem:[%s1221 + $0xbc] sm:$0x1] %v1338
        %v1340 = vld [vmem:[%s416] sm:$0xff]
        %v1341 = vld [vmem:[%s416 + $0x8] sm:$0xff]
        %v1342 = vpack.c.bf16 %v1341, %v1340
        %v1343 = vld [vmem:[%s3] sm:$0xf]
        %v1344 = vld [vmem:[%s3 + $0x4] sm:$0xf]
        %v1345 = vld [vmem:[%s3 + $0x8] sm:$0xf]
        %v1346 = vld [vmem:[%s3 + $0xc] sm:$0xf]
        %v1347 = vld [vmem:[%s3 + $0x10] sm:$0xf]
        %v1348 = vld [vmem:[%s3 + $0x14] sm:$0xf]
        %v1349 = vld [vmem:[%s3 + $0x18] sm:$0xf]
        %v1350 = vld [vmem:[%s3 + $0x1c] sm:$0xf]
        %v1351 = vld [vmem:[%s3 + $0x20] sm:$0xf]
        %v1352 = vld [vmem:[%s3 + $0x24] sm:$0xf]
        %v1353 = vld [vmem:[%s3 + $0x28] sm:$0xf]
        %v1354 = vld [vmem:[%s3 + $0x2c] sm:$0xf]
        %v1355 = vld [vmem:[%s3 + $0x30] sm:$0xf]
        %v1356 = vld [vmem:[%s3 + $0x34] sm:$0xf]
        %v1357 = vld [vmem:[%s3 + $0x38] sm:$0xf]
        %v1358 = vld [vmem:[%s3 + $0x3c] sm:$0xf]
        %v1359 = vld [vmem:[%s4] sm:$0x1]
        %v1361 = vlaneseq
        %v1362 = vshrl.u32 %v1361, 7
        %v1363 = vsub.s32 0, %v1362
        %v1364 = vrot.slane %v1359, %v1363
        %v1382 = vunpack.c.l.b16 %v1343
        %v1383 = vunpack.c.l.b16 %v1344
        %v1384 = vunpack.c.l.b16 %v1345
        %v1385 = vunpack.c.l.b16 %v1346
        %v1386 = vunpack.c.l.b16 %v1347
        %v1387 = vunpack.c.l.b16 %v1348
        %v1388 = vunpack.c.l.b16 %v1349
        %v1389 = vunpack.c.l.b16 %v1350
        %v1390 = vunpack.c.l.b16 %v1351
        %v1391 = vunpack.c.l.b16 %v1352
        %v1392 = vunpack.c.l.b16 %v1353
        %v1393 = vunpack.c.l.b16 %v1354
        %v1394 = vunpack.c.l.b16 %v1355
        %v1395 = vunpack.c.l.b16 %v1356
        %v1396 = vunpack.c.l.b16 %v1357
        %v1397 = vunpack.c.l.b16 %v1358
        %v1398 = vpack.c.b16 %v1383, %v1382
        %v1399 = vpack.c.b16 %v1385, %v1384
        %v1400 = vpack.c.b16 %v1387, %v1386
        %v1401 = vpack.c.b16 %v1389, %v1388
        %v1402 = vpack.c.b16 %v1391, %v1390
        %v1403 = vpack.c.b16 %v1393, %v1392
        %v1404 = vpack.c.b16 %v1395, %v1394
        %v1405 = vpack.c.b16 %v1397, %v1396
        %1414 = vmatprep.subr.bf16.mxu0 0
        %1415 = vmatpush1.bf16.msra.mxu0 %v1405
        %1416 = vmatprep.subr.bf16.mxu0 0
        %1417 = vmatpush1.bf16.msra.mxu0 %v1404
        %1418 = vmatprep.subr.bf16.mxu0 0
        %1419 = vmatpush1.bf16.msra.mxu0 %v1403
        %1420 = vmatprep.subr.bf16.mxu0 0
        %1421 = vmatpush1.bf16.msra.mxu0 %v1402
        %1422 = vmatprep.subr.bf16.mxu0 0
        %1423 = vmatpush1.bf16.msra.mxu0 %v1401
        %1424 = vmatprep.subr.bf16.mxu0 0
        %1425 = vmatpush1.bf16.msra.mxu0 %v1400
        %1426 = vmatprep.subr.bf16.mxu0 0
        %1427 = vmatpush1.bf16.msra.mxu0 %v1399
        %1428 = vmatprep.subr.bf16.mxu0 0
        %1429 = vmatpush1.bf16.msra.mxu0 %v1398
        %1430 = vmatprep.subr.bf16.mxu0 0
        %1431 = vmatpush2.bf16.msra.mxu0 0
        %1432 = vmatprep.subr.bf16.mxu0 0
        %1433 = vmatpush2.bf16.msra.mxu0 0
        %1434 = vmatprep.subr.bf16.mxu0 0
        %1435 = vmatpush2.bf16.msra.mxu0 0
        %1436 = vmatprep.subr.bf16.mxu0 0
        %1437 = vmatpush2.bf16.msra.mxu0 0
        %1438 = vmatprep.subr.bf16.mxu0 0
        %1439 = vmatpush2.bf16.msra.mxu0 0
        %1440 = vmatprep.subr.bf16.mxu0 0
        %1441 = vmatpush2.bf16.msra.mxu0 0
        %1442 = vmatprep.subr.bf16.mxu0 0
        %1443 = vmatpush2.bf16.msra.mxu0 0
        %1444 = vmatprep.subr.bf16.mxu0 0
        %1445 = vmatpush2.bf16.msra.mxu0 0
        %1446 = vmatprep.mubr.bf16.mxu0 0
        %1447 = vmatmul.mubr.bf16.gmra.mxu0 %v1342
        %v1448 = vpop.f32.mrf.mxu0
        %v1449 = vadd.f32 %v1364, %v1448
        %v1450 = vpop.f32.mrf.mxu0
        %v1451 = vpop.f32.mrf.mxu0
        %v1452 = vadd.f32 %v1364, %v1451
        %v1453 = vpop.f32.mrf.mxu0
        %1454 = vdwg.mxu0
        %v1455 = vmax.f32 %v1449, 0.0
        %v1456 = vmax.f32 %v1452, 0.0
        %v1457 = vpack.c.bf16 %v1456, %v1455
        %v1459 = vunpack.c.l.b16 %v1457
        %v1460 = vunpack.c.h.b16 %v1457
        %v1461 = vpack.c.b16 %v1459, %v1459
        %v1462 = vpack.c.b16 %v1460, %v1460
        %v1464 = vshrl.u32 %v1461, 16
        %v1466 = vrot.slane %v1464, 7
        %v1467 = vshll.u32 %v1461, 16
        %v1469 = vor.u32 %v1466, %v1467
        %v1470 = vrot.slane %v1466, 4
        %v1472 = vshrl.u32 %v1462, 16
        %v1474 = vrot.slane %v1472, 7
        %v1475 = vshll.u32 %v1462, 16
        %v1477 = vor.u32 %v1474, %v1475
        %v1478 = vsel %vm900, %v1470, %v1477
        %v1479 = vrot.slane %v1474, 4
        %v1483 = vld [vmem:[#allocation2] sm:$0xf]
        %v1484 = vsel %vm1224, %v1469, %v1483
        %1485 = vst [vmem:[#allocation2] sm:$0xf] %v1484
        %1486 = vst.msk [vmem:[#allocation2 + $0x4] sm:$0xf] %vm1228, %v1478
        %v1487 = vld [vmem:[#allocation2 + $0x8] sm:$0x1]
        %v1488 = vsel %vm1231, %v1479, %v1487
        %1489 = vst [vmem:[#allocation2 + $0x8] sm:$0x1] %v1488
        %v1490 = vld [vmem:[%s434] sm:$0xff]
        %v1491 = vld [vmem:[%s434 + $0x8] sm:$0xff]
        %v1492 = vpack.c.bf16 %v1491, %v1490
        %v1493 = vld [vmem:[%s3] sm:$0xf]
        %v1494 = vld [vmem:[%s3 + $0x4] sm:$0xf]
        %v1495 = vld [vmem:[%s3 + $0x8] sm:$0xf]
        %v1496 = vld [vmem:[%s3 + $0xc] sm:$0xf]
        %v1497 = vld [vmem:[%s3 + $0x10] sm:$0xf]
        %v1498 = vld [vmem:[%s3 + $0x14] sm:$0xf]
        %v1499 = vld [vmem:[%s3 + $0x18] sm:$0xf]
        %v1500 = vld [vmem:[%s3 + $0x1c] sm:$0xf]
        %v1501 = vld [vmem:[%s3 + $0x20] sm:$0xf]
        %v1502 = vld [vmem:[%s3 + $0x24] sm:$0xf]
        %v1503 = vld [vmem:[%s3 + $0x28] sm:$0xf]
        %v1504 = vld [vmem:[%s3 + $0x2c] sm:$0xf]
        %v1505 = vld [vmem:[%s3 + $0x30] sm:$0xf]
        %v1506 = vld [vmem:[%s3 + $0x34] sm:$0xf]
        %v1507 = vld [vmem:[%s3 + $0x38] sm:$0xf]
        %v1508 = vld [vmem:[%s3 + $0x3c] sm:$0xf]
        %v1509 = vld [vmem:[%s4] sm:$0x1]
        %v1511 = vlaneseq
        %v1512 = vshrl.u32 %v1511, 7
        %v1513 = vsub.s32 0, %v1512
        %v1514 = vrot.slane %v1509, %v1513
        %v1532 = vunpack.c.l.b16 %v1493
        %v1533 = vunpack.c.l.b16 %v1494
        %v1534 = vunpack.c.l.b16 %v1495
        %v1535 = vunpack.c.l.b16 %v1496
        %v1536 = vunpack.c.l.b16 %v1497
        %v1537 = vunpack.c.l.b16 %v1498
        %v1538 = vunpack.c.l.b16 %v1499
        %v1539 = vunpack.c.l.b16 %v1500
        %v1540 = vunpack.c.l.b16 %v1501
        %v1541 = vunpack.c.l.b16 %v1502
        %v1542 = vunpack.c.l.b16 %v1503
        %v1543 = vunpack.c.l.b16 %v1504
        %v1544 = vunpack.c.l.b16 %v1505
        %v1545 = vunpack.c.l.b16 %v1506
        %v1546 = vunpack.c.l.b16 %v1507
        %v1547 = vunpack.c.l.b16 %v1508
        %v1548 = vpack.c.b16 %v1533, %v1532
        %v1549 = vpack.c.b16 %v1535, %v1534
        %v1550 = vpack.c.b16 %v1537, %v1536
        %v1551 = vpack.c.b16 %v1539, %v1538
        %v1552 = vpack.c.b16 %v1541, %v1540
        %v1553 = vpack.c.b16 %v1543, %v1542
        %v1554 = vpack.c.b16 %v1545, %v1544
        %v1555 = vpack.c.b16 %v1547, %v1546
        %1564 = vmatprep.subr.bf16.mxu0 0
        %1565 = vmatpush1.bf16.msra.mxu0 %v1555
        %1566 = vmatprep.subr.bf16.mxu0 0
        %1567 = vmatpush1.bf16.msra.mxu0 %v1554
        %1568 = vmatprep.subr.bf16.mxu0 0
        %1569 = vmatpush1.bf16.msra.mxu0 %v1553
        %1570 = vmatprep.subr.bf16.mxu0 0
        %1571 = vmatpush1.bf16.msra.mxu0 %v1552
        %1572 = vmatprep.subr.bf16.mxu0 0
        %1573 = vmatpush1.bf16.msra.mxu0 %v1551
        %1574 = vmatprep.subr.bf16.mxu0 0
        %1575 = vmatpush1.bf16.msra.mxu0 %v1550
        %1576 = vmatprep.subr.bf16.mxu0 0
        %1577 = vmatpush1.bf16.msra.mxu0 %v1549
        %1578 = vmatprep.subr.bf16.mxu0 0
        %1579 = vmatpush1.bf16.msra.mxu0 %v1548
        %1580 = vmatprep.subr.bf16.mxu0 0
        %1581 = vmatpush2.bf16.msra.mxu0 0
        %1582 = vmatprep.subr.bf16.mxu0 0
        %1583 = vmatpush2.bf16.msra.mxu0 0
        %1584 = vmatprep.subr.bf16.mxu0 0
        %1585 = vmatpush2.bf16.msra.mxu0 0
        %1586 = vmatprep.subr.bf16.mxu0 0
        %1587 = vmatpush2.bf16.msra.mxu0 0
        %1588 = vmatprep.subr.bf16.mxu0 0
        %1589 = vmatpush2.bf16.msra.mxu0 0
        %1590 = vmatprep.subr.bf16.mxu0 0
        %1591 = vmatpush2.bf16.msra.mxu0 0
        %1592 = vmatprep.subr.bf16.mxu0 0
        %1593 = vmatpush2.bf16.msra.mxu0 0
        %1594 = vmatprep.subr.bf16.mxu0 0
        %1595 = vmatpush2.bf16.msra.mxu0 0
        %1596 = vmatprep.mubr.bf16.mxu0 0
        %1597 = vmatmul.mubr.bf16.gmra.mxu0 %v1492
        %v1598 = vpop.f32.mrf.mxu0
        %v1599 = vadd.f32 %v1514, %v1598
        %v1600 = vpop.f32.mrf.mxu0
        %v1601 = vpop.f32.mrf.mxu0
        %v1602 = vadd.f32 %v1514, %v1601
        %v1603 = vpop.f32.mrf.mxu0
        %1604 = vdwg.mxu0
        %v1605 = vmax.f32 %v1599, 0.0
        %v1606 = vmax.f32 %v1602, 0.0
        %v1607 = vpack.c.bf16 %v1606, %v1605
        %v1609 = vunpack.c.l.b16 %v1607
        %v1610 = vunpack.c.h.b16 %v1607
        %v1611 = vpack.c.b16 %v1609, %v1609
        %v1612 = vpack.c.b16 %v1610, %v1610
        %v1614 = vshrl.u32 %v1611, 16
        %v1616 = vrot.slane %v1614, 7
        %v1617 = vshll.u32 %v1611, 16
        %v1619 = vor.u32 %v1616, %v1617
        %v1620 = vrot.slane %v1616, 4
        %v1622 = vshrl.u32 %v1612, 16
        %v1624 = vrot.slane %v1622, 7
        %v1625 = vshll.u32 %v1612, 16
        %v1627 = vor.u32 %v1624, %v1625
        %v1628 = vsel %vm900, %v1620, %v1627
        %v1629 = vrot.slane %v1624, 4
        %s1633 = scalar_lea.vmem [#allocation2], 204
        %v1634 = vld [vmem:[%s1633] sm:$0xf]
        %v1635 = vsel %vm1224, %v1619, %v1634
        %1636 = vst [vmem:[%s1633] sm:$0xf] %v1635
        %1637 = vst.msk [vmem:[%s1633 + $0x4] sm:$0xf] %vm1228, %v1628
        %v1638 = vld [vmem:[%s1633 + $0x8] sm:$0x1]
        %v1639 = vsel %vm1231, %v1629, %v1638
        %1640 = vst [vmem:[%s1633 + $0x8] sm:$0x1] %v1639
        %v1641 = vld [vmem:[#allocation2] sm:$0x1]
        %v1642 = vsel %vm1231, 0, %v1641
        %1643 = vst [vmem:[#allocation2] sm:$0x1] %v1642
        %v1644 = vld [vmem:[#allocation2 + $0xc] sm:$0x1]
        %v1645 = vsel %vm1231, 0, %v1644
        %1646 = vst [vmem:[#allocation2 + $0xc] sm:$0x1] %v1645
        %v1647 = vld [vmem:[#allocation2 + $0x18] sm:$0x1]
        %v1648 = vsel %vm1231, 0, %v1647
        %1649 = vst [vmem:[#allocation2 + $0x18] sm:$0x1] %v1648
        %v1650 = vld [vmem:[#allocation2 + $0x24] sm:$0x1]
        %v1651 = vsel %vm1231, 0, %v1650
        %1652 = vst [vmem:[#allocation2 + $0x24] sm:$0x1] %v1651
        %v1653 = vld [vmem:[#allocation2 + $0x30] sm:$0x1]
        %v1654 = vsel %vm1231, 0, %v1653
        %1655 = vst [vmem:[#allocation2 + $0x30] sm:$0x1] %v1654
        %v1656 = vld [vmem:[#allocation2 + $0x3c] sm:$0x1]
        %v1657 = vsel %vm1231, 0, %v1656
        %1658 = vst [vmem:[#allocation2 + $0x3c] sm:$0x1] %v1657
        %v1659 = vld [vmem:[#allocation2 + $0x48] sm:$0x1]
        %v1660 = vsel %vm1231, 0, %v1659
        %1661 = vst [vmem:[#allocation2 + $0x48] sm:$0x1] %v1660
        %v1662 = vld [vmem:[#allocation2 + $0x54] sm:$0x1]
        %v1663 = vsel %vm1231, 0, %v1662
        %1664 = vst [vmem:[#allocation2 + $0x54] sm:$0x1] %v1663
        %v1665 = vld [vmem:[#allocation2 + $0x60] sm:$0x1]
        %v1666 = vsel %vm1231, 0, %v1665
        %1667 = vst [vmem:[#allocation2 + $0x60] sm:$0x1] %v1666
        %v1668 = vld [vmem:[#allocation2 + $0x6c] sm:$0x1]
        %v1669 = vsel %vm1231, 0, %v1668
        %1670 = vst [vmem:[#allocation2 + $0x6c] sm:$0x1] %v1669
        %v1671 = vld [vmem:[#allocation2 + $0x78] sm:$0x1]
        %v1672 = vsel %vm1231, 0, %v1671
        %1673 = vst [vmem:[#allocation2 + $0x78] sm:$0x1] %v1672
        %v1674 = vld [vmem:[#allocation2 + $0x84] sm:$0x1]
        %v1675 = vsel %vm1231, 0, %v1674
        %1676 = vst [vmem:[#allocation2 + $0x84] sm:$0x1] %v1675
        %v1677 = vld [vmem:[#allocation2 + $0x90] sm:$0x1]
        %v1678 = vsel %vm1231, 0, %v1677
        %1679 = vst [vmem:[#allocation2 + $0x90] sm:$0x1] %v1678
        %v1680 = vld [vmem:[#allocation2 + $0x9c] sm:$0x1]
        %v1681 = vsel %vm1231, 0, %v1680
        %1682 = vst [vmem:[#allocation2 + $0x9c] sm:$0x1] %v1681
        %v1683 = vld [vmem:[#allocation2 + $0xa8] sm:$0x1]
        %v1684 = vsel %vm1231, 0, %v1683
        %1685 = vst [vmem:[#allocation2 + $0xa8] sm:$0x1] %v1684
        %v1686 = vld [vmem:[#allocation2 + $0xb4] sm:$0x1]
        %v1687 = vsel %vm1231, 0, %v1686
        %1688 = vst [vmem:[#allocation2 + $0xb4] sm:$0x1] %v1687
        %v1689 = vld [vmem:[#allocation2 + $0xc0] sm:$0x1]
        %v1690 = vsel %vm1231, 0, %v1689
        %1691 = vst [vmem:[#allocation2 + $0xc0] sm:$0x1] %v1690
        %v1692 = vld [vmem:[#allocation2 + $0xcc] sm:$0x1]
        %v1693 = vsel %vm1231, 0, %v1692
        %1694 = vst [vmem:[#allocation2 + $0xcc] sm:$0x1] %v1693
        %vm1695 = vmand %vm1230, %vm1223
        %v1696 = vld [vmem:[#allocation2 + $0x8] sm:$0x1]
        %v1697 = vsel %vm1695, 0, %v1696
        %1698 = vst [vmem:[#allocation2 + $0x8] sm:$0x1] %v1697
        %v1699 = vld [vmem:[#allocation2 + $0x14] sm:$0x1]
        %v1700 = vsel %vm1695, 0, %v1699
        %1701 = vst [vmem:[#allocation2 + $0x14] sm:$0x1] %v1700
        %v1702 = vld [vmem:[#allocation2 + $0x20] sm:$0x1]
        %v1703 = vsel %vm1695, 0, %v1702
        %1704 = vst [vmem:[#allocation2 + $0x20] sm:$0x1] %v1703
        %v1705 = vld [vmem:[#allocation2 + $0x2c] sm:$0x1]
        %v1706 = vsel %vm1695, 0, %v1705
        %1707 = vst [vmem:[#allocation2 + $0x2c] sm:$0x1] %v1706
        %v1708 = vld [vmem:[#allocation2 + $0x38] sm:$0x1]
        %v1709 = vsel %vm1695, 0, %v1708
        %1710 = vst [vmem:[#allocation2 + $0x38] sm:$0x1] %v1709
        %v1711 = vld [vmem:[#allocation2 + $0x44] sm:$0x1]
        %v1712 = vsel %vm1695, 0, %v1711
        %1713 = vst [vmem:[#allocation2 + $0x44] sm:$0x1] %v1712
        %v1714 = vld [vmem:[#allocation2 + $0x50] sm:$0x1]
        %v1715 = vsel %vm1695, 0, %v1714
        %1716 = vst [vmem:[#allocation2 + $0x50] sm:$0x1] %v1715
        %v1717 = vld [vmem:[#allocation2 + $0x5c] sm:$0x1]
        %v1718 = vsel %vm1695, 0, %v1717
        %1719 = vst [vmem:[#allocation2 + $0x5c] sm:$0x1] %v1718
        %v1720 = vld [vmem:[#allocation2 + $0x68] sm:$0x1]
        %v1721 = vsel %vm1695, 0, %v1720
        %1722 = vst [vmem:[#allocation2 + $0x68] sm:$0x1] %v1721
        %v1723 = vld [vmem:[#allocation2 + $0x74] sm:$0x1]
        %v1724 = vsel %vm1695, 0, %v1723
        %1725 = vst [vmem:[#allocation2 + $0x74] sm:$0x1] %v1724
        %v1726 = vld [vmem:[#allocation2 + $0x80] sm:$0x1]
        %v1727 = vsel %vm1695, 0, %v1726
        %1728 = vst [vmem:[#allocation2 + $0x80] sm:$0x1] %v1727
        %v1729 = vld [vmem:[#allocation2 + $0x8c] sm:$0x1]
        %v1730 = vsel %vm1695, 0, %v1729
        %1731 = vst [vmem:[#allocation2 + $0x8c] sm:$0x1] %v1730
        %v1732 = vld [vmem:[#allocation2 + $0x98] sm:$0x1]
        %v1733 = vsel %vm1695, 0, %v1732
        %1734 = vst [vmem:[#allocation2 + $0x98] sm:$0x1] %v1733
        %v1735 = vld [vmem:[#allocation2 + $0xa4] sm:$0x1]
        %v1736 = vsel %vm1695, 0, %v1735
        %1737 = vst [vmem:[#allocation2 + $0xa4] sm:$0x1] %v1736
        %v1738 = vld [vmem:[#allocation2 + $0xb0] sm:$0x1]
        %v1739 = vsel %vm1695, 0, %v1738
        %1740 = vst [vmem:[#allocation2 + $0xb0] sm:$0x1] %v1739
        %v1741 = vld [vmem:[#allocation2 + $0xbc] sm:$0x1]
        %v1742 = vsel %vm1695, 0, %v1741
        %1743 = vst [vmem:[#allocation2 + $0xbc] sm:$0x1] %v1742
        %v1744 = vld [vmem:[#allocation2 + $0xc8] sm:$0x1]
        %v1745 = vsel %vm1695, 0, %v1744
        %1746 = vst [vmem:[#allocation2 + $0xc8] sm:$0x1] %v1745
        %v1747 = vld [vmem:[#allocation2 + $0xd4] sm:$0x1]
        %v1748 = vsel %vm1695, 0, %v1747
        %1749 = vst [vmem:[#allocation2 + $0xd4] sm:$0x1] %v1748
        %p1750 = scmp.eq.s32.totalorder %s34, 0
        // Predicated region
        $region69: #{tpu_custom_call.1} parent=55 // pred_check
          %p1751 = pneg %p1750
        $region70: #{tpu_custom_call.1} parent=55 // pred_check_branch
          %1753 = sbr.rel (%p1751) target = $region72
        $region71: #{tpu_custom_call.1} parent=55 // pred_region
          %1754 = vst.msk [vmem:[#allocation2] sm:$0xf] %vm1228, 0
          %1755 = vst.msk [vmem:[#allocation2 + $0x4] sm:$0xf] %vm1228, 0
          %vm1756 = vcmask 253952
          %1757 = vst.msk [vmem:[#allocation2 + $0x8] sm:$0x1] %vm1756, 0
          %1758 = vst.msk [vmem:[%s1633] sm:$0xf] %vm1228, 0
          %1759 = vst.msk [vmem:[%s1633 + $0x4] sm:$0xf] %vm1228, 0
          %1760 = vst.msk [vmem:[%s1633 + $0x8] sm:$0x1] %vm1756, 0
        $region72: #{tpu_custom_call.1} parent=55 // pred_fallthru
          _
        %v1761 = vld [vmem:[#allocation2] sm:$0xf]
        %v1762 = vld [vmem:[#allocation2 + $0x4] sm:$0xf]
        %v1763 = vld [vmem:[#allocation2 + $0xc] sm:$0xf]
        %v1764 = vld [vmem:[#allocation2 + $0x10] sm:$0xf]
        %v1765 = vld [vmem:[#allocation2 + $0x18] sm:$0xf]
        %v1766 = vld [vmem:[#allocation2 + $0x1c] sm:$0xf]
        %v1767 = vld [vmem:[#allocation2 + $0x24] sm:$0xf]
        %v1768 = vld [vmem:[#allocation2 + $0x28] sm:$0xf]
        %v1769 = vld [vmem:[#allocation2 + $0x30] sm:$0xf]
        %v1770 = vld [vmem:[#allocation2 + $0x34] sm:$0xf]
        %v1771 = vld [vmem:[#allocation2 + $0x3c] sm:$0xf]
        %v1772 = vld [vmem:[#allocation2 + $0x40] sm:$0xf]
        %v1773 = vld [vmem:[#allocation2 + $0x48] sm:$0xf]
        %v1774 = vld [vmem:[#allocation2 + $0x4c] sm:$0xf]
        %v1775 = vld [vmem:[#allocation2 + $0x54] sm:$0xf]
        %v1776 = vld [vmem:[#allocation2 + $0x58] sm:$0xf]
        %v1777 = vld [vmem:[#allocation2 + $0x60] sm:$0xf]
        %v1778 = vld [vmem:[#allocation2 + $0x64] sm:$0xf]
        %v1779 = vld [vmem:[#allocation2 + $0x6c] sm:$0xf]
        %v1780 = vld [vmem:[#allocation2 + $0x70] sm:$0xf]
        %v1781 = vld [vmem:[#allocation2 + $0x78] sm:$0xf]
        %v1782 = vld [vmem:[#allocation2 + $0x7c] sm:$0xf]
        %v1783 = vld [vmem:[#allocation2 + $0x84] sm:$0xf]
        %v1784 = vld [vmem:[#allocation2 + $0x88] sm:$0xf]
        %v1785 = vld [vmem:[#allocation2 + $0x90] sm:$0xf]
        %v1786 = vld [vmem:[#allocation2 + $0x94] sm:$0xf]
        %v1787 = vld [vmem:[#allocation2 + $0x9c] sm:$0xf]
        %v1788 = vld [vmem:[#allocation2 + $0xa0] sm:$0xf]
        %v1789 = vld [vmem:[#allocation2 + $0xa8] sm:$0xf]
        %v1790 = vld [vmem:[#allocation2 + $0xac] sm:$0xf]
        %v1791 = vld [vmem:[#allocation2 + $0xb4] sm:$0xf]
        %v1792 = vld [vmem:[#allocation2 + $0xb8] sm:$0xf]
        %v1793 = vld [vmem:[#allocation2 + $0x8] sm:$0x1]
        %v1794 = vld [vmem:[#allocation2 + $0x14] sm:$0x1]
        %v1795 = vld [vmem:[#allocation2 + $0x20] sm:$0x1]
        %v1796 = vld [vmem:[#allocation2 + $0x2c] sm:$0x1]
        %v1797 = vld [vmem:[#allocation2 + $0x38] sm:$0x1]
        %v1798 = vld [vmem:[#allocation2 + $0x44] sm:$0x1]
        %v1799 = vld [vmem:[#allocation2 + $0x50] sm:$0x1]
        %v1800 = vld [vmem:[#allocation2 + $0x5c] sm:$0x1]
        %v1801 = vld [vmem:[#allocation2 + $0x68] sm:$0x1]
        %v1802 = vld [vmem:[#allocation2 + $0x74] sm:$0x1]
        %v1803 = vld [vmem:[#allocation2 + $0x80] sm:$0x1]
        %v1804 = vld [vmem:[#allocation2 + $0x8c] sm:$0x1]
        %v1805 = vld [vmem:[#allocation2 + $0x98] sm:$0x1]
        %v1806 = vld [vmem:[#allocation2 + $0xa4] sm:$0x1]
        %v1807 = vld [vmem:[#allocation2 + $0xb0] sm:$0x1]
        %v1808 = vld [vmem:[#allocation2 + $0xbc] sm:$0x1]
        %vm1809 = vsmask.f32 3328
        %vm1810 = vsmask.f32 7440
        %vm1811 = vmor %vm1809, %vm1810
        %v1813 = vshrl.u32 %v1761, 16
        %v1815 = vrot.slane %v1813, 4
        %v1816 = vshll.u32 %v1761, 16
        %v1818 = vrot.slane %v1816, 5
        %v1819 = vor.u32 %v1815, %v1818
        %v1820 = vrot.slane %v1819, 4
        %v1822 = vshll.u32 %v1762, 16
        %v1824 = vrot.slane %v1822, 5
        %v1825 = vsel %vm1811, %v1820, %v1824
        %v1826 = vshrl.u32 %v1762, 16
        %v1828 = vrot.slane %v1826, 4
        %v1829 = vor.u32 %v1828, %v1824
        %v1830 = vrot.slane %v1829, 4
        %v1832 = vshll.u32 %v1793, 16
        %v1834 = vrot.slane %v1832, 5
        %v1835 = vsel %vm1811, %v1830, %v1834
        %v1837 = vshrl.u32 %v1763, 16
        %v1839 = vrot.slane %v1837, 4
        %v1840 = vshll.u32 %v1763, 16
        %v1842 = vrot.slane %v1840, 5
        %v1843 = vor.u32 %v1839, %v1842
        %v1844 = vrot.slane %v1843, 4
        %v1846 = vshll.u32 %v1764, 16
        %v1848 = vrot.slane %v1846, 5
        %v1849 = vsel %vm1811, %v1844, %v1848
        %v1850 = vshrl.u32 %v1764, 16
        %v1852 = vrot.slane %v1850, 4
        %v1853 = vor.u32 %v1852, %v1848
        %v1854 = vrot.slane %v1853, 4
        %v1856 = vshll.u32 %v1794, 16
        %v1858 = vrot.slane %v1856, 5
        %v1859 = vsel %vm1811, %v1854, %v1858
        %v1861 = vshrl.u32 %v1765, 16
        %v1863 = vrot.slane %v1861, 4
        %v1864 = vshll.u32 %v1765, 16
        %v1866 = vrot.slane %v1864, 5
        %v1867 = vor.u32 %v1863, %v1866
        %v1868 = vrot.slane %v1867, 4
        %v1870 = vshll.u32 %v1766, 16
        %v1872 = vrot.slane %v1870, 5
        %v1873 = vsel %vm1811, %v1868, %v1872
        %v1874 = vshrl.u32 %v1766, 16
        %v1876 = vrot.slane %v1874, 4
        %v1877 = vor.u32 %v1876, %v1872
        %v1878 = vrot.slane %v1877, 4
        %v1880 = vshll.u32 %v1795, 16
        %v1882 = vrot.slane %v1880, 5
        %v1883 = vsel %vm1811, %v1878, %v1882
        %v1885 = vshrl.u32 %v1767, 16
        %v1887 = vrot.slane %v1885, 4
        %v1888 = vshll.u32 %v1767, 16
        %v1890 = vrot.slane %v1888, 5
        %v1891 = vor.u32 %v1887, %v1890
        %v1892 = vrot.slane %v1891, 4
        %v1894 = vshll.u32 %v1768, 16
        %v1896 = vrot.slane %v1894, 5
        %v1897 = vsel %vm1811, %v1892, %v1896
        %v1898 = vshrl.u32 %v1768, 16
        %v1900 = vrot.slane %v1898, 4
        %v1901 = vor.u32 %v1900, %v1896
        %v1902 = vrot.slane %v1901, 4
        %v1904 = vshll.u32 %v1796, 16
        %v1906 = vrot.slane %v1904, 5
        %v1907 = vsel %vm1811, %v1902, %v1906
        %v1909 = vshrl.u32 %v1769, 16
        %v1911 = vrot.slane %v1909, 4
        %v1912 = vshll.u32 %v1769, 16
        %v1914 = vrot.slane %v1912, 5
        %v1915 = vor.u32 %v1911, %v1914
        %v1916 = vrot.slane %v1915, 4
        %v1918 = vshll.u32 %v1770, 16
        %v1920 = vrot.slane %v1918, 5
        %v1921 = vsel %vm1811, %v1916, %v1920
        %v1922 = vshrl.u32 %v1770, 16
        %v1924 = vrot.slane %v1922, 4
        %v1925 = vor.u32 %v1924, %v1920
        %v1926 = vrot.slane %v1925, 4
        %v1928 = vshll.u32 %v1797, 16
        %v1930 = vrot.slane %v1928, 5
        %v1931 = vsel %vm1811, %v1926, %v1930
        %v1933 = vshrl.u32 %v1771, 16
        %v1935 = vrot.slane %v1933, 4
        %v1936 = vshll.u32 %v1771, 16
        %v1938 = vrot.slane %v1936, 5
        %v1939 = vor.u32 %v1935, %v1938
        %v1940 = vrot.slane %v1939, 4
        %v1942 = vshll.u32 %v1772, 16
        %v1944 = vrot.slane %v1942, 5
        %v1945 = vsel %vm1811, %v1940, %v1944
        %v1946 = vshrl.u32 %v1772, 16
        %v1948 = vrot.slane %v1946, 4
        %v1949 = vor.u32 %v1948, %v1944
        %v1950 = vrot.slane %v1949, 4
        %v1952 = vshll.u32 %v1798, 16
        %v1954 = vrot.slane %v1952, 5
        %v1955 = vsel %vm1811, %v1950, %v1954
        %v1957 = vshrl.u32 %v1773, 16
        %v1959 = vrot.slane %v1957, 4
        %v1960 = vshll.u32 %v1773, 16
        %v1962 = vrot.slane %v1960, 5
        %v1963 = vor.u32 %v1959, %v1962
        %v1964 = vrot.slane %v1963, 4
        %v1966 = vshll.u32 %v1774, 16
        %v1968 = vrot.slane %v1966, 5
        %v1969 = vsel %vm1811, %v1964, %v1968
        %v1970 = vshrl.u32 %v1774, 16
        %v1972 = vrot.slane %v1970, 4
        %v1973 = vor.u32 %v1972, %v1968
        %v1974 = vrot.slane %v1973, 4
        %v1976 = vshll.u32 %v1799, 16
        %v1978 = vrot.slane %v1976, 5
        %v1979 = vsel %vm1811, %v1974, %v1978
        %v1981 = vshrl.u32 %v1775, 16
        %v1983 = vrot.slane %v1981, 4
        %v1984 = vshll.u32 %v1775, 16
        %v1986 = vrot.slane %v1984, 5
        %v1987 = vor.u32 %v1983, %v1986
        %v1988 = vrot.slane %v1987, 4
        %v1990 = vshll.u32 %v1776, 16
        %v1992 = vrot.slane %v1990, 5
        %v1993 = vsel %vm1811, %v1988, %v1992
        %v1994 = vshrl.u32 %v1776, 16
        %v1996 = vrot.slane %v1994, 4
        %v1997 = vor.u32 %v1996, %v1992
        %v1998 = vrot.slane %v1997, 4
        %v2000 = vshll.u32 %v1800, 16
        %v2002 = vrot.slane %v2000, 5
        %v2003 = vsel %vm1811, %v1998, %v2002
        %v2005 = vshrl.u32 %v1777, 16
        %v2007 = vrot.slane %v2005, 4
        %v2008 = vshll.u32 %v1777, 16
        %v2010 = vrot.slane %v2008, 5
        %v2011 = vor.u32 %v2007, %v2010
        %v2012 = vrot.slane %v2011, 4
        %v2014 = vshll.u32 %v1778, 16
        %v2016 = vrot.slane %v2014, 5
        %v2017 = vsel %vm1811, %v2012, %v2016
        %v2018 = vshrl.u32 %v1778, 16
        %v2020 = vrot.slane %v2018, 4
        %v2021 = vor.u32 %v2020, %v2016
        %v2022 = vrot.slane %v2021, 4
        %v2024 = vshll.u32 %v1801, 16
        %v2026 = vrot.slane %v2024, 5
        %v2027 = vsel %vm1811, %v2022, %v2026
        %v2029 = vshrl.u32 %v1779, 16
        %v2031 = vrot.slane %v2029, 4
        %v2032 = vshll.u32 %v1779, 16
        %v2034 = vrot.slane %v2032, 5
        %v2035 = vor.u32 %v2031, %v2034
        %v2036 = vrot.slane %v2035, 4
        %v2038 = vshll.u32 %v1780, 16
        %v2040 = vrot.slane %v2038, 5
        %v2041 = vsel %vm1811, %v2036, %v2040
        %v2042 = vshrl.u32 %v1780, 16
        %v2044 = vrot.slane %v2042, 4
        %v2045 = vor.u32 %v2044, %v2040
        %v2046 = vrot.slane %v2045, 4
        %v2048 = vshll.u32 %v1802, 16
        %v2050 = vrot.slane %v2048, 5
        %v2051 = vsel %vm1811, %v2046, %v2050
        %v2053 = vshrl.u32 %v1781, 16
        %v2055 = vrot.slane %v2053, 4
        %v2056 = vshll.u32 %v1781, 16
        %v2058 = vrot.slane %v2056, 5
        %v2059 = vor.u32 %v2055, %v2058
        %v2060 = vrot.slane %v2059, 4
        %v2062 = vshll.u32 %v1782, 16
        %v2064 = vrot.slane %v2062, 5
        %v2065 = vsel %vm1811, %v2060, %v2064
        %v2066 = vshrl.u32 %v1782, 16
        %v2068 = vrot.slane %v2066, 4
        %v2069 = vor.u32 %v2068, %v2064
        %v2070 = vrot.slane %v2069, 4
        %v2072 = vshll.u32 %v1803, 16
        %v2074 = vrot.slane %v2072, 5
        %v2075 = vsel %vm1811, %v2070, %v2074
        %v2077 = vshrl.u32 %v1783, 16
        %v2079 = vrot.slane %v2077, 4
        %v2080 = vshll.u32 %v1783, 16
        %v2082 = vrot.slane %v2080, 5
        %v2083 = vor.u32 %v2079, %v2082
        %v2084 = vrot.slane %v2083, 4
        %v2086 = vshll.u32 %v1784, 16
        %v2088 = vrot.slane %v2086, 5
        %v2089 = vsel %vm1811, %v2084, %v2088
        %v2090 = vshrl.u32 %v1784, 16
        %v2092 = vrot.slane %v2090, 4
        %v2093 = vor.u32 %v2092, %v2088
        %v2094 = vrot.slane %v2093, 4
        %v2096 = vshll.u32 %v1804, 16
        %v2098 = vrot.slane %v2096, 5
        %v2099 = vsel %vm1811, %v2094, %v2098
        %v2101 = vshrl.u32 %v1785, 16
        %v2103 = vrot.slane %v2101, 4
        %v2104 = vshll.u32 %v1785, 16
        %v2106 = vrot.slane %v2104, 5
        %v2107 = vor.u32 %v2103, %v2106
        %v2108 = vrot.slane %v2107, 4
        %v2110 = vshll.u32 %v1786, 16
        %v2112 = vrot.slane %v2110, 5
        %v2113 = vsel %vm1811, %v2108, %v2112
        %v2114 = vshrl.u32 %v1786, 16
        %v2116 = vrot.slane %v2114, 4
        %v2117 = vor.u32 %v2116, %v2112
        %v2118 = vrot.slane %v2117, 4
        %v2120 = vshll.u32 %v1805, 16
        %v2122 = vrot.slane %v2120, 5
        %v2123 = vsel %vm1811, %v2118, %v2122
        %v2125 = vshrl.u32 %v1787, 16
        %v2127 = vrot.slane %v2125, 4
        %v2128 = vshll.u32 %v1787, 16
        %v2130 = vrot.slane %v2128, 5
        %v2131 = vor.u32 %v2127, %v2130
        %v2132 = vrot.slane %v2131, 4
        %v2134 = vshll.u32 %v1788, 16
        %v2136 = vrot.slane %v2134, 5
        %v2137 = vsel %vm1811, %v2132, %v2136
        %v2138 = vshrl.u32 %v1788, 16
        %v2140 = vrot.slane %v2138, 4
        %v2141 = vor.u32 %v2140, %v2136
        %v2142 = vrot.slane %v2141, 4
        %v2144 = vshll.u32 %v1806, 16
        %v2146 = vrot.slane %v2144, 5
        %v2147 = vsel %vm1811, %v2142, %v2146
        %v2149 = vshrl.u32 %v1789, 16
        %v2151 = vrot.slane %v2149, 4
        %v2152 = vshll.u32 %v1789, 16
        %v2154 = vrot.slane %v2152, 5
        %v2155 = vor.u32 %v2151, %v2154
        %v2156 = vrot.slane %v2155, 4
        %v2158 = vshll.u32 %v1790, 16
        %v2160 = vrot.slane %v2158, 5
        %v2161 = vsel %vm1811, %v2156, %v2160
        %v2162 = vshrl.u32 %v1790, 16
        %v2164 = vrot.slane %v2162, 4
        %v2165 = vor.u32 %v2164, %v2160
        %v2166 = vrot.slane %v2165, 4
        %v2168 = vshll.u32 %v1807, 16
        %v2170 = vrot.slane %v2168, 5
        %v2171 = vsel %vm1811, %v2166, %v2170
        %v2173 = vshrl.u32 %v1791, 16
        %v2175 = vrot.slane %v2173, 4
        %v2176 = vshll.u32 %v1791, 16
        %v2178 = vrot.slane %v2176, 5
        %v2179 = vor.u32 %v2175, %v2178
        %v2180 = vrot.slane %v2179, 4
        %v2182 = vshll.u32 %v1792, 16
        %v2184 = vrot.slane %v2182, 5
        %v2185 = vsel %vm1811, %v2180, %v2184
        %v2186 = vshrl.u32 %v1792, 16
        %v2188 = vrot.slane %v2186, 4
        %v2189 = vor.u32 %v2188, %v2184
        %v2190 = vrot.slane %v2189, 4
        %v2192 = vshll.u32 %v1808, 16
        %v2194 = vrot.slane %v2192, 5
        %v2195 = vsel %vm1811, %v2190, %v2194
        %v2196 = vld [vmem:[#allocation2] sm:$0xe]
        %v2197 = vld [vmem:[#allocation2 + $0xc] sm:$0xe]
        %v2198 = vld [vmem:[#allocation2 + $0x18] sm:$0xe]
        %v2199 = vld [vmem:[#allocation2 + $0x24] sm:$0xe]
        %v2200 = vld [vmem:[#allocation2 + $0x30] sm:$0xe]
        %v2201 = vld [vmem:[#allocation2 + $0x3c] sm:$0xe]
        %v2202 = vld [vmem:[#allocation2 + $0x48] sm:$0xe]
        %v2203 = vld [vmem:[#allocation2 + $0x54] sm:$0xe]
        %v2204 = vld [vmem:[#allocation2 + $0x60] sm:$0xe]
        %v2205 = vld [vmem:[#allocation2 + $0x6c] sm:$0xe]
        %v2206 = vld [vmem:[#allocation2 + $0x78] sm:$0xe]
        %v2207 = vld [vmem:[#allocation2 + $0x84] sm:$0xe]
        %v2208 = vld [vmem:[#allocation2 + $0x90] sm:$0xe]
        %v2209 = vld [vmem:[#allocation2 + $0x9c] sm:$0xe]
        %v2210 = vld [vmem:[#allocation2 + $0xa8] sm:$0xe]
        %v2211 = vld [vmem:[#allocation2 + $0xb4] sm:$0xe]
        %vm2260 = vcmask 1042432
        %vm2261 = vcmask 1046532
        %vm2262 = vmor %vm2260, %vm2261
        %v2263 = vrot.slane %v2196, 5
        %v2264 = vrot.slane %v2263, 4
        %v2265 = vrot.slane %v1762, 5
        %v2266 = vsel %vm2262, %v2264, %v2265
        %v2267 = vrot.slane %v2265, 4
        %v2268 = vrot.slane %v1793, 5
        %v2269 = vsel %vm2262, %v2267, %v2268
        %v2270 = vrot.slane %v2197, 5
        %v2271 = vrot.slane %v2270, 4
        %v2272 = vrot.slane %v1764, 5
        %v2273 = vsel %vm2262, %v2271, %v2272
        %v2274 = vrot.slane %v2272, 4
        %v2275 = vrot.slane %v1794, 5
        %v2276 = vsel %vm2262, %v2274, %v2275
        %v2277 = vrot.slane %v2198, 5
        %v2278 = vrot.slane %v2277, 4
        %v2279 = vrot.slane %v1766, 5
        %v2280 = vsel %vm2262, %v2278, %v2279
        %v2281 = vrot.slane %v2279, 4
        %v2282 = vrot.slane %v1795, 5
        %v2283 = vsel %vm2262, %v2281, %v2282
        %v2284 = vrot.slane %v2199, 5
        %v2285 = vrot.slane %v2284, 4
        %v2286 = vrot.slane %v1768, 5
        %v2287 = vsel %vm2262, %v2285, %v2286
        %v2288 = vrot.slane %v2286, 4
        %v2289 = vrot.slane %v1796, 5
        %v2290 = vsel %vm2262, %v2288, %v2289
        %v2291 = vrot.slane %v2200, 5
        %v2292 = vrot.slane %v2291, 4
        %v2293 = vrot.slane %v1770, 5
        %v2294 = vsel %vm2262, %v2292, %v2293
        %v2295 = vrot.slane %v2293, 4
        %v2296 = vrot.slane %v1797, 5
        %v2297 = vsel %vm2262, %v2295, %v2296
        %v2298 = vrot.slane %v2201, 5
        %v2299 = vrot.slane %v2298, 4
        %v2300 = vrot.slane %v1772, 5
        %v2301 = vsel %vm2262, %v2299, %v2300
        %v2302 = vrot.slane %v2300, 4
        %v2303 = vrot.slane %v1798, 5
        %v2304 = vsel %vm2262, %v2302, %v2303
        %v2305 = vrot.slane %v2202, 5
        %v2306 = vrot.slane %v2305, 4
        %v2307 = vrot.slane %v1774, 5
        %v2308 = vsel %vm2262, %v2306, %v2307
        %v2309 = vrot.slane %v2307, 4
        %v2310 = vrot.slane %v1799, 5
        %v2311 = vsel %vm2262, %v2309, %v2310
        %v2312 = vrot.slane %v2203, 5
        %v2313 = vrot.slane %v2312, 4
        %v2314 = vrot.slane %v1776, 5
        %v2315 = vsel %vm2262, %v2313, %v2314
        %v2316 = vrot.slane %v2314, 4
        %v2317 = vrot.slane %v1800, 5
        %v2318 = vsel %vm2262, %v2316, %v2317
        %v2319 = vrot.slane %v2204, 5
        %v2320 = vrot.slane %v2319, 4
        %v2321 = vrot.slane %v1778, 5
        %v2322 = vsel %vm2262, %v2320, %v2321
        %v2323 = vrot.slane %v2321, 4
        %v2324 = vrot.slane %v1801, 5
        %v2325 = vsel %vm2262, %v2323, %v2324
        %v2326 = vrot.slane %v2205, 5
        %v2327 = vrot.slane %v2326, 4
        %v2328 = vrot.slane %v1780, 5
        %v2329 = vsel %vm2262, %v2327, %v2328
        %v2330 = vrot.slane %v2328, 4
        %v2331 = vrot.slane %v1802, 5
        %v2332 = vsel %vm2262, %v2330, %v2331
        %v2333 = vrot.slane %v2206, 5
        %v2334 = vrot.slane %v2333, 4
        %v2335 = vrot.slane %v1782, 5
        %v2336 = vsel %vm2262, %v2334, %v2335
        %v2337 = vrot.slane %v2335, 4
        %v2338 = vrot.slane %v1803, 5
        %v2339 = vsel %vm2262, %v2337, %v2338
        %v2340 = vrot.slane %v2207, 5
        %v2341 = vrot.slane %v2340, 4
        %v2342 = vrot.slane %v1784, 5
        %v2343 = vsel %vm2262, %v2341, %v2342
        %v2344 = vrot.slane %v2342, 4
        %v2345 = vrot.slane %v1804, 5
        %v2346 = vsel %vm2262, %v2344, %v2345
        %v2347 = vrot.slane %v2208, 5
        %v2348 = vrot.slane %v2347, 4
        %v2349 = vrot.slane %v1786, 5
        %v2350 = vsel %vm2262, %v2348, %v2349
        %v2351 = vrot.slane %v2349, 4
        %v2352 = vrot.slane %v1805, 5
        %v2353 = vsel %vm2262, %v2351, %v2352
        %v2354 = vrot.slane %v2209, 5
        %v2355 = vrot.slane %v2354, 4
        %v2356 = vrot.slane %v1788, 5
        %v2357 = vsel %vm2262, %v2355, %v2356
        %v2358 = vrot.slane %v2356, 4
        %v2359 = vrot.slane %v1806, 5
        %v2360 = vsel %vm2262, %v2358, %v2359
        %v2361 = vrot.slane %v2210, 5
        %v2362 = vrot.slane %v2361, 4
        %v2363 = vrot.slane %v1790, 5
        %v2364 = vsel %vm2262, %v2362, %v2363
        %v2365 = vrot.slane %v2363, 4
        %v2366 = vrot.slane %v1807, 5
        %v2367 = vsel %vm2262, %v2365, %v2366
        %v2368 = vrot.slane %v2211, 5
        %v2369 = vrot.slane %v2368, 4
        %v2370 = vrot.slane %v1792, 5
        %v2371 = vsel %vm2262, %v2369, %v2370
        %v2372 = vrot.slane %v2370, 4
        %v2373 = vrot.slane %v1808, 5
        %v2374 = vsel %vm2262, %v2372, %v2373
        %v2375 = vld [vmem:[%s1221] sm:$0xf]
        %v2376 = vld [vmem:[%s1221 + $0x4] sm:$0xf]
        %v2377 = vld [vmem:[%s1221 + $0xc] sm:$0xf]
        %v2378 = vld [vmem:[%s1221 + $0x10] sm:$0xf]
        %v2379 = vld [vmem:[%s1221 + $0x18] sm:$0xf]
        %v2380 = vld [vmem:[%s1221 + $0x1c] sm:$0xf]
        %v2381 = vld [vmem:[%s1221 + $0x24] sm:$0xf]
        %v2382 = vld [vmem:[%s1221 + $0x28] sm:$0xf]
        %v2383 = vld [vmem:[%s1221 + $0x30] sm:$0xf]
        %v2384 = vld [vmem:[%s1221 + $0x34] sm:$0xf]
        %v2385 = vld [vmem:[%s1221 + $0x3c] sm:$0xf]
        %v2386 = vld [vmem:[%s1221 + $0x40] sm:$0xf]
        %v2387 = vld [vmem:[%s1221 + $0x48] sm:$0xf]
        %v2388 = vld [vmem:[%s1221 + $0x4c] sm:$0xf]
        %v2389 = vld [vmem:[%s1221 + $0x54] sm:$0xf]
        %v2390 = vld [vmem:[%s1221 + $0x58] sm:$0xf]
        %v2391 = vld [vmem:[%s1221 + $0x60] sm:$0xf]
        %v2392 = vld [vmem:[%s1221 + $0x64] sm:$0xf]
        %v2393 = vld [vmem:[%s1221 + $0x6c] sm:$0xf]
        %v2394 = vld [vmem:[%s1221 + $0x70] sm:$0xf]
        %v2395 = vld [vmem:[%s1221 + $0x78] sm:$0xf]
        %v2396 = vld [vmem:[%s1221 + $0x7c] sm:$0xf]
        %v2397 = vld [vmem:[%s1221 + $0x84] sm:$0xf]
        %v2398 = vld [vmem:[%s1221 + $0x88] sm:$0xf]
        %v2399 = vld [vmem:[%s1221 + $0x90] sm:$0xf]
        %v2400 = vld [vmem:[%s1221 + $0x94] sm:$0xf]
        %v2401 = vld [vmem:[%s1221 + $0x9c] sm:$0xf]
        %v2402 = vld [vmem:[%s1221 + $0xa0] sm:$0xf]
        %v2403 = vld [vmem:[%s1221 + $0xa8] sm:$0xf]
        %v2404 = vld [vmem:[%s1221 + $0xac] sm:$0xf]
        %v2405 = vld [vmem:[%s1221 + $0xb4] sm:$0xf]
        %v2406 = vld [vmem:[%s1221 + $0xb8] sm:$0xf]
        %v2407 = vld [vmem:[%s1221 + $0x8] sm:$0x1]
        %v2408 = vld [vmem:[%s1221 + $0x14] sm:$0x1]
        %v2409 = vld [vmem:[%s1221 + $0x20] sm:$0x1]
        %v2410 = vld [vmem:[%s1221 + $0x2c] sm:$0x1]
        %v2411 = vld [vmem:[%s1221 + $0x38] sm:$0x1]
        %v2412 = vld [vmem:[%s1221 + $0x44] sm:$0x1]
        %v2413 = vld [vmem:[%s1221 + $0x50] sm:$0x1]
        %v2414 = vld [vmem:[%s1221 + $0x5c] sm:$0x1]
        %v2415 = vld [vmem:[%s1221 + $0x68] sm:$0x1]
        %v2416 = vld [vmem:[%s1221 + $0x74] sm:$0x1]
        %v2417 = vld [vmem:[%s1221 + $0x80] sm:$0x1]
        %v2418 = vld [vmem:[%s1221 + $0x8c] sm:$0x1]
        %v2419 = vld [vmem:[%s1221 + $0x98] sm:$0x1]
        %v2420 = vld [vmem:[%s1221 + $0xa4] sm:$0x1]
        %v2421 = vld [vmem:[%s1221 + $0xb0] sm:$0x1]
        %v2422 = vld [vmem:[%s1221 + $0xbc] sm:$0x1]
        %v2424 = vshrl.u32 %v2375, 16
        %v2426 = vrot.slane %v2424, 4
        %v2427 = vshll.u32 %v2375, 16
        %v2429 = vrot.slane %v2427, 5
        %v2430 = vor.u32 %v2426, %v2429
        %v2431 = vrot.slane %v2430, 4
        %v2433 = vshll.u32 %v2376, 16
        %v2435 = vrot.slane %v2433, 5
        %v2436 = vsel %vm1811, %v2431, %v2435
        %v2437 = vshrl.u32 %v2376, 16
        %v2439 = vrot.slane %v2437, 4
        %v2440 = vor.u32 %v2439, %v2435
        %v2441 = vrot.slane %v2440, 4
        %v2443 = vshll.u32 %v2407, 16
        %v2445 = vrot.slane %v2443, 5
        %v2446 = vsel %vm1811, %v2441, %v2445
        %v2448 = vshrl.u32 %v2377, 16
        %v2450 = vrot.slane %v2448, 4
        %v2451 = vshll.u32 %v2377, 16
        %v2453 = vrot.slane %v2451, 5
        %v2454 = vor.u32 %v2450, %v2453
        %v2455 = vrot.slane %v2454, 4
        %v2457 = vshll.u32 %v2378, 16
        %v2459 = vrot.slane %v2457, 5
        %v2460 = vsel %vm1811, %v2455, %v2459
        %v2461 = vshrl.u32 %v2378, 16
        %v2463 = vrot.slane %v2461, 4
        %v2464 = vor.u32 %v2463, %v2459
        %v2465 = vrot.slane %v2464, 4
        %v2467 = vshll.u32 %v2408, 16
        %v2469 = vrot.slane %v2467, 5
        %v2470 = vsel %vm1811, %v2465, %v2469
        %v2472 = vshrl.u32 %v2379, 16
        %v2474 = vrot.slane %v2472, 4
        %v2475 = vshll.u32 %v2379, 16
        %v2477 = vrot.slane %v2475, 5
        %v2478 = vor.u32 %v2474, %v2477
        %v2479 = vrot.slane %v2478, 4
        %v2481 = vshll.u32 %v2380, 16
        %v2483 = vrot.slane %v2481, 5
        %v2484 = vsel %vm1811, %v2479, %v2483
        %v2485 = vshrl.u32 %v2380, 16
        %v2487 = vrot.slane %v2485, 4
        %v2488 = vor.u32 %v2487, %v2483
        %v2489 = vrot.slane %v2488, 4
        %v2491 = vshll.u32 %v2409, 16
        %v2493 = vrot.slane %v2491, 5
        %v2494 = vsel %vm1811, %v2489, %v2493
        %v2496 = vshrl.u32 %v2381, 16
        %v2498 = vrot.slane %v2496, 4
        %v2499 = vshll.u32 %v2381, 16
        %v2501 = vrot.slane %v2499, 5
        %v2502 = vor.u32 %v2498, %v2501
        %v2503 = vrot.slane %v2502, 4
        %v2505 = vshll.u32 %v2382, 16
        %v2507 = vrot.slane %v2505, 5
        %v2508 = vsel %vm1811, %v2503, %v2507
        %v2509 = vshrl.u32 %v2382, 16
        %v2511 = vrot.slane %v2509, 4
        %v2512 = vor.u32 %v2511, %v2507
        %v2513 = vrot.slane %v2512, 4
        %v2515 = vshll.u32 %v2410, 16
        %v2517 = vrot.slane %v2515, 5
        %v2518 = vsel %vm1811, %v2513, %v2517
        %v2520 = vshrl.u32 %v2383, 16
        %v2522 = vrot.slane %v2520, 4
        %v2523 = vshll.u32 %v2383, 16
        %v2525 = vrot.slane %v2523, 5
        %v2526 = vor.u32 %v2522, %v2525
        %v2527 = vrot.slane %v2526, 4
        %v2529 = vshll.u32 %v2384, 16
        %v2531 = vrot.slane %v2529, 5
        %v2532 = vsel %vm1811, %v2527, %v2531
        %v2533 = vshrl.u32 %v2384, 16
        %v2535 = vrot.slane %v2533, 4
        %v2536 = vor.u32 %v2535, %v2531
        %v2537 = vrot.slane %v2536, 4
        %v2539 = vshll.u32 %v2411, 16
        %v2541 = vrot.slane %v2539, 5
        %v2542 = vsel %vm1811, %v2537, %v2541
        %v2544 = vshrl.u32 %v2385, 16
        %v2546 = vrot.slane %v2544, 4
        %v2547 = vshll.u32 %v2385, 16
        %v2549 = vrot.slane %v2547, 5
        %v2550 = vor.u32 %v2546, %v2549
        %v2551 = vrot.slane %v2550, 4
        %v2553 = vshll.u32 %v2386, 16
        %v2555 = vrot.slane %v2553, 5
        %v2556 = vsel %vm1811, %v2551, %v2555
        %v2557 = vshrl.u32 %v2386, 16
        %v2559 = vrot.slane %v2557, 4
        %v2560 = vor.u32 %v2559, %v2555
        %v2561 = vrot.slane %v2560, 4
        %v2563 = vshll.u32 %v2412, 16
        %v2565 = vrot.slane %v2563, 5
        %v2566 = vsel %vm1811, %v2561, %v2565
        %v2568 = vshrl.u32 %v2387, 16
        %v2570 = vrot.slane %v2568, 4
        %v2571 = vshll.u32 %v2387, 16
        %v2573 = vrot.slane %v2571, 5
        %v2574 = vor.u32 %v2570, %v2573
        %v2575 = vrot.slane %v2574, 4
        %v2577 = vshll.u32 %v2388, 16
        %v2579 = vrot.slane %v2577, 5
        %v2580 = vsel %vm1811, %v2575, %v2579
        %v2581 = vshrl.u32 %v2388, 16
        %v2583 = vrot.slane %v2581, 4
        %v2584 = vor.u32 %v2583, %v2579
        %v2585 = vrot.slane %v2584, 4
        %v2587 = vshll.u32 %v2413, 16
        %v2589 = vrot.slane %v2587, 5
        %v2590 = vsel %vm1811, %v2585, %v2589
        %v2592 = vshrl.u32 %v2389, 16
        %v2594 = vrot.slane %v2592, 4
        %v2595 = vshll.u32 %v2389, 16
        %v2597 = vrot.slane %v2595, 5
        %v2598 = vor.u32 %v2594, %v2597
        %v2599 = vrot.slane %v2598, 4
        %v2601 = vshll.u32 %v2390, 16
        %v2603 = vrot.slane %v2601, 5
        %v2604 = vsel %vm1811, %v2599, %v2603
        %v2605 = vshrl.u32 %v2390, 16
        %v2607 = vrot.slane %v2605, 4
        %v2608 = vor.u32 %v2607, %v2603
        %v2609 = vrot.slane %v2608, 4
        %v2611 = vshll.u32 %v2414, 16
        %v2613 = vrot.slane %v2611, 5
        %v2614 = vsel %vm1811, %v2609, %v2613
        %v2616 = vshrl.u32 %v2391, 16
        %v2618 = vrot.slane %v2616, 4
        %v2619 = vshll.u32 %v2391, 16
        %v2621 = vrot.slane %v2619, 5
        %v2622 = vor.u32 %v2618, %v2621
        %v2623 = vrot.slane %v2622, 4
        %v2625 = vshll.u32 %v2392, 16
        %v2627 = vrot.slane %v2625, 5
        %v2628 = vsel %vm1811, %v2623, %v2627
        %v2629 = vshrl.u32 %v2392, 16
        %v2631 = vrot.slane %v2629, 4
        %v2632 = vor.u32 %v2631, %v2627
        %v2633 = vrot.slane %v2632, 4
        %v2635 = vshll.u32 %v2415, 16
        %v2637 = vrot.slane %v2635, 5
        %v2638 = vsel %vm1811, %v2633, %v2637
        %v2640 = vshrl.u32 %v2393, 16
        %v2642 = vrot.slane %v2640, 4
        %v2643 = vshll.u32 %v2393, 16
        %v2645 = vrot.slane %v2643, 5
        %v2646 = vor.u32 %v2642, %v2645
        %v2647 = vrot.slane %v2646, 4
        %v2649 = vshll.u32 %v2394, 16
        %v2651 = vrot.slane %v2649, 5
        %v2652 = vsel %vm1811, %v2647, %v2651
        %v2653 = vshrl.u32 %v2394, 16
        %v2655 = vrot.slane %v2653, 4
        %v2656 = vor.u32 %v2655, %v2651
        %v2657 = vrot.slane %v2656, 4
        %v2659 = vshll.u32 %v2416, 16
        %v2661 = vrot.slane %v2659, 5
        %v2662 = vsel %vm1811, %v2657, %v2661
        %v2664 = vshrl.u32 %v2395, 16
        %v2666 = vrot.slane %v2664, 4
        %v2667 = vshll.u32 %v2395, 16
        %v2669 = vrot.slane %v2667, 5
        %v2670 = vor.u32 %v2666, %v2669
        %v2671 = vrot.slane %v2670, 4
        %v2673 = vshll.u32 %v2396, 16
        %v2675 = vrot.slane %v2673, 5
        %v2676 = vsel %vm1811, %v2671, %v2675
        %v2677 = vshrl.u32 %v2396, 16
        %v2679 = vrot.slane %v2677, 4
        %v2680 = vor.u32 %v2679, %v2675
        %v2681 = vrot.slane %v2680, 4
        %v2683 = vshll.u32 %v2417, 16
        %v2685 = vrot.slane %v2683, 5
        %v2686 = vsel %vm1811, %v2681, %v2685
        %v2688 = vshrl.u32 %v2397, 16
        %v2690 = vrot.slane %v2688, 4
        %v2691 = vshll.u32 %v2397, 16
        %v2693 = vrot.slane %v2691, 5
        %v2694 = vor.u32 %v2690, %v2693
        %v2695 = vrot.slane %v2694, 4
        %v2697 = vshll.u32 %v2398, 16
        %v2699 = vrot.slane %v2697, 5
        %v2700 = vsel %vm1811, %v2695, %v2699
        %v2701 = vshrl.u32 %v2398, 16
        %v2703 = vrot.slane %v2701, 4
        %v2704 = vor.u32 %v2703, %v2699
        %v2705 = vrot.slane %v2704, 4
        %v2707 = vshll.u32 %v2418, 16
        %v2709 = vrot.slane %v2707, 5
        %v2710 = vsel %vm1811, %v2705, %v2709
        %v2712 = vshrl.u32 %v2399, 16
        %v2714 = vrot.slane %v2712, 4
        %v2715 = vshll.u32 %v2399, 16
        %v2717 = vrot.slane %v2715, 5
        %v2718 = vor.u32 %v2714, %v2717
        %v2719 = vrot.slane %v2718, 4
        %v2721 = vshll.u32 %v2400, 16
        %v2723 = vrot.slane %v2721, 5
        %v2724 = vsel %vm1811, %v2719, %v2723
        %v2725 = vshrl.u32 %v2400, 16
        %v2727 = vrot.slane %v2725, 4
        %v2728 = vor.u32 %v2727, %v2723
        %v2729 = vrot.slane %v2728, 4
        %v2731 = vshll.u32 %v2419, 16
        %v2733 = vrot.slane %v2731, 5
        %v2734 = vsel %vm1811, %v2729, %v2733
        %v2736 = vshrl.u32 %v2401, 16
        %v2738 = vrot.slane %v2736, 4
        %v2739 = vshll.u32 %v2401, 16
        %v2741 = vrot.slane %v2739, 5
        %v2742 = vor.u32 %v2738, %v2741
        %v2743 = vrot.slane %v2742, 4
        %v2745 = vshll.u32 %v2402, 16
        %v2747 = vrot.slane %v2745, 5
        %v2748 = vsel %vm1811, %v2743, %v2747
        %v2749 = vshrl.u32 %v2402, 16
        %v2751 = vrot.slane %v2749, 4
        %v2752 = vor.u32 %v2751, %v2747
        %v2753 = vrot.slane %v2752, 4
        %v2755 = vshll.u32 %v2420, 16
        %v2757 = vrot.slane %v2755, 5
        %v2758 = vsel %vm1811, %v2753, %v2757
        %v2760 = vshrl.u32 %v2403, 16
        %v2762 = vrot.slane %v2760, 4
        %v2763 = vshll.u32 %v2403, 16
        %v2765 = vrot.slane %v2763, 5
        %v2766 = vor.u32 %v2762, %v2765
        %v2767 = vrot.slane %v2766, 4
        %v2769 = vshll.u32 %v2404, 16
        %v2771 = vrot.slane %v2769, 5
        %v2772 = vsel %vm1811, %v2767, %v2771
        %v2773 = vshrl.u32 %v2404, 16
        %v2775 = vrot.slane %v2773, 4
        %v2776 = vor.u32 %v2775, %v2771
        %v2777 = vrot.slane %v2776, 4
        %v2779 = vshll.u32 %v2421, 16
        %v2781 = vrot.slane %v2779, 5
        %v2782 = vsel %vm1811, %v2777, %v2781
        %v2784 = vshrl.u32 %v2405, 16
        %v2786 = vrot.slane %v2784, 4
        %v2787 = vshll.u32 %v2405, 16
        %v2789 = vrot.slane %v2787, 5
        %v2790 = vor.u32 %v2786, %v2789
        %v2791 = vrot.slane %v2790, 4
        %v2793 = vshll.u32 %v2406, 16
        %v2795 = vrot.slane %v2793, 5
        %v2796 = vsel %vm1811, %v2791, %v2795
        %v2797 = vshrl.u32 %v2406, 16
        %v2799 = vrot.slane %v2797, 4
        %v2800 = vor.u32 %v2799, %v2795
        %v2801 = vrot.slane %v2800, 4
        %v2803 = vshll.u32 %v2422, 16
        %v2805 = vrot.slane %v2803, 5
        %v2806 = vsel %vm1811, %v2801, %v2805
        %v2807 = vld [vmem:[%s1221] sm:$0xe]
        %v2808 = vld [vmem:[%s1221 + $0xc] sm:$0xe]
        %v2809 = vld [vmem:[%s1221 + $0x18] sm:$0xe]
        %v2810 = vld [vmem:[%s1221 + $0x24] sm:$0xe]
        %v2811 = vld [vmem:[%s1221 + $0x30] sm:$0xe]
        %v2812 = vld [vmem:[%s1221 + $0x3c] sm:$0xe]
        %v2813 = vld [vmem:[%s1221 + $0x48] sm:$0xe]
        %v2814 = vld [vmem:[%s1221 + $0x54] sm:$0xe]
        %v2815 = vld [vmem:[%s1221 + $0x60] sm:$0xe]
        %v2816 = vld [vmem:[%s1221 + $0x6c] sm:$0xe]
        %v2817 = vld [vmem:[%s1221 + $0x78] sm:$0xe]
        %v2818 = vld [vmem:[%s1221 + $0x84] sm:$0xe]
        %v2819 = vld [vmem:[%s1221 + $0x90] sm:$0xe]
        %v2820 = vld [vmem:[%s1221 + $0x9c] sm:$0xe]
        %v2821 = vld [vmem:[%s1221 + $0xa8] sm:$0xe]
        %v2822 = vld [vmem:[%s1221 + $0xb4] sm:$0xe]
        %v2871 = vrot.slane %v2807, 5
        %v2872 = vrot.slane %v2871, 4
        %v2873 = vrot.slane %v2376, 5
        %v2874 = vsel %vm2262, %v2872, %v2873
        %v2875 = vrot.slane %v2873, 4
        %v2876 = vrot.slane %v2407, 5
        %v2877 = vsel %vm2262, %v2875, %v2876
        %v2878 = vrot.slane %v2808, 5
        %v2879 = vrot.slane %v2878, 4
        %v2880 = vrot.slane %v2378, 5
        %v2881 = vsel %vm2262, %v2879, %v2880
        %v2882 = vrot.slane %v2880, 4
        %v2883 = vrot.slane %v2408, 5
        %v2884 = vsel %vm2262, %v2882, %v2883
        %v2885 = vrot.slane %v2809, 5
        %v2886 = vrot.slane %v2885, 4
        %v2887 = vrot.slane %v2380, 5
        %v2888 = vsel %vm2262, %v2886, %v2887
        %v2889 = vrot.slane %v2887, 4
        %v2890 = vrot.slane %v2409, 5
        %v2891 = vsel %vm2262, %v2889, %v2890
        %v2892 = vrot.slane %v2810, 5
        %v2893 = vrot.slane %v2892, 4
        %v2894 = vrot.slane %v2382, 5
        %v2895 = vsel %vm2262, %v2893, %v2894
        %v2896 = vrot.slane %v2894, 4
        %v2897 = vrot.slane %v2410, 5
        %v2898 = vsel %vm2262, %v2896, %v2897
        %v2899 = vrot.slane %v2811, 5
        %v2900 = vrot.slane %v2899, 4
        %v2901 = vrot.slane %v2384, 5
        %v2902 = vsel %vm2262, %v2900, %v2901
        %v2903 = vrot.slane %v2901, 4
        %v2904 = vrot.slane %v2411, 5
        %v2905 = vsel %vm2262, %v2903, %v2904
        %v2906 = vrot.slane %v2812, 5
        %v2907 = vrot.slane %v2906, 4
        %v2908 = vrot.slane %v2386, 5
        %v2909 = vsel %vm2262, %v2907, %v2908
        %v2910 = vrot.slane %v2908, 4
        %v2911 = vrot.slane %v2412, 5
        %v2912 = vsel %vm2262, %v2910, %v2911
        %v2913 = vrot.slane %v2813, 5
        %v2914 = vrot.slane %v2913, 4
        %v2915 = vrot.slane %v2388, 5
        %v2916 = vsel %vm2262, %v2914, %v2915
        %v2917 = vrot.slane %v2915, 4
        %v2918 = vrot.slane %v2413, 5
        %v2919 = vsel %vm2262, %v2917, %v2918
        %v2920 = vrot.slane %v2814, 5
        %v2921 = vrot.slane %v2920, 4
        %v2922 = vrot.slane %v2390, 5
        %v2923 = vsel %vm2262, %v2921, %v2922
        %v2924 = vrot.slane %v2922, 4
        %v2925 = vrot.slane %v2414, 5
        %v2926 = vsel %vm2262, %v2924, %v2925
        %v2927 = vrot.slane %v2815, 5
        %v2928 = vrot.slane %v2927, 4
        %v2929 = vrot.slane %v2392, 5
        %v2930 = vsel %vm2262, %v2928, %v2929
        %v2931 = vrot.slane %v2929, 4
        %v2932 = vrot.slane %v2415, 5
        %v2933 = vsel %vm2262, %v2931, %v2932
        %v2934 = vrot.slane %v2816, 5
        %v2935 = vrot.slane %v2934, 4
        %v2936 = vrot.slane %v2394, 5
        %v2937 = vsel %vm2262, %v2935, %v2936
        %v2938 = vrot.slane %v2936, 4
        %v2939 = vrot.slane %v2416, 5
        %v2940 = vsel %vm2262, %v2938, %v2939
        %v2941 = vrot.slane %v2817, 5
        %v2942 = vrot.slane %v2941, 4
        %v2943 = vrot.slane %v2396, 5
        %v2944 = vsel %vm2262, %v2942, %v2943
        %v2945 = vrot.slane %v2943, 4
        %v2946 = vrot.slane %v2417, 5
        %v2947 = vsel %vm2262, %v2945, %v2946
        %v2948 = vrot.slane %v2818, 5
        %v2949 = vrot.slane %v2948, 4
        %v2950 = vrot.slane %v2398, 5
        %v2951 = vsel %vm2262, %v2949, %v2950
        %v2952 = vrot.slane %v2950, 4
        %v2953 = vrot.slane %v2418, 5
        %v2954 = vsel %vm2262, %v2952, %v2953
        %v2955 = vrot.slane %v2819, 5
        %v2956 = vrot.slane %v2955, 4
        %v2957 = vrot.slane %v2400, 5
        %v2958 = vsel %vm2262, %v2956, %v2957
        %v2959 = vrot.slane %v2957, 4
        %v2960 = vrot.slane %v2419, 5
        %v2961 = vsel %vm2262, %v2959, %v2960
        %v2962 = vrot.slane %v2820, 5
        %v2963 = vrot.slane %v2962, 4
        %v2964 = vrot.slane %v2402, 5
        %v2965 = vsel %vm2262, %v2963, %v2964
        %v2966 = vrot.slane %v2964, 4
        %v2967 = vrot.slane %v2420, 5
        %v2968 = vsel %vm2262, %v2966, %v2967
        %v2969 = vrot.slane %v2821, 5
        %v2970 = vrot.slane %v2969, 4
        %v2971 = vrot.slane %v2404, 5
        %v2972 = vsel %vm2262, %v2970, %v2971
        %v2973 = vrot.slane %v2971, 4
        %v2974 = vrot.slane %v2421, 5
        %v2975 = vsel %vm2262, %v2973, %v2974
        %v2976 = vrot.slane %v2822, 5
        %v2977 = vrot.slane %v2976, 4
        %v2978 = vrot.slane %v2406, 5
        %v2979 = vsel %vm2262, %v2977, %v2978
        %v2980 = vrot.slane %v2978, 4
        %v2981 = vrot.slane %v2422, 5
        %v2982 = vsel %vm2262, %v2980, %v2981
        %s2983 = scalar_lea.vmem [#allocation2], 24
        %v2984 = vld [vmem:[%s2983] sm:$0xf]
        %v2985 = vld [vmem:[%s2983 + $0x4] sm:$0xf]
        %v2986 = vld [vmem:[%s2983 + $0xc] sm:$0xf]
        %v2987 = vld [vmem:[%s2983 + $0x10] sm:$0xf]
        %v2988 = vld [vmem:[%s2983 + $0x18] sm:$0xf]
        %v2989 = vld [vmem:[%s2983 + $0x1c] sm:$0xf]
        %v2990 = vld [vmem:[%s2983 + $0x24] sm:$0xf]
        %v2991 = vld [vmem:[%s2983 + $0x28] sm:$0xf]
        %v2992 = vld [vmem:[%s2983 + $0x30] sm:$0xf]
        %v2993 = vld [vmem:[%s2983 + $0x34] sm:$0xf]
        %v2994 = vld [vmem:[%s2983 + $0x3c] sm:$0xf]
        %v2995 = vld [vmem:[%s2983 + $0x40] sm:$0xf]
        %v2996 = vld [vmem:[%s2983 + $0x48] sm:$0xf]
        %v2997 = vld [vmem:[%s2983 + $0x4c] sm:$0xf]
        %v2998 = vld [vmem:[%s2983 + $0x54] sm:$0xf]
        %v2999 = vld [vmem:[%s2983 + $0x58] sm:$0xf]
        %v3000 = vld [vmem:[%s2983 + $0x60] sm:$0xf]
        %v3001 = vld [vmem:[%s2983 + $0x64] sm:$0xf]
        %v3002 = vld [vmem:[%s2983 + $0x6c] sm:$0xf]
        %v3003 = vld [vmem:[%s2983 + $0x70] sm:$0xf]
        %v3004 = vld [vmem:[%s2983 + $0x78] sm:$0xf]
        %v3005 = vld [vmem:[%s2983 + $0x7c] sm:$0xf]
        %v3006 = vld [vmem:[%s2983 + $0x84] sm:$0xf]
        %v3007 = vld [vmem:[%s2983 + $0x88] sm:$0xf]
        %v3008 = vld [vmem:[%s2983 + $0x90] sm:$0xf]
        %v3009 = vld [vmem:[%s2983 + $0x94] sm:$0xf]
        %v3010 = vld [vmem:[%s2983 + $0x9c] sm:$0xf]
        %v3011 = vld [vmem:[%s2983 + $0xa0] sm:$0xf]
        %v3012 = vld [vmem:[%s2983 + $0xa8] sm:$0xf]
        %v3013 = vld [vmem:[%s2983 + $0xac] sm:$0xf]
        %v3014 = vld [vmem:[%s2983 + $0xb4] sm:$0xf]
        %v3015 = vld [vmem:[%s2983 + $0xb8] sm:$0xf]
        %v3016 = vld [vmem:[%s2983 + $0x8] sm:$0x1]
        %v3017 = vld [vmem:[%s2983 + $0x14] sm:$0x1]
        %v3018 = vld [vmem:[%s2983 + $0x20] sm:$0x1]
        %v3019 = vld [vmem:[%s2983 + $0x2c] sm:$0x1]
        %v3020 = vld [vmem:[%s2983 + $0x38] sm:$0x1]
        %v3021 = vld [vmem:[%s2983 + $0x44] sm:$0x1]
        %v3022 = vld [vmem:[%s2983 + $0x50] sm:$0x1]
        %v3023 = vld [vmem:[%s2983 + $0x5c] sm:$0x1]
        %v3024 = vld [vmem:[%s2983 + $0x68] sm:$0x1]
        %v3025 = vld [vmem:[%s2983 + $0x74] sm:$0x1]
        %v3026 = vld [vmem:[%s2983 + $0x80] sm:$0x1]
        %v3027 = vld [vmem:[%s2983 + $0x8c] sm:$0x1]
        %v3028 = vld [vmem:[%s2983 + $0x98] sm:$0x1]
        %v3029 = vld [vmem:[%s2983 + $0xa4] sm:$0x1]
        %v3030 = vld [vmem:[%s2983 + $0xb0] sm:$0x1]
        %v3031 = vld [vmem:[%s2983 + $0xbc] sm:$0x1]
        %v3033 = vshrl.u32 %v2984, 16
        %v3035 = vrot.slane %v3033, 4
        %v3036 = vshll.u32 %v2984, 16
        %v3038 = vrot.slane %v3036, 5
        %v3039 = vor.u32 %v3035, %v3038
        %v3040 = vrot.slane %v3039, 4
        %v3042 = vshll.u32 %v2985, 16
        %v3044 = vrot.slane %v3042, 5
        %v3045 = vsel %vm1811, %v3040, %v3044
        %v3046 = vshrl.u32 %v2985, 16
        %v3048 = vrot.slane %v3046, 4
        %v3049 = vor.u32 %v3048, %v3044
        %v3050 = vrot.slane %v3049, 4
        %v3052 = vshll.u32 %v3016, 16
        %v3054 = vrot.slane %v3052, 5
        %v3055 = vsel %vm1811, %v3050, %v3054
        %v3057 = vshrl.u32 %v2986, 16
        %v3059 = vrot.slane %v3057, 4
        %v3060 = vshll.u32 %v2986, 16
        %v3062 = vrot.slane %v3060, 5
        %v3063 = vor.u32 %v3059, %v3062
        %v3064 = vrot.slane %v3063, 4
        %v3066 = vshll.u32 %v2987, 16
        %v3068 = vrot.slane %v3066, 5
        %v3069 = vsel %vm1811, %v3064, %v3068
        %v3070 = vshrl.u32 %v2987, 16
        %v3072 = vrot.slane %v3070, 4
        %v3073 = vor.u32 %v3072, %v3068
        %v3074 = vrot.slane %v3073, 4
        %v3076 = vshll.u32 %v3017, 16
        %v3078 = vrot.slane %v3076, 5
        %v3079 = vsel %vm1811, %v3074, %v3078
        %v3081 = vshrl.u32 %v2988, 16
        %v3083 = vrot.slane %v3081, 4
        %v3084 = vshll.u32 %v2988, 16
        %v3086 = vrot.slane %v3084, 5
        %v3087 = vor.u32 %v3083, %v3086
        %v3088 = vrot.slane %v3087, 4
        %v3090 = vshll.u32 %v2989, 16
        %v3092 = vrot.slane %v3090, 5
        %v3093 = vsel %vm1811, %v3088, %v3092
        %v3094 = vshrl.u32 %v2989, 16
        %v3096 = vrot.slane %v3094, 4
        %v3097 = vor.u32 %v3096, %v3092
        %v3098 = vrot.slane %v3097, 4
        %v3100 = vshll.u32 %v3018, 16
        %v3102 = vrot.slane %v3100, 5
        %v3103 = vsel %vm1811, %v3098, %v3102
        %v3105 = vshrl.u32 %v2990, 16
        %v3107 = vrot.slane %v3105, 4
        %v3108 = vshll.u32 %v2990, 16
        %v3110 = vrot.slane %v3108, 5
        %v3111 = vor.u32 %v3107, %v3110
        %v3112 = vrot.slane %v3111, 4
        %v3114 = vshll.u32 %v2991, 16
        %v3116 = vrot.slane %v3114, 5
        %v3117 = vsel %vm1811, %v3112, %v3116
        %v3118 = vshrl.u32 %v2991, 16
        %v3120 = vrot.slane %v3118, 4
        %v3121 = vor.u32 %v3120, %v3116
        %v3122 = vrot.slane %v3121, 4
        %v3124 = vshll.u32 %v3019, 16
        %v3126 = vrot.slane %v3124, 5
        %v3127 = vsel %vm1811, %v3122, %v3126
        %v3129 = vshrl.u32 %v2992, 16
        %v3131 = vrot.slane %v3129, 4
        %v3132 = vshll.u32 %v2992, 16
        %v3134 = vrot.slane %v3132, 5
        %v3135 = vor.u32 %v3131, %v3134
        %v3136 = vrot.slane %v3135, 4
        %v3138 = vshll.u32 %v2993, 16
        %v3140 = vrot.slane %v3138, 5
        %v3141 = vsel %vm1811, %v3136, %v3140
        %v3142 = vshrl.u32 %v2993, 16
        %v3144 = vrot.slane %v3142, 4
        %v3145 = vor.u32 %v3144, %v3140
        %v3146 = vrot.slane %v3145, 4
        %v3148 = vshll.u32 %v3020, 16
        %v3150 = vrot.slane %v3148, 5
        %v3151 = vsel %vm1811, %v3146, %v3150
        %v3153 = vshrl.u32 %v2994, 16
        %v3155 = vrot.slane %v3153, 4
        %v3156 = vshll.u32 %v2994, 16
        %v3158 = vrot.slane %v3156, 5
        %v3159 = vor.u32 %v3155, %v3158
        %v3160 = vrot.slane %v3159, 4
        %v3162 = vshll.u32 %v2995, 16
        %v3164 = vrot.slane %v3162, 5
        %v3165 = vsel %vm1811, %v3160, %v3164
        %v3166 = vshrl.u32 %v2995, 16
        %v3168 = vrot.slane %v3166, 4
        %v3169 = vor.u32 %v3168, %v3164
        %v3170 = vrot.slane %v3169, 4
        %v3172 = vshll.u32 %v3021, 16
        %v3174 = vrot.slane %v3172, 5
        %v3175 = vsel %vm1811, %v3170, %v3174
        %v3177 = vshrl.u32 %v2996, 16
        %v3179 = vrot.slane %v3177, 4
        %v3180 = vshll.u32 %v2996, 16
        %v3182 = vrot.slane %v3180, 5
        %v3183 = vor.u32 %v3179, %v3182
        %v3184 = vrot.slane %v3183, 4
        %v3186 = vshll.u32 %v2997, 16
        %v3188 = vrot.slane %v3186, 5
        %v3189 = vsel %vm1811, %v3184, %v3188
        %v3190 = vshrl.u32 %v2997, 16
        %v3192 = vrot.slane %v3190, 4
        %v3193 = vor.u32 %v3192, %v3188
        %v3194 = vrot.slane %v3193, 4
        %v3196 = vshll.u32 %v3022, 16
        %v3198 = vrot.slane %v3196, 5
        %v3199 = vsel %vm1811, %v3194, %v3198
        %v3201 = vshrl.u32 %v2998, 16
        %v3203 = vrot.slane %v3201, 4
        %v3204 = vshll.u32 %v2998, 16
        %v3206 = vrot.slane %v3204, 5
        %v3207 = vor.u32 %v3203, %v3206
        %v3208 = vrot.slane %v3207, 4
        %v3210 = vshll.u32 %v2999, 16
        %v3212 = vrot.slane %v3210, 5
        %v3213 = vsel %vm1811, %v3208, %v3212
        %v3214 = vshrl.u32 %v2999, 16
        %v3216 = vrot.slane %v3214, 4
        %v3217 = vor.u32 %v3216, %v3212
        %v3218 = vrot.slane %v3217, 4
        %v3220 = vshll.u32 %v3023, 16
        %v3222 = vrot.slane %v3220, 5
        %v3223 = vsel %vm1811, %v3218, %v3222
        %v3225 = vshrl.u32 %v3000, 16
        %v3227 = vrot.slane %v3225, 4
        %v3228 = vshll.u32 %v3000, 16
        %v3230 = vrot.slane %v3228, 5
        %v3231 = vor.u32 %v3227, %v3230
        %v3232 = vrot.slane %v3231, 4
        %v3234 = vshll.u32 %v3001, 16
        %v3236 = vrot.slane %v3234, 5
        %v3237 = vsel %vm1811, %v3232, %v3236
        %v3238 = vshrl.u32 %v3001, 16
        %v3240 = vrot.slane %v3238, 4
        %v3241 = vor.u32 %v3240, %v3236
        %v3242 = vrot.slane %v3241, 4
        %v3244 = vshll.u32 %v3024, 16
        %v3246 = vrot.slane %v3244, 5
        %v3247 = vsel %vm1811, %v3242, %v3246
        %v3249 = vshrl.u32 %v3002, 16
        %v3251 = vrot.slane %v3249, 4
        %v3252 = vshll.u32 %v3002, 16
        %v3254 = vrot.slane %v3252, 5
        %v3255 = vor.u32 %v3251, %v3254
        %v3256 = vrot.slane %v3255, 4
        %v3258 = vshll.u32 %v3003, 16
        %v3260 = vrot.slane %v3258, 5
        %v3261 = vsel %vm1811, %v3256, %v3260
        %v3262 = vshrl.u32 %v3003, 16
        %v3264 = vrot.slane %v3262, 4
        %v3265 = vor.u32 %v3264, %v3260
        %v3266 = vrot.slane %v3265, 4
        %v3268 = vshll.u32 %v3025, 16
        %v3270 = vrot.slane %v3268, 5
        %v3271 = vsel %vm1811, %v3266, %v3270
        %v3273 = vshrl.u32 %v3004, 16
        %v3275 = vrot.slane %v3273, 4
        %v3276 = vshll.u32 %v3004, 16
        %v3278 = vrot.slane %v3276, 5
        %v3279 = vor.u32 %v3275, %v3278
        %v3280 = vrot.slane %v3279, 4
        %v3282 = vshll.u32 %v3005, 16
        %v3284 = vrot.slane %v3282, 5
        %v3285 = vsel %vm1811, %v3280, %v3284
        %v3286 = vshrl.u32 %v3005, 16
        %v3288 = vrot.slane %v3286, 4
        %v3289 = vor.u32 %v3288, %v3284
        %v3290 = vrot.slane %v3289, 4
        %v3292 = vshll.u32 %v3026, 16
        %v3294 = vrot.slane %v3292, 5
        %v3295 = vsel %vm1811, %v3290, %v3294
        %v3297 = vshrl.u32 %v3006, 16
        %v3299 = vrot.slane %v3297, 4
        %v3300 = vshll.u32 %v3006, 16
        %v3302 = vrot.slane %v3300, 5
        %v3303 = vor.u32 %v3299, %v3302
        %v3304 = vrot.slane %v3303, 4
        %v3306 = vshll.u32 %v3007, 16
        %v3308 = vrot.slane %v3306, 5
        %v3309 = vsel %vm1811, %v3304, %v3308
        %v3310 = vshrl.u32 %v3007, 16
        %v3312 = vrot.slane %v3310, 4
        %v3313 = vor.u32 %v3312, %v3308
        %v3314 = vrot.slane %v3313, 4
        %v3316 = vshll.u32 %v3027, 16
        %v3318 = vrot.slane %v3316, 5
        %v3319 = vsel %vm1811, %v3314, %v3318
        %v3321 = vshrl.u32 %v3008, 16
        %v3323 = vrot.slane %v3321, 4
        %v3324 = vshll.u32 %v3008, 16
        %v3326 = vrot.slane %v3324, 5
        %v3327 = vor.u32 %v3323, %v3326
        %v3328 = vrot.slane %v3327, 4
        %v3330 = vshll.u32 %v3009, 16
        %v3332 = vrot.slane %v3330, 5
        %v3333 = vsel %vm1811, %v3328, %v3332
        %v3334 = vshrl.u32 %v3009, 16
        %v3336 = vrot.slane %v3334, 4
        %v3337 = vor.u32 %v3336, %v3332
        %v3338 = vrot.slane %v3337, 4
        %v3340 = vshll.u32 %v3028, 16
        %v3342 = vrot.slane %v3340, 5
        %v3343 = vsel %vm1811, %v3338, %v3342
        %v3345 = vshrl.u32 %v3010, 16
        %v3347 = vrot.slane %v3345, 4
        %v3348 = vshll.u32 %v3010, 16
        %v3350 = vrot.slane %v3348, 5
        %v3351 = vor.u32 %v3347, %v3350
        %v3352 = vrot.slane %v3351, 4
        %v3354 = vshll.u32 %v3011, 16
        %v3356 = vrot.slane %v3354, 5
        %v3357 = vsel %vm1811, %v3352, %v3356
        %v3358 = vshrl.u32 %v3011, 16
        %v3360 = vrot.slane %v3358, 4
        %v3361 = vor.u32 %v3360, %v3356
        %v3362 = vrot.slane %v3361, 4
        %v3364 = vshll.u32 %v3029, 16
        %v3366 = vrot.slane %v3364, 5
        %v3367 = vsel %vm1811, %v3362, %v3366
        %v3369 = vshrl.u32 %v3012, 16
        %v3371 = vrot.slane %v3369, 4
        %v3372 = vshll.u32 %v3012, 16
        %v3374 = vrot.slane %v3372, 5
        %v3375 = vor.u32 %v3371, %v3374
        %v3376 = vrot.slane %v3375, 4
        %v3378 = vshll.u32 %v3013, 16
        %v3380 = vrot.slane %v3378, 5
        %v3381 = vsel %vm1811, %v3376, %v3380
        %v3382 = vshrl.u32 %v3013, 16
        %v3384 = vrot.slane %v3382, 4
        %v3385 = vor.u32 %v3384, %v3380
        %v3386 = vrot.slane %v3385, 4
        %v3388 = vshll.u32 %v3030, 16
        %v3390 = vrot.slane %v3388, 5
        %v3391 = vsel %vm1811, %v3386, %v3390
        %v3393 = vshrl.u32 %v3014, 16
        %v3395 = vrot.slane %v3393, 4
        %v3396 = vshll.u32 %v3014, 16
        %v3398 = vrot.slane %v3396, 5
        %v3399 = vor.u32 %v3395, %v3398
        %v3400 = vrot.slane %v3399, 4
        %v3402 = vshll.u32 %v3015, 16
        %v3404 = vrot.slane %v3402, 5
        %v3405 = vsel %vm1811, %v3400, %v3404
        %v3406 = vshrl.u32 %v3015, 16
        %v3408 = vrot.slane %v3406, 4
        %v3409 = vor.u32 %v3408, %v3404
        %v3410 = vrot.slane %v3409, 4
        %v3412 = vshll.u32 %v3031, 16
        %v3414 = vrot.slane %v3412, 5
        %v3415 = vsel %vm1811, %v3410, %v3414
        %v3416 = vld [vmem:[%s2983] sm:$0xe]
        %v3417 = vld [vmem:[%s2983 + $0xc] sm:$0xe]
        %v3418 = vld [vmem:[%s2983 + $0x18] sm:$0xe]
        %v3419 = vld [vmem:[%s2983 + $0x24] sm:$0xe]
        %v3420 = vld [vmem:[%s2983 + $0x30] sm:$0xe]
        %v3421 = vld [vmem:[%s2983 + $0x3c] sm:$0xe]
        %v3422 = vld [vmem:[%s2983 + $0x48] sm:$0xe]
        %v3423 = vld [vmem:[%s2983 + $0x54] sm:$0xe]
        %v3424 = vld [vmem:[%s2983 + $0x60] sm:$0xe]
        %v3425 = vld [vmem:[%s2983 + $0x6c] sm:$0xe]
        %v3426 = vld [vmem:[%s2983 + $0x78] sm:$0xe]
        %v3427 = vld [vmem:[%s2983 + $0x84] sm:$0xe]
        %v3428 = vld [vmem:[%s2983 + $0x90] sm:$0xe]
        %v3429 = vld [vmem:[%s2983 + $0x9c] sm:$0xe]
        %v3430 = vld [vmem:[%s2983 + $0xa8] sm:$0xe]
        %v3431 = vld [vmem:[%s2983 + $0xb4] sm:$0xe]
        %v3480 = vrot.slane %v3416, 5
        %v3481 = vrot.slane %v3480, 4
        %v3482 = vrot.slane %v2985, 5
        %v3483 = vsel %vm2262, %v3481, %v3482
        %v3484 = vrot.slane %v3482, 4
        %v3485 = vrot.slane %v3016, 5
        %v3486 = vsel %vm2262, %v3484, %v3485
        %v3487 = vrot.slane %v3417, 5
        %v3488 = vrot.slane %v3487, 4
        %v3489 = vrot.slane %v2987, 5
        %v3490 = vsel %vm2262, %v3488, %v3489
        %v3491 = vrot.slane %v3489, 4
        %v3492 = vrot.slane %v3017, 5
        %v3493 = vsel %vm2262, %v3491, %v3492
        %v3494 = vrot.slane %v3418, 5
        %v3495 = vrot.slane %v3494, 4
        %v3496 = vrot.slane %v2989, 5
        %v3497 = vsel %vm2262, %v3495, %v3496
        %v3498 = vrot.slane %v3496, 4
        %v3499 = vrot.slane %v3018, 5
        %v3500 = vsel %vm2262, %v3498, %v3499
        %v3501 = vrot.slane %v3419, 5
        %v3502 = vrot.slane %v3501, 4
        %v3503 = vrot.slane %v2991, 5
        %v3504 = vsel %vm2262, %v3502, %v3503
        %v3505 = vrot.slane %v3503, 4
        %v3506 = vrot.slane %v3019, 5
        %v3507 = vsel %vm2262, %v3505, %v3506
        %v3508 = vrot.slane %v3420, 5
        %v3509 = vrot.slane %v3508, 4
        %v3510 = vrot.slane %v2993, 5
        %v3511 = vsel %vm2262, %v3509, %v3510
        %v3512 = vrot.slane %v3510, 4
        %v3513 = vrot.slane %v3020, 5
        %v3514 = vsel %vm2262, %v3512, %v3513
        %v3515 = vrot.slane %v3421, 5
        %v3516 = vrot.slane %v3515, 4
        %v3517 = vrot.slane %v2995, 5
        %v3518 = vsel %vm2262, %v3516, %v3517
        %v3519 = vrot.slane %v3517, 4
        %v3520 = vrot.slane %v3021, 5
        %v3521 = vsel %vm2262, %v3519, %v3520
        %v3522 = vrot.slane %v3422, 5
        %v3523 = vrot.slane %v3522, 4
        %v3524 = vrot.slane %v2997, 5
        %v3525 = vsel %vm2262, %v3523, %v3524
        %v3526 = vrot.slane %v3524, 4
        %v3527 = vrot.slane %v3022, 5
        %v3528 = vsel %vm2262, %v3526, %v3527
        %v3529 = vrot.slane %v3423, 5
        %v3530 = vrot.slane %v3529, 4
        %v3531 = vrot.slane %v2999, 5
        %v3532 = vsel %vm2262, %v3530, %v3531
        %v3533 = vrot.slane %v3531, 4
        %v3534 = vrot.slane %v3023, 5
        %v3535 = vsel %vm2262, %v3533, %v3534
        %v3536 = vrot.slane %v3424, 5
        %v3537 = vrot.slane %v3536, 4
        %v3538 = vrot.slane %v3001, 5
        %v3539 = vsel %vm2262, %v3537, %v3538
        %v3540 = vrot.slane %v3538, 4
        %v3541 = vrot.slane %v3024, 5
        %v3542 = vsel %vm2262, %v3540, %v3541
        %v3543 = vrot.slane %v3425, 5
        %v3544 = vrot.slane %v3543, 4
        %v3545 = vrot.slane %v3003, 5
        %v3546 = vsel %vm2262, %v3544, %v3545
        %v3547 = vrot.slane %v3545, 4
        %v3548 = vrot.slane %v3025, 5
        %v3549 = vsel %vm2262, %v3547, %v3548
        %v3550 = vrot.slane %v3426, 5
        %v3551 = vrot.slane %v3550, 4
        %v3552 = vrot.slane %v3005, 5
        %v3553 = vsel %vm2262, %v3551, %v3552
        %v3554 = vrot.slane %v3552, 4
        %v3555 = vrot.slane %v3026, 5
        %v3556 = vsel %vm2262, %v3554, %v3555
        %v3557 = vrot.slane %v3427, 5
        %v3558 = vrot.slane %v3557, 4
        %v3559 = vrot.slane %v3007, 5
        %v3560 = vsel %vm2262, %v3558, %v3559
        %v3561 = vrot.slane %v3559, 4
        %v3562 = vrot.slane %v3027, 5
        %v3563 = vsel %vm2262, %v3561, %v3562
        %v3564 = vrot.slane %v3428, 5
        %v3565 = vrot.slane %v3564, 4
        %v3566 = vrot.slane %v3009, 5
        %v3567 = vsel %vm2262, %v3565, %v3566
        %v3568 = vrot.slane %v3566, 4
        %v3569 = vrot.slane %v3028, 5
        %v3570 = vsel %vm2262, %v3568, %v3569
        %v3571 = vrot.slane %v3429, 5
        %v3572 = vrot.slane %v3571, 4
        %v3573 = vrot.slane %v3011, 5
        %v3574 = vsel %vm2262, %v3572, %v3573
        %v3575 = vrot.slane %v3573, 4
        %v3576 = vrot.slane %v3029, 5
        %v3577 = vsel %vm2262, %v3575, %v3576
        %v3578 = vrot.slane %v3430, 5
        %v3579 = vrot.slane %v3578, 4
        %v3580 = vrot.slane %v3013, 5
        %v3581 = vsel %vm2262, %v3579, %v3580
        %v3582 = vrot.slane %v3580, 4
        %v3583 = vrot.slane %v3030, 5
        %v3584 = vsel %vm2262, %v3582, %v3583
        %v3585 = vrot.slane %v3431, 5
        %v3586 = vrot.slane %v3585, 4
        %v3587 = vrot.slane %v3015, 5
        %v3588 = vsel %vm2262, %v3586, %v3587
        %v3589 = vrot.slane %v3587, 4
        %v3590 = vrot.slane %v3031, 5
        %v3591 = vsel %vm2262, %v3589, %v3590
        %v3608 = vunpack.c.l.b16 %v1761
        %v3609 = vunpack.c.l.b16 %v1762
        %v3610 = vunpack.c.l.b16 %v1763
        %v3611 = vunpack.c.l.b16 %v1764
        %v3612 = vunpack.c.l.b16 %v1765
        %v3613 = vunpack.c.l.b16 %v1766
        %v3614 = vunpack.c.l.b16 %v1767
        %v3615 = vunpack.c.l.b16 %v1768
        %v3616 = vunpack.c.l.b16 %v1769
        %v3617 = vunpack.c.l.b16 %v1770
        %v3618 = vunpack.c.l.b16 %v1771
        %v3619 = vunpack.c.l.b16 %v1772
        %v3620 = vunpack.c.l.b16 %v1773
        %v3621 = vunpack.c.l.b16 %v1774
        %v3622 = vunpack.c.l.b16 %v1775
        %v3623 = vunpack.c.l.b16 %v1776
        %v3624 = vunpack.c.l.b16 %v1777
        %v3625 = vunpack.c.l.b16 %v1778
        %v3626 = vunpack.c.l.b16 %v1779
        %v3627 = vunpack.c.l.b16 %v1780
        %v3628 = vunpack.c.l.b16 %v1781
        %v3629 = vunpack.c.l.b16 %v1782
        %v3630 = vunpack.c.l.b16 %v1783
        %v3631 = vunpack.c.l.b16 %v1784
        %v3632 = vunpack.c.l.b16 %v1785
        %v3633 = vunpack.c.l.b16 %v1786
        %v3634 = vunpack.c.l.b16 %v1787
        %v3635 = vunpack.c.l.b16 %v1788
        %v3636 = vunpack.c.l.b16 %v1789
        %v3637 = vunpack.c.l.b16 %v1790
        %v3638 = vunpack.c.l.b16 %v1791
        %v3639 = vunpack.c.l.b16 %v1792
        %v3640 = vpack.c.b16 %v3609, %v3608
        %v3641 = vpack.c.b16 %v3611, %v3610
        %v3642 = vpack.c.b16 %v3613, %v3612
        %v3643 = vpack.c.b16 %v3615, %v3614
        %v3644 = vpack.c.b16 %v3617, %v3616
        %v3645 = vpack.c.b16 %v3619, %v3618
        %v3646 = vpack.c.b16 %v3621, %v3620
        %v3647 = vpack.c.b16 %v3623, %v3622
        %v3648 = vpack.c.b16 %v3625, %v3624
        %v3649 = vpack.c.b16 %v3627, %v3626
        %v3650 = vpack.c.b16 %v3629, %v3628
        %v3651 = vpack.c.b16 %v3631, %v3630
        %v3652 = vpack.c.b16 %v3633, %v3632
        %v3653 = vpack.c.b16 %v3635, %v3634
        %v3654 = vpack.c.b16 %v3637, %v3636
        %v3655 = vpack.c.b16 %v3639, %v3638
        %v3656 = vunpack.c.l.b16 %v1825
        %v3657 = vunpack.c.l.b16 %v1835
        %v3658 = vunpack.c.l.b16 %v1849
        %v3659 = vunpack.c.l.b16 %v1859
        %v3660 = vunpack.c.l.b16 %v1873
        %v3661 = vunpack.c.l.b16 %v1883
        %v3662 = vunpack.c.l.b16 %v1897
        %v3663 = vunpack.c.l.b16 %v1907
        %v3664 = vunpack.c.l.b16 %v1921
        %v3665 = vunpack.c.l.b16 %v1931
        %v3666 = vunpack.c.l.b16 %v1945
        %v3667 = vunpack.c.l.b16 %v1955
        %v3668 = vunpack.c.l.b16 %v1969
        %v3669 = vunpack.c.l.b16 %v1979
        %v3670 = vunpack.c.l.b16 %v1993
        %v3671 = vunpack.c.l.b16 %v2003
        %v3672 = vunpack.c.l.b16 %v2017
        %v3673 = vunpack.c.l.b16 %v2027
        %v3674 = vunpack.c.l.b16 %v2041
        %v3675 = vunpack.c.l.b16 %v2051
        %v3676 = vunpack.c.l.b16 %v2065
        %v3677 = vunpack.c.l.b16 %v2075
        %v3678 = vunpack.c.l.b16 %v2089
        %v3679 = vunpack.c.l.b16 %v2099
        %v3680 = vunpack.c.l.b16 %v2113
        %v3681 = vunpack.c.l.b16 %v2123
        %v3682 = vunpack.c.l.b16 %v2137
        %v3683 = vunpack.c.l.b16 %v2147
        %v3684 = vunpack.c.l.b16 %v2161
        %v3685 = vunpack.c.l.b16 %v2171
        %v3686 = vunpack.c.l.b16 %v2185
        %v3687 = vunpack.c.l.b16 %v2195
        %v3688 = vpack.c.b16 %v3657, %v3656
        %v3689 = vpack.c.b16 %v3659, %v3658
        %v3690 = vpack.c.b16 %v3661, %v3660
        %v3691 = vpack.c.b16 %v3663, %v3662
        %v3692 = vpack.c.b16 %v3665, %v3664
        %v3693 = vpack.c.b16 %v3667, %v3666
        %v3694 = vpack.c.b16 %v3669, %v3668
        %v3695 = vpack.c.b16 %v3671, %v3670
        %v3696 = vpack.c.b16 %v3673, %v3672
        %v3697 = vpack.c.b16 %v3675, %v3674
        %v3698 = vpack.c.b16 %v3677, %v3676
        %v3699 = vpack.c.b16 %v3679, %v3678
        %v3700 = vpack.c.b16 %v3681, %v3680
        %v3701 = vpack.c.b16 %v3683, %v3682
        %v3702 = vpack.c.b16 %v3685, %v3684
        %v3703 = vpack.c.b16 %v3687, %v3686
        %3704 = vrot.lane.b32.xlu0 %v3688, 32
        %v3705 = vpop.permute.xlu0 %3704
        %3706 = vrot.lane.b32.xlu0 %v3689, 32
        %v3707 = vpop.permute.xlu0 %3706
        %3708 = vrot.lane.b32.xlu0 %v3690, 32
        %v3709 = vpop.permute.xlu0 %3708
        %3710 = vrot.lane.b32.xlu0 %v3691, 32
        %v3711 = vpop.permute.xlu0 %3710
        %3712 = vrot.lane.b32.xlu0 %v3692, 32
        %v3713 = vpop.permute.xlu0 %3712
        %3714 = vrot.lane.b32.xlu0 %v3693, 32
        %v3715 = vpop.permute.xlu0 %3714
        %3716 = vrot.lane.b32.xlu0 %v3694, 32
        %v3717 = vpop.permute.xlu0 %3716
        %3718 = vrot.lane.b32.xlu0 %v3695, 32
        %v3719 = vpop.permute.xlu0 %3718
        %3720 = vrot.lane.b32.xlu0 %v3696, 32
        %v3721 = vpop.permute.xlu0 %3720
        %3722 = vrot.lane.b32.xlu0 %v3697, 32
        %v3723 = vpop.permute.xlu0 %3722
        %3724 = vrot.lane.b32.xlu0 %v3698, 32
        %v3725 = vpop.permute.xlu0 %3724
        %3726 = vrot.lane.b32.xlu0 %v3699, 32
        %v3727 = vpop.permute.xlu0 %3726
        %3728 = vrot.lane.b32.xlu0 %v3700, 32
        %v3729 = vpop.permute.xlu0 %3728
        %3730 = vrot.lane.b32.xlu0 %v3701, 32
        %v3731 = vpop.permute.xlu0 %3730
        %3732 = vrot.lane.b32.xlu0 %v3702, 32
        %v3733 = vpop.permute.xlu0 %3732
        %3734 = vrot.lane.b32.xlu0 %v3703, 32
        %v3735 = vpop.permute.xlu0 %3734
        %v3736 = vunpack.c.l.b16 %v2266
        %v3737 = vunpack.c.l.b16 %v2269
        %v3738 = vunpack.c.l.b16 %v2273
        %v3739 = vunpack.c.l.b16 %v2276
        %v3740 = vunpack.c.l.b16 %v2280
        %v3741 = vunpack.c.l.b16 %v2283
        %v3742 = vunpack.c.l.b16 %v2287
        %v3743 = vunpack.c.l.b16 %v2290
        %v3744 = vunpack.c.l.b16 %v2294
        %v3745 = vunpack.c.l.b16 %v2297
        %v3746 = vunpack.c.l.b16 %v2301
        %v3747 = vunpack.c.l.b16 %v2304
        %v3748 = vunpack.c.l.b16 %v2308
        %v3749 = vunpack.c.l.b16 %v2311
        %v3750 = vunpack.c.l.b16 %v2315
        %v3751 = vunpack.c.l.b16 %v2318
        %v3752 = vunpack.c.l.b16 %v2322
        %v3753 = vunpack.c.l.b16 %v2325
        %v3754 = vunpack.c.l.b16 %v2329
        %v3755 = vunpack.c.l.b16 %v2332
        %v3756 = vunpack.c.l.b16 %v2336
        %v3757 = vunpack.c.l.b16 %v2339
        %v3758 = vunpack.c.l.b16 %v2343
        %v3759 = vunpack.c.l.b16 %v2346
        %v3760 = vunpack.c.l.b16 %v2350
        %v3761 = vunpack.c.l.b16 %v2353
        %v3762 = vunpack.c.l.b16 %v2357
        %v3763 = vunpack.c.l.b16 %v2360
        %v3764 = vunpack.c.l.b16 %v2364
        %v3765 = vunpack.c.l.b16 %v2367
        %v3766 = vunpack.c.l.b16 %v2371
        %v3767 = vunpack.c.l.b16 %v2374
        %v3768 = vpack.c.b16 %v3737, %v3736
        %v3769 = vpack.c.b16 %v3739, %v3738
        %v3770 = vpack.c.b16 %v3741, %v3740
        %v3771 = vpack.c.b16 %v3743, %v3742
        %v3772 = vpack.c.b16 %v3745, %v3744
        %v3773 = vpack.c.b16 %v3747, %v3746
        %v3774 = vpack.c.b16 %v3749, %v3748
        %v3775 = vpack.c.b16 %v3751, %v3750
        %v3776 = vpack.c.b16 %v3753, %v3752
        %v3777 = vpack.c.b16 %v3755, %v3754
        %v3778 = vpack.c.b16 %v3757, %v3756
        %v3779 = vpack.c.b16 %v3759, %v3758
        %v3780 = vpack.c.b16 %v3761, %v3760
        %v3781 = vpack.c.b16 %v3763, %v3762
        %v3782 = vpack.c.b16 %v3765, %v3764
        %v3783 = vpack.c.b16 %v3767, %v3766
        %3784 = vrot.lane.b32.xlu0 %v3768, 64
        %v3785 = vpop.permute.xlu0 %3784
        %3786 = vrot.lane.b32.xlu0 %v3769, 64
        %v3787 = vpop.permute.xlu0 %3786
        %3788 = vrot.lane.b32.xlu0 %v3770, 64
        %v3789 = vpop.permute.xlu0 %3788
        %3790 = vrot.lane.b32.xlu0 %v3771, 64
        %v3791 = vpop.permute.xlu0 %3790
        %3792 = vrot.lane.b32.xlu0 %v3772, 64
        %v3793 = vpop.permute.xlu0 %3792
        %3794 = vrot.lane.b32.xlu0 %v3773, 64
        %v3795 = vpop.permute.xlu0 %3794
        %3796 = vrot.lane.b32.xlu0 %v3774, 64
        %v3797 = vpop.permute.xlu0 %3796
        %3798 = vrot.lane.b32.xlu0 %v3775, 64
        %v3799 = vpop.permute.xlu0 %3798
        %3800 = vrot.lane.b32.xlu0 %v3776, 64
        %v3801 = vpop.permute.xlu0 %3800
        %3802 = vrot.lane.b32.xlu0 %v3777, 64
        %v3803 = vpop.permute.xlu0 %3802
        %3804 = vrot.lane.b32.xlu0 %v3778, 64
        %v3805 = vpop.permute.xlu0 %3804
        %3806 = vrot.lane.b32.xlu0 %v3779, 64
        %v3807 = vpop.permute.xlu0 %3806
        %3808 = vrot.lane.b32.xlu0 %v3780, 64
        %v3809 = vpop.permute.xlu0 %3808
        %3810 = vrot.lane.b32.xlu0 %v3781, 64
        %v3811 = vpop.permute.xlu0 %3810
        %3812 = vrot.lane.b32.xlu0 %v3782, 64
        %v3813 = vpop.permute.xlu0 %3812
        %3814 = vrot.lane.b32.xlu0 %v3783, 64
        %v3815 = vpop.permute.xlu0 %3814
        %v3832 = vunpack.c.l.b16 %v2375
        %v3833 = vunpack.c.l.b16 %v2376
        %v3834 = vunpack.c.l.b16 %v2377
        %v3835 = vunpack.c.l.b16 %v2378
        %v3836 = vunpack.c.l.b16 %v2379
        %v3837 = vunpack.c.l.b16 %v2380
        %v3838 = vunpack.c.l.b16 %v2381
        %v3839 = vunpack.c.l.b16 %v2382
        %v3840 = vunpack.c.l.b16 %v2383
        %v3841 = vunpack.c.l.b16 %v2384
        %v3842 = vunpack.c.l.b16 %v2385
        %v3843 = vunpack.c.l.b16 %v2386
        %v3844 = vunpack.c.l.b16 %v2387
        %v3845 = vunpack.c.l.b16 %v2388
        %v3846 = vunpack.c.l.b16 %v2389
        %v3847 = vunpack.c.l.b16 %v2390
        %v3848 = vunpack.c.l.b16 %v2391
        %v3849 = vunpack.c.l.b16 %v2392
        %v3850 = vunpack.c.l.b16 %v2393
        %v3851 = vunpack.c.l.b16 %v2394
        %v3852 = vunpack.c.l.b16 %v2395
        %v3853 = vunpack.c.l.b16 %v2396
        %v3854 = vunpack.c.l.b16 %v2397
        %v3855 = vunpack.c.l.b16 %v2398
        %v3856 = vunpack.c.l.b16 %v2399
        %v3857 = vunpack.c.l.b16 %v2400
        %v3858 = vunpack.c.l.b16 %v2401
        %v3859 = vunpack.c.l.b16 %v2402
        %v3860 = vunpack.c.l.b16 %v2403
        %v3861 = vunpack.c.l.b16 %v2404
        %v3862 = vunpack.c.l.b16 %v2405
        %v3863 = vunpack.c.l.b16 %v2406
        %v3864 = vpack.c.b16 %v3833, %v3832
        %v3865 = vpack.c.b16 %v3835, %v3834
        %v3866 = vpack.c.b16 %v3837, %v3836
        %v3867 = vpack.c.b16 %v3839, %v3838
        %v3868 = vpack.c.b16 %v3841, %v3840
        %v3869 = vpack.c.b16 %v3843, %v3842
        %v3870 = vpack.c.b16 %v3845, %v3844
        %v3871 = vpack.c.b16 %v3847, %v3846
        %v3872 = vpack.c.b16 %v3849, %v3848
        %v3873 = vpack.c.b16 %v3851, %v3850
        %v3874 = vpack.c.b16 %v3853, %v3852
        %v3875 = vpack.c.b16 %v3855, %v3854
        %v3876 = vpack.c.b16 %v3857, %v3856
        %v3877 = vpack.c.b16 %v3859, %v3858
        %v3878 = vpack.c.b16 %v3861, %v3860
        %v3879 = vpack.c.b16 %v3863, %v3862
        %3880 = vrot.lane.b32.xlu0 %v3864, 96
        %v3881 = vpop.permute.xlu0 %3880
        %3882 = vrot.lane.b32.xlu0 %v3865, 96
        %v3883 = vpop.permute.xlu0 %3882
        %3884 = vrot.lane.b32.xlu0 %v3866, 96
        %v3885 = vpop.permute.xlu0 %3884
        %3886 = vrot.lane.b32.xlu0 %v3867, 96
        %v3887 = vpop.permute.xlu0 %3886
        %3888 = vrot.lane.b32.xlu0 %v3868, 96
        %v3889 = vpop.permute.xlu0 %3888
        %3890 = vrot.lane.b32.xlu0 %v3869, 96
        %v3891 = vpop.permute.xlu0 %3890
        %3892 = vrot.lane.b32.xlu0 %v3870, 96
        %v3893 = vpop.permute.xlu0 %3892
        %3894 = vrot.lane.b32.xlu0 %v3871, 96
        %v3895 = vpop.permute.xlu0 %3894
        %3896 = vrot.lane.b32.xlu0 %v3872, 96
        %v3897 = vpop.permute.xlu0 %3896
        %3898 = vrot.lane.b32.xlu0 %v3873, 96
        %v3899 = vpop.permute.xlu0 %3898
        %3900 = vrot.lane.b32.xlu0 %v3874, 96
        %v3901 = vpop.permute.xlu0 %3900
        %3902 = vrot.lane.b32.xlu0 %v3875, 96
        %v3903 = vpop.permute.xlu0 %3902
        %3904 = vrot.lane.b32.xlu0 %v3876, 96
        %v3905 = vpop.permute.xlu0 %3904
        %3906 = vrot.lane.b32.xlu0 %v3877, 96
        %v3907 = vpop.permute.xlu0 %3906
        %3908 = vrot.lane.b32.xlu0 %v3878, 96
        %v3909 = vpop.permute.xlu0 %3908
        %3910 = vrot.lane.b32.xlu0 %v3879, 96
        %v3911 = vpop.permute.xlu0 %3910
        %v3912 = vunpack.c.l.b16 %v2436
        %v3913 = vunpack.c.l.b16 %v2446
        %v3914 = vunpack.c.l.b16 %v2460
        %v3915 = vunpack.c.l.b16 %v2470
        %v3916 = vunpack.c.l.b16 %v2484
        %v3917 = vunpack.c.l.b16 %v2494
        %v3918 = vunpack.c.l.b16 %v2508
        %v3919 = vunpack.c.l.b16 %v2518
        %v3920 = vunpack.c.l.b16 %v2532
        %v3921 = vunpack.c.l.b16 %v2542
        %v3922 = vunpack.c.l.b16 %v2556
        %v3923 = vunpack.c.l.b16 %v2566
        %v3924 = vunpack.c.l.b16 %v2580
        %v3925 = vunpack.c.l.b16 %v2590
        %v3926 = vunpack.c.l.b16 %v2604
        %v3927 = vunpack.c.l.b16 %v2614
        %v3928 = vunpack.c.l.b16 %v2628
        %v3929 = vunpack.c.l.b16 %v2638
        %v3930 = vunpack.c.l.b16 %v2652
        %v3931 = vunpack.c.l.b16 %v2662
        %v3932 = vunpack.c.l.b16 %v2676
        %v3933 = vunpack.c.l.b16 %v2686
        %v3934 = vunpack.c.l.b16 %v2700
        %v3935 = vunpack.c.l.b16 %v2710
        %v3936 = vunpack.c.l.b16 %v2724
        %v3937 = vunpack.c.l.b16 %v2734
        %v3938 = vunpack.c.l.b16 %v2748
        %v3939 = vunpack.c.l.b16 %v2758
        %v3940 = vunpack.c.l.b16 %v2772
        %v3941 = vunpack.c.l.b16 %v2782
        %v3942 = vunpack.c.l.b16 %v2796
        %v3943 = vunpack.c.l.b16 %v2806
        %v3944 = vpack.c.b16 %v3913, %v3912
        %v3945 = vpack.c.b16 %v3915, %v3914
        %v3946 = vpack.c.b16 %v3917, %v3916
        %v3947 = vpack.c.b16 %v3919, %v3918
        %v3948 = vpack.c.b16 %v3921, %v3920
        %v3949 = vpack.c.b16 %v3923, %v3922
        %v3950 = vpack.c.b16 %v3925, %v3924
        %v3951 = vpack.c.b16 %v3927, %v3926
        %v3952 = vpack.c.b16 %v3929, %v3928
        %v3953 = vpack.c.b16 %v3931, %v3930
        %v3954 = vpack.c.b16 %v3933, %v3932
        %v3955 = vpack.c.b16 %v3935, %v3934
        %v3956 = vpack.c.b16 %v3937, %v3936
        %v3957 = vpack.c.b16 %v3939, %v3938
        %v3958 = vpack.c.b16 %v3941, %v3940
        %v3959 = vpack.c.b16 %v3943, %v3942
        %v3960 = vunpack.c.l.b16 %v2874
        %v3961 = vunpack.c.l.b16 %v2877
        %v3962 = vunpack.c.l.b16 %v2881
        %v3963 = vunpack.c.l.b16 %v2884
        %v3964 = vunpack.c.l.b16 %v2888
        %v3965 = vunpack.c.l.b16 %v2891
        %v3966 = vunpack.c.l.b16 %v2895
        %v3967 = vunpack.c.l.b16 %v2898
        %v3968 = vunpack.c.l.b16 %v2902
        %v3969 = vunpack.c.l.b16 %v2905
        %v3970 = vunpack.c.l.b16 %v2909
        %v3971 = vunpack.c.l.b16 %v2912
        %v3972 = vunpack.c.l.b16 %v2916
        %v3973 = vunpack.c.l.b16 %v2919
        %v3974 = vunpack.c.l.b16 %v2923
        %v3975 = vunpack.c.l.b16 %v2926
        %v3976 = vunpack.c.l.b16 %v2930
        %v3977 = vunpack.c.l.b16 %v2933
        %v3978 = vunpack.c.l.b16 %v2937
        %v3979 = vunpack.c.l.b16 %v2940
        %v3980 = vunpack.c.l.b16 %v2944
        %v3981 = vunpack.c.l.b16 %v2947
        %v3982 = vunpack.c.l.b16 %v2951
        %v3983 = vunpack.c.l.b16 %v2954
        %v3984 = vunpack.c.l.b16 %v2958
        %v3985 = vunpack.c.l.b16 %v2961
        %v3986 = vunpack.c.l.b16 %v2965
        %v3987 = vunpack.c.l.b16 %v2968
        %v3988 = vunpack.c.l.b16 %v2972
        %v3989 = vunpack.c.l.b16 %v2975
        %v3990 = vunpack.c.l.b16 %v2979
        %v3991 = vunpack.c.l.b16 %v2982
        %v3992 = vpack.c.b16 %v3961, %v3960
        %v3993 = vpack.c.b16 %v3963, %v3962
        %v3994 = vpack.c.b16 %v3965, %v3964
        %v3995 = vpack.c.b16 %v3967, %v3966
        %v3996 = vpack.c.b16 %v3969, %v3968
        %v3997 = vpack.c.b16 %v3971, %v3970
        %v3998 = vpack.c.b16 %v3973, %v3972
        %v3999 = vpack.c.b16 %v3975, %v3974
        %v4000 = vpack.c.b16 %v3977, %v3976
        %v4001 = vpack.c.b16 %v3979, %v3978
        %v4002 = vpack.c.b16 %v3981, %v3980
        %v4003 = vpack.c.b16 %v3983, %v3982
        %v4004 = vpack.c.b16 %v3985, %v3984
        %v4005 = vpack.c.b16 %v3987, %v3986
        %v4006 = vpack.c.b16 %v3989, %v3988
        %v4007 = vpack.c.b16 %v3991, %v3990
        %4008 = vrot.lane.b32.xlu0 %v3992, 32
        %v4009 = vpop.permute.xlu0 %4008
        %4010 = vrot.lane.b32.xlu0 %v3993, 32
        %v4011 = vpop.permute.xlu0 %4010
        %4012 = vrot.lane.b32.xlu0 %v3994, 32
        %v4013 = vpop.permute.xlu0 %4012
        %4014 = vrot.lane.b32.xlu0 %v3995, 32
        %v4015 = vpop.permute.xlu0 %4014
        %4016 = vrot.lane.b32.xlu0 %v3996, 32
        %v4017 = vpop.permute.xlu0 %4016
        %4018 = vrot.lane.b32.xlu0 %v3997, 32
        %v4019 = vpop.permute.xlu0 %4018
        %4020 = vrot.lane.b32.xlu0 %v3998, 32
        %v4021 = vpop.permute.xlu0 %4020
        %4022 = vrot.lane.b32.xlu0 %v3999, 32
        %v4023 = vpop.permute.xlu0 %4022
        %4024 = vrot.lane.b32.xlu0 %v4000, 32
        %v4025 = vpop.permute.xlu0 %4024
        %4026 = vrot.lane.b32.xlu0 %v4001, 32
        %v4027 = vpop.permute.xlu0 %4026
        %4028 = vrot.lane.b32.xlu0 %v4002, 32
        %v4029 = vpop.permute.xlu0 %4028
        %4030 = vrot.lane.b32.xlu0 %v4003, 32
        %v4031 = vpop.permute.xlu0 %4030
        %4032 = vrot.lane.b32.xlu0 %v4004, 32
        %v4033 = vpop.permute.xlu0 %4032
        %4034 = vrot.lane.b32.xlu0 %v4005, 32
        %v4035 = vpop.permute.xlu0 %4034
        %4036 = vrot.lane.b32.xlu0 %v4006, 32
        %v4037 = vpop.permute.xlu0 %4036
        %4038 = vrot.lane.b32.xlu0 %v4007, 32
        %v4039 = vpop.permute.xlu0 %4038
        %v4056 = vunpack.c.l.b16 %v2984
        %v4057 = vunpack.c.l.b16 %v2985
        %v4058 = vunpack.c.l.b16 %v2986
        %v4059 = vunpack.c.l.b16 %v2987
        %v4060 = vunpack.c.l.b16 %v2988
        %v4061 = vunpack.c.l.b16 %v2989
        %v4062 = vunpack.c.l.b16 %v2990
        %v4063 = vunpack.c.l.b16 %v2991
        %v4064 = vunpack.c.l.b16 %v2992
        %v4065 = vunpack.c.l.b16 %v2993
        %v4066 = vunpack.c.l.b16 %v2994
        %v4067 = vunpack.c.l.b16 %v2995
        %v4068 = vunpack.c.l.b16 %v2996
        %v4069 = vunpack.c.l.b16 %v2997
        %v4070 = vunpack.c.l.b16 %v2998
        %v4071 = vunpack.c.l.b16 %v2999
        %v4072 = vunpack.c.l.b16 %v3000
        %v4073 = vunpack.c.l.b16 %v3001
        %v4074 = vunpack.c.l.b16 %v3002
        %v4075 = vunpack.c.l.b16 %v3003
        %v4076 = vunpack.c.l.b16 %v3004
        %v4077 = vunpack.c.l.b16 %v3005
        %v4078 = vunpack.c.l.b16 %v3006
        %v4079 = vunpack.c.l.b16 %v3007
        %v4080 = vunpack.c.l.b16 %v3008
        %v4081 = vunpack.c.l.b16 %v3009
        %v4082 = vunpack.c.l.b16 %v3010
        %v4083 = vunpack.c.l.b16 %v3011
        %v4084 = vunpack.c.l.b16 %v3012
        %v4085 = vunpack.c.l.b16 %v3013
        %v4086 = vunpack.c.l.b16 %v3014
        %v4087 = vunpack.c.l.b16 %v3015
        %v4088 = vpack.c.b16 %v4057, %v4056
        %v4089 = vpack.c.b16 %v4059, %v4058
        %v4090 = vpack.c.b16 %v4061, %v4060
        %v4091 = vpack.c.b16 %v4063, %v4062
        %v4092 = vpack.c.b16 %v4065, %v4064
        %v4093 = vpack.c.b16 %v4067, %v4066
        %v4094 = vpack.c.b16 %v4069, %v4068
        %v4095 = vpack.c.b16 %v4071, %v4070
        %v4096 = vpack.c.b16 %v4073, %v4072
        %v4097 = vpack.c.b16 %v4075, %v4074
        %v4098 = vpack.c.b16 %v4077, %v4076
        %v4099 = vpack.c.b16 %v4079, %v4078
        %v4100 = vpack.c.b16 %v4081, %v4080
        %v4101 = vpack.c.b16 %v4083, %v4082
        %v4102 = vpack.c.b16 %v4085, %v4084
        %v4103 = vpack.c.b16 %v4087, %v4086
        %4104 = vrot.lane.b32.xlu0 %v4088, 64
        %v4105 = vpop.permute.xlu0 %4104
        %4106 = vrot.lane.b32.xlu0 %v4089, 64
        %v4107 = vpop.permute.xlu0 %4106
        %4108 = vrot.lane.b32.xlu0 %v4090, 64
        %v4109 = vpop.permute.xlu0 %4108
        %4110 = vrot.lane.b32.xlu0 %v4091, 64
        %v4111 = vpop.permute.xlu0 %4110
        %4112 = vrot.lane.b32.xlu0 %v4092, 64
        %v4113 = vpop.permute.xlu0 %4112
        %4114 = vrot.lane.b32.xlu0 %v4093, 64
        %v4115 = vpop.permute.xlu0 %4114
        %4116 = vrot.lane.b32.xlu0 %v4094, 64
        %v4117 = vpop.permute.xlu0 %4116
        %4118 = vrot.lane.b32.xlu0 %v4095, 64
        %v4119 = vpop.permute.xlu0 %4118
        %4120 = vrot.lane.b32.xlu0 %v4096, 64
        %v4121 = vpop.permute.xlu0 %4120
        %4122 = vrot.lane.b32.xlu0 %v4097, 64
        %v4123 = vpop.permute.xlu0 %4122
        %4124 = vrot.lane.b32.xlu0 %v4098, 64
        %v4125 = vpop.permute.xlu0 %4124
        %4126 = vrot.lane.b32.xlu0 %v4099, 64
        %v4127 = vpop.permute.xlu0 %4126
        %4128 = vrot.lane.b32.xlu0 %v4100, 64
        %v4129 = vpop.permute.xlu0 %4128
        %4130 = vrot.lane.b32.xlu0 %v4101, 64
        %v4131 = vpop.permute.xlu0 %4130
        %4132 = vrot.lane.b32.xlu0 %v4102, 64
        %v4133 = vpop.permute.xlu0 %4132
        %4134 = vrot.lane.b32.xlu0 %v4103, 64
        %v4135 = vpop.permute.xlu0 %4134
        %v4136 = vunpack.c.l.b16 %v3045
        %v4137 = vunpack.c.l.b16 %v3055
        %v4138 = vunpack.c.l.b16 %v3069
        %v4139 = vunpack.c.l.b16 %v3079
        %v4140 = vunpack.c.l.b16 %v3093
        %v4141 = vunpack.c.l.b16 %v3103
        %v4142 = vunpack.c.l.b16 %v3117
        %v4143 = vunpack.c.l.b16 %v3127
        %v4144 = vunpack.c.l.b16 %v3141
        %v4145 = vunpack.c.l.b16 %v3151
        %v4146 = vunpack.c.l.b16 %v3165
        %v4147 = vunpack.c.l.b16 %v3175
        %v4148 = vunpack.c.l.b16 %v3189
        %v4149 = vunpack.c.l.b16 %v3199
        %v4150 = vunpack.c.l.b16 %v3213
        %v4151 = vunpack.c.l.b16 %v3223
        %v4152 = vunpack.c.l.b16 %v3237
        %v4153 = vunpack.c.l.b16 %v3247
        %v4154 = vunpack.c.l.b16 %v3261
        %v4155 = vunpack.c.l.b16 %v3271
        %v4156 = vunpack.c.l.b16 %v3285
        %v4157 = vunpack.c.l.b16 %v3295
        %v4158 = vunpack.c.l.b16 %v3309
        %v4159 = vunpack.c.l.b16 %v3319
        %v4160 = vunpack.c.l.b16 %v3333
        %v4161 = vunpack.c.l.b16 %v3343
        %v4162 = vunpack.c.l.b16 %v3357
        %v4163 = vunpack.c.l.b16 %v3367
        %v4164 = vunpack.c.l.b16 %v3381
        %v4165 = vunpack.c.l.b16 %v3391
        %v4166 = vunpack.c.l.b16 %v3405
        %v4167 = vunpack.c.l.b16 %v3415
        %v4168 = vpack.c.b16 %v4137, %v4136
        %v4169 = vpack.c.b16 %v4139, %v4138
        %v4170 = vpack.c.b16 %v4141, %v4140
        %v4171 = vpack.c.b16 %v4143, %v4142
        %v4172 = vpack.c.b16 %v4145, %v4144
        %v4173 = vpack.c.b16 %v4147, %v4146
        %v4174 = vpack.c.b16 %v4149, %v4148
        %v4175 = vpack.c.b16 %v4151, %v4150
        %v4176 = vpack.c.b16 %v4153, %v4152
        %v4177 = vpack.c.b16 %v4155, %v4154
        %v4178 = vpack.c.b16 %v4157, %v4156
        %v4179 = vpack.c.b16 %v4159, %v4158
        %v4180 = vpack.c.b16 %v4161, %v4160
        %v4181 = vpack.c.b16 %v4163, %v4162
        %v4182 = vpack.c.b16 %v4165, %v4164
        %v4183 = vpack.c.b16 %v4167, %v4166
        %4184 = vrot.lane.b32.xlu0 %v4168, 96
        %v4185 = vpop.permute.xlu0 %4184
        %4186 = vrot.lane.b32.xlu0 %v4169, 96
        %v4187 = vpop.permute.xlu0 %4186
        %4188 = vrot.lane.b32.xlu0 %v4170, 96
        %v4189 = vpop.permute.xlu0 %4188
        %4190 = vrot.lane.b32.xlu0 %v4171, 96
        %v4191 = vpop.permute.xlu0 %4190
        %4192 = vrot.lane.b32.xlu0 %v4172, 96
        %v4193 = vpop.permute.xlu0 %4192
        %4194 = vrot.lane.b32.xlu0 %v4173, 96
        %v4195 = vpop.permute.xlu0 %4194
        %4196 = vrot.lane.b32.xlu0 %v4174, 96
        %v4197 = vpop.permute.xlu0 %4196
        %4198 = vrot.lane.b32.xlu0 %v4175, 96
        %v4199 = vpop.permute.xlu0 %4198
        %4200 = vrot.lane.b32.xlu0 %v4176, 96
        %v4201 = vpop.permute.xlu0 %4200
        %4202 = vrot.lane.b32.xlu0 %v4177, 96
        %v4203 = vpop.permute.xlu0 %4202
        %4204 = vrot.lane.b32.xlu0 %v4178, 96
        %v4205 = vpop.permute.xlu0 %4204
        %4206 = vrot.lane.b32.xlu0 %v4179, 96
        %v4207 = vpop.permute.xlu0 %4206
        %4208 = vrot.lane.b32.xlu0 %v4180, 96
        %v4209 = vpop.permute.xlu0 %4208
        %4210 = vrot.lane.b32.xlu0 %v4181, 96
        %v4211 = vpop.permute.xlu0 %4210
        %4212 = vrot.lane.b32.xlu0 %v4182, 96
        %v4213 = vpop.permute.xlu0 %4212
        %4214 = vrot.lane.b32.xlu0 %v4183, 96
        %v4215 = vpop.permute.xlu0 %4214
        %v4216 = vunpack.c.l.b16 %v3483
        %v4217 = vunpack.c.l.b16 %v3486
        %v4218 = vunpack.c.l.b16 %v3490
        %v4219 = vunpack.c.l.b16 %v3493
        %v4220 = vunpack.c.l.b16 %v3497
        %v4221 = vunpack.c.l.b16 %v3500
        %v4222 = vunpack.c.l.b16 %v3504
        %v4223 = vunpack.c.l.b16 %v3507
        %v4224 = vunpack.c.l.b16 %v3511
        %v4225 = vunpack.c.l.b16 %v3514
        %v4226 = vunpack.c.l.b16 %v3518
        %v4227 = vunpack.c.l.b16 %v3521
        %v4228 = vunpack.c.l.b16 %v3525
        %v4229 = vunpack.c.l.b16 %v3528
        %v4230 = vunpack.c.l.b16 %v3532
        %v4231 = vunpack.c.l.b16 %v3535
        %v4232 = vunpack.c.l.b16 %v3539
        %v4233 = vunpack.c.l.b16 %v3542
        %v4234 = vunpack.c.l.b16 %v3546
        %v4235 = vunpack.c.l.b16 %v3549
        %v4236 = vunpack.c.l.b16 %v3553
        %v4237 = vunpack.c.l.b16 %v3556
        %v4238 = vunpack.c.l.b16 %v3560
        %v4239 = vunpack.c.l.b16 %v3563
        %v4240 = vunpack.c.l.b16 %v3567
        %v4241 = vunpack.c.l.b16 %v3570
        %v4242 = vunpack.c.l.b16 %v3574
        %v4243 = vunpack.c.l.b16 %v3577
        %v4244 = vunpack.c.l.b16 %v3581
        %v4245 = vunpack.c.l.b16 %v3584
        %v4246 = vunpack.c.l.b16 %v3588
        %v4247 = vunpack.c.l.b16 %v3591
        %v4248 = vpack.c.b16 %v4217, %v4216
        %v4249 = vpack.c.b16 %v4219, %v4218
        %v4250 = vpack.c.b16 %v4221, %v4220
        %v4251 = vpack.c.b16 %v4223, %v4222
        %v4252 = vpack.c.b16 %v4225, %v4224
        %v4253 = vpack.c.b16 %v4227, %v4226
        %v4254 = vpack.c.b16 %v4229, %v4228
        %v4255 = vpack.c.b16 %v4231, %v4230
        %v4256 = vpack.c.b16 %v4233, %v4232
        %v4257 = vpack.c.b16 %v4235, %v4234
        %v4258 = vpack.c.b16 %v4237, %v4236
        %v4259 = vpack.c.b16 %v4239, %v4238
        %v4260 = vpack.c.b16 %v4241, %v4240
        %v4261 = vpack.c.b16 %v4243, %v4242
        %v4262 = vpack.c.b16 %v4245, %v4244
        %v4263 = vpack.c.b16 %v4247, %v4246
        %vm4264 = vcmask 261120
        %v4267 = vsel %vm4264, %v3640, %v3705
        %v4270 = vsel %vm4264, %v3641, %v3707
        %v4273 = vsel %vm4264, %v3642, %v3709
        %v4276 = vsel %vm4264, %v3643, %v3711
        %v4279 = vsel %vm4264, %v3644, %v3713
        %v4282 = vsel %vm4264, %v3645, %v3715
        %v4285 = vsel %vm4264, %v3646, %v3717
        %v4288 = vsel %vm4264, %v3647, %v3719
        %v4291 = vsel %vm4264, %v3648, %v3721
        %v4294 = vsel %vm4264, %v3649, %v3723
        %v4297 = vsel %vm4264, %v3650, %v3725
        %v4300 = vsel %vm4264, %v3651, %v3727
        %v4303 = vsel %vm4264, %v3652, %v3729
        %v4306 = vsel %vm4264, %v3653, %v3731
        %v4309 = vsel %vm4264, %v3654, %v3733
        %v4312 = vsel %vm4264, %v3655, %v3735
        %vm4313 = vcmask 523264
        %v4315 = vsel %vm4313, %v4267, %v3785
        %v4317 = vsel %vm4313, %v4270, %v3787
        %v4319 = vsel %vm4313, %v4273, %v3789
        %v4321 = vsel %vm4313, %v4276, %v3791
        %v4323 = vsel %vm4313, %v4279, %v3793
        %v4325 = vsel %vm4313, %v4282, %v3795
        %v4327 = vsel %vm4313, %v4285, %v3797
        %v4329 = vsel %vm4313, %v4288, %v3799
        %v4331 = vsel %vm4313, %v4291, %v3801
        %v4333 = vsel %vm4313, %v4294, %v3803
        %v4335 = vsel %vm4313, %v4297, %v3805
        %v4337 = vsel %vm4313, %v4300, %v3807
        %v4339 = vsel %vm4313, %v4303, %v3809
        %v4341 = vsel %vm4313, %v4306, %v3811
        %v4343 = vsel %vm4313, %v4309, %v3813
        %v4345 = vsel %vm4313, %v4312, %v3815
        %vm4346 = vcmask 785408
        %v4348 = vsel %vm4346, %v4315, %v3881
        %v4351 = vsel %vm4346, %v4317, %v3883
        %v4354 = vsel %vm4346, %v4319, %v3885
        %v4357 = vsel %vm4346, %v4321, %v3887
        %v4360 = vsel %vm4346, %v4323, %v3889
        %v4363 = vsel %vm4346, %v4325, %v3891
        %v4366 = vsel %vm4346, %v4327, %v3893
        %v4369 = vsel %vm4346, %v4329, %v3895
        %v4372 = vsel %vm4346, %v4331, %v3897
        %v4375 = vsel %vm4346, %v4333, %v3899
        %v4378 = vsel %vm4346, %v4335, %v3901
        %v4381 = vsel %vm4346, %v4337, %v3903
        %v4384 = vsel %vm4346, %v4339, %v3905
        %v4387 = vsel %vm4346, %v4341, %v3907
        %v4390 = vsel %vm4346, %v4343, %v3909
        %v4393 = vsel %vm4346, %v4345, %v3911
        %v4397 = vsel %vm4264, %v3944, %v4009
        %v4400 = vsel %vm4264, %v3945, %v4011
        %v4403 = vsel %vm4264, %v3946, %v4013
        %v4406 = vsel %vm4264, %v3947, %v4015
        %v4409 = vsel %vm4264, %v3948, %v4017
        %v4412 = vsel %vm4264, %v3949, %v4019
        %v4415 = vsel %vm4264, %v3950, %v4021
        %v4418 = vsel %vm4264, %v3951, %v4023
        %v4421 = vsel %vm4264, %v3952, %v4025
        %v4424 = vsel %vm4264, %v3953, %v4027
        %v4427 = vsel %vm4264, %v3954, %v4029
        %v4430 = vsel %vm4264, %v3955, %v4031
        %v4433 = vsel %vm4264, %v3956, %v4033
        %v4436 = vsel %vm4264, %v3957, %v4035
        %v4439 = vsel %vm4264, %v3958, %v4037
        %v4442 = vsel %vm4264, %v3959, %v4039
        %v4444 = vsel %vm4313, %v4397, %v4105
        %v4446 = vsel %vm4313, %v4400, %v4107
        %v4448 = vsel %vm4313, %v4403, %v4109
        %v4450 = vsel %vm4313, %v4406, %v4111
        %v4452 = vsel %vm4313, %v4409, %v4113
        %v4454 = vsel %vm4313, %v4412, %v4115
        %v4456 = vsel %vm4313, %v4415, %v4117
        %v4458 = vsel %vm4313, %v4418, %v4119
        %v4460 = vsel %vm4313, %v4421, %v4121
        %v4462 = vsel %vm4313, %v4424, %v4123
        %v4464 = vsel %vm4313, %v4427, %v4125
        %v4466 = vsel %vm4313, %v4430, %v4127
        %v4468 = vsel %vm4313, %v4433, %v4129
        %v4470 = vsel %vm4313, %v4436, %v4131
        %v4472 = vsel %vm4313, %v4439, %v4133
        %v4474 = vsel %vm4313, %v4442, %v4135
        %v4476 = vsel %vm4346, %v4444, %v4185
        %v4479 = vsel %vm4346, %v4446, %v4187
        %v4482 = vsel %vm4346, %v4448, %v4189
        %v4485 = vsel %vm4346, %v4450, %v4191
        %v4488 = vsel %vm4346, %v4452, %v4193
        %v4491 = vsel %vm4346, %v4454, %v4195
        %v4494 = vsel %vm4346, %v4456, %v4197
        %v4497 = vsel %vm4346, %v4458, %v4199
        %v4500 = vsel %vm4346, %v4460, %v4201
        %v4503 = vsel %vm4346, %v4462, %v4203
        %v4506 = vsel %vm4346, %v4464, %v4205
        %v4509 = vsel %vm4346, %v4466, %v4207
        %v4512 = vsel %vm4346, %v4468, %v4209
        %v4515 = vsel %vm4346, %v4470, %v4211
        %v4518 = vsel %vm4346, %v4472, %v4213
        %v4521 = vsel %vm4346, %v4474, %v4215
        %v4523 = vld [vmem:[%s5] sm:$0xf]
        %v4524 = vld [vmem:[%s5 + $0x4] sm:$0xf]
        %v4525 = vld [vmem:[%s5 + $0x8] sm:$0xf]
        %v4526 = vld [vmem:[%s5 + $0xc] sm:$0xf]
        %v4527 = vld [vmem:[%s5 + $0x10] sm:$0xf]
        %v4528 = vld [vmem:[%s5 + $0x14] sm:$0xf]
        %v4529 = vld [vmem:[%s5 + $0x18] sm:$0xf]
        %v4530 = vld [vmem:[%s5 + $0x1c] sm:$0xf]
        %v4531 = vld [vmem:[%s5 + $0x20] sm:$0xf]
        %v4532 = vld [vmem:[%s5 + $0x24] sm:$0xf]
        %v4533 = vld [vmem:[%s5 + $0x28] sm:$0xf]
        %v4534 = vld [vmem:[%s5 + $0x2c] sm:$0xf]
        %v4535 = vld [vmem:[%s5 + $0x30] sm:$0xf]
        %v4536 = vld [vmem:[%s5 + $0x34] sm:$0xf]
        %v4537 = vld [vmem:[%s5 + $0x38] sm:$0xf]
        %v4538 = vld [vmem:[%s5 + $0x3c] sm:$0xf]
        %v4539 = vld [vmem:[%s5 + $0x40] sm:$0xf]
        %v4540 = vld [vmem:[%s5 + $0x44] sm:$0xf]
        %v4541 = vld [vmem:[%s5 + $0x48] sm:$0xf]
        %v4542 = vld [vmem:[%s5 + $0x4c] sm:$0xf]
        %v4543 = vld [vmem:[%s5 + $0x50] sm:$0xf]
        %v4544 = vld [vmem:[%s5 + $0x54] sm:$0xf]
        %v4545 = vld [vmem:[%s5 + $0x58] sm:$0xf]
        %v4546 = vld [vmem:[%s5 + $0x5c] sm:$0xf]
        %v4547 = vld [vmem:[%s5 + $0x60] sm:$0xf]
        %v4548 = vld [vmem:[%s5 + $0x64] sm:$0xf]
        %v4549 = vld [vmem:[%s5 + $0x68] sm:$0xf]
        %v4550 = vld [vmem:[%s5 + $0x6c] sm:$0xf]
        %v4551 = vld [vmem:[%s5 + $0x70] sm:$0xf]
        %v4552 = vld [vmem:[%s5 + $0x74] sm:$0xf]
        %v4553 = vld [vmem:[%s5 + $0x78] sm:$0xf]
        %v4554 = vld [vmem:[%s5 + $0x7c] sm:$0xf]
        %v4555 = vld [vmem:[%s5 + $0x80] sm:$0xf]
        %v4556 = vld [vmem:[%s5 + $0x84] sm:$0xf]
        %v4557 = vld [vmem:[%s5 + $0x88] sm:$0xf]
        %v4558 = vld [vmem:[%s5 + $0x8c] sm:$0xf]
        %v4559 = vld [vmem:[%s6] sm:$0x1]
        %v4561 = vlaneseq
        %v4562 = vshrl.u32 %v4561, 7
        %v4563 = vsub.s32 0, %v4562
        %v4564 = vrot.slane %v4559, %v4563
        %v4602 = vunpack.c.l.b16 %v4523
        %v4603 = vunpack.c.l.b16 %v4524
        %v4604 = vunpack.c.l.b16 %v4525
        %v4605 = vunpack.c.l.b16 %v4526
        %v4606 = vunpack.c.l.b16 %v4527
        %v4607 = vunpack.c.l.b16 %v4528
        %v4608 = vunpack.c.l.b16 %v4529
        %v4609 = vunpack.c.l.b16 %v4530
        %v4610 = vunpack.c.l.b16 %v4531
        %v4611 = vunpack.c.l.b16 %v4532
        %v4612 = vunpack.c.l.b16 %v4533
        %v4613 = vunpack.c.l.b16 %v4534
        %v4614 = vunpack.c.l.b16 %v4535
        %v4615 = vunpack.c.l.b16 %v4536
        %v4616 = vunpack.c.l.b16 %v4537
        %v4617 = vunpack.c.l.b16 %v4538
        %v4618 = vunpack.c.l.b16 %v4539
        %v4619 = vunpack.c.l.b16 %v4540
        %v4620 = vunpack.c.l.b16 %v4541
        %v4621 = vunpack.c.l.b16 %v4542
        %v4622 = vunpack.c.l.b16 %v4543
        %v4623 = vunpack.c.l.b16 %v4544
        %v4624 = vunpack.c.l.b16 %v4545
        %v4625 = vunpack.c.l.b16 %v4546
        %v4626 = vunpack.c.l.b16 %v4547
        %v4627 = vunpack.c.l.b16 %v4548
        %v4628 = vunpack.c.l.b16 %v4549
        %v4629 = vunpack.c.l.b16 %v4550
        %v4630 = vunpack.c.l.b16 %v4551
        %v4631 = vunpack.c.l.b16 %v4552
        %v4632 = vunpack.c.l.b16 %v4553
        %v4633 = vunpack.c.l.b16 %v4554
        %v4634 = vunpack.c.l.b16 %v4555
        %v4635 = vunpack.c.l.b16 %v4556
        %v4636 = vunpack.c.l.b16 %v4557
        %v4637 = vunpack.c.l.b16 %v4558
        %v4638 = vpack.c.b16 %v4603, %v4602
        %v4639 = vpack.c.b16 %v4605, %v4604
        %v4640 = vpack.c.b16 %v4607, %v4606
        %v4641 = vpack.c.b16 %v4609, %v4608
        %v4642 = vpack.c.b16 %v4611, %v4610
        %v4643 = vpack.c.b16 %v4613, %v4612
        %v4644 = vpack.c.b16 %v4615, %v4614
        %v4645 = vpack.c.b16 %v4617, %v4616
        %v4646 = vpack.c.b16 %v4619, %v4618
        %v4647 = vpack.c.b16 %v4621, %v4620
        %v4648 = vpack.c.b16 %v4623, %v4622
        %v4649 = vpack.c.b16 %v4625, %v4624
        %v4650 = vpack.c.b16 %v4627, %v4626
        %v4651 = vpack.c.b16 %v4629, %v4628
        %v4652 = vpack.c.b16 %v4631, %v4630
        %v4653 = vpack.c.b16 %v4633, %v4632
        %v4654 = vpack.c.b16 %v4635, %v4634
        %v4655 = vpack.c.b16 %v4637, %v4636
        %v4675 = vsel %vm4264, %v4248, 0
        %v4678 = vsel %vm4264, %v4249, 0
        %v4681 = vsel %vm4264, %v4250, 0
        %v4684 = vsel %vm4264, %v4251, 0
        %v4687 = vsel %vm4264, %v4252, 0
        %v4690 = vsel %vm4264, %v4253, 0
        %v4693 = vsel %vm4264, %v4254, 0
        %v4696 = vsel %vm4264, %v4255, 0
        %v4699 = vsel %vm4264, %v4256, 0
        %v4702 = vsel %vm4264, %v4257, 0
        %v4705 = vsel %vm4264, %v4258, 0
        %v4708 = vsel %vm4264, %v4259, 0
        %v4711 = vsel %vm4264, %v4260, 0
        %v4714 = vsel %vm4264, %v4261, 0
        %v4717 = vsel %vm4264, %v4262, 0
        %v4720 = vsel %vm4264, %v4263, 0
        %4722 = vmatprep.subr.bf16.mxu0 0
        %4723 = vmatpush1.bf16.msra.mxu0 %v4645
        %4724 = vmatprep.subr.bf16.mxu0 0
        %4725 = vmatpush1.bf16.msra.mxu0 %v4644
        %4726 = vmatprep.subr.bf16.mxu0 0
        %4727 = vmatpush1.bf16.msra.mxu0 %v4643
        %4728 = vmatprep.subr.bf16.mxu0 0
        %4729 = vmatpush1.bf16.msra.mxu0 %v4642
        %4730 = vmatprep.subr.bf16.mxu0 0
        %4731 = vmatpush1.bf16.msra.mxu0 %v4641
        %4732 = vmatprep.subr.bf16.mxu0 0
        %4733 = vmatpush1.bf16.msra.mxu0 %v4640
        %4734 = vmatprep.subr.bf16.mxu0 0
        %4735 = vmatpush1.bf16.msra.mxu0 %v4639
        %4736 = vmatprep.subr.bf16.mxu0 0
        %4737 = vmatpush1.bf16.msra.mxu0 %v4638
        %4738 = vmatprep.subr.bf16.mxu0 0
        %4739 = vmatpush2.bf16.msra.mxu0 %v4653
        %4740 = vmatprep.subr.bf16.mxu0 0
        %4741 = vmatpush2.bf16.msra.mxu0 %v4652
        %4742 = vmatprep.subr.bf16.mxu0 0
        %4743 = vmatpush2.bf16.msra.mxu0 %v4651
        %4744 = vmatprep.subr.bf16.mxu0 0
        %4745 = vmatpush2.bf16.msra.mxu0 %v4650
        %4746 = vmatprep.subr.bf16.mxu0 0
        %4747 = vmatpush2.bf16.msra.mxu0 %v4649
        %4748 = vmatprep.subr.bf16.mxu0 0
        %4749 = vmatpush2.bf16.msra.mxu0 %v4648
        %4750 = vmatprep.subr.bf16.mxu0 0
        %4751 = vmatpush2.bf16.msra.mxu0 %v4647
        %4752 = vmatprep.subr.bf16.mxu0 0
        %4753 = vmatpush2.bf16.msra.mxu0 %v4646
        %4754 = vmatprep.mubr.bf16.mxu0 %v4476
        %4755 = vmatmul.mubr.bf16.gmra.mxu0 %v4348
        %v4756 = vpop.f32.mrf.mxu0
        %v4757 = vadd.f32 %v4564, %v4756
        %v4758 = vpop.f32.mrf.mxu0
        %v4759 = vpop.f32.mrf.mxu0
        %v4760 = vadd.f32 %v4564, %v4759
        %v4761 = vpop.f32.mrf.mxu0
        %4762 = vmatprep.mubr.bf16.mxu0 %v4479
        %4763 = vmatmul.mubr.bf16.gmra.mxu0 %v4351
        %v4764 = vpop.f32.mrf.mxu0
        %v4765 = vadd.f32 %v4564, %v4764
        %v4766 = vpop.f32.mrf.mxu0
        %v4767 = vpop.f32.mrf.mxu0
        %v4768 = vadd.f32 %v4564, %v4767
        %v4769 = vpop.f32.mrf.mxu0
        %4770 = vmatprep.mubr.bf16.mxu0 %v4482
        %4771 = vmatmul.mubr.bf16.gmra.mxu0 %v4354
        %v4772 = vpop.f32.mrf.mxu0
        %v4773 = vadd.f32 %v4564, %v4772
        %v4774 = vpop.f32.mrf.mxu0
        %v4775 = vpop.f32.mrf.mxu0
        %v4776 = vadd.f32 %v4564, %v4775
        %v4777 = vpop.f32.mrf.mxu0
        %4778 = vmatprep.mubr.bf16.mxu0 %v4485
        %4779 = vmatmul.mubr.bf16.gmra.mxu0 %v4357
        %v4780 = vpop.f32.mrf.mxu0
        %v4781 = vadd.f32 %v4564, %v4780
        %v4782 = vpop.f32.mrf.mxu0
        %v4783 = vpop.f32.mrf.mxu0
        %v4784 = vadd.f32 %v4564, %v4783
        %v4785 = vpop.f32.mrf.mxu0
        %4786 = vmatprep.mubr.bf16.mxu0 %v4488
        %4787 = vmatmul.mubr.bf16.gmra.mxu0 %v4360
        %v4788 = vpop.f32.mrf.mxu0
        %v4789 = vadd.f32 %v4564, %v4788
        %v4790 = vpop.f32.mrf.mxu0
        %v4791 = vpop.f32.mrf.mxu0
        %v4792 = vadd.f32 %v4564, %v4791
        %v4793 = vpop.f32.mrf.mxu0
        %4794 = vmatprep.mubr.bf16.mxu0 %v4491
        %4795 = vmatmul.mubr.bf16.gmra.mxu0 %v4363
        %v4796 = vpop.f32.mrf.mxu0
        %v4797 = vadd.f32 %v4564, %v4796
        %v4798 = vpop.f32.mrf.mxu0
        %v4799 = vpop.f32.mrf.mxu0
        %v4800 = vadd.f32 %v4564, %v4799
        %v4801 = vpop.f32.mrf.mxu0
        %4802 = vmatprep.mubr.bf16.mxu0 %v4494
        %4803 = vmatmul.mubr.bf16.gmra.mxu0 %v4366
        %v4804 = vpop.f32.mrf.mxu0
        %v4805 = vadd.f32 %v4564, %v4804
        %v4806 = vpop.f32.mrf.mxu0
        %v4807 = vpop.f32.mrf.mxu0
        %v4808 = vadd.f32 %v4564, %v4807
        %v4809 = vpop.f32.mrf.mxu0
        %4810 = vmatprep.mubr.bf16.mxu0 %v4497
        %4811 = vmatmul.mubr.bf16.gmra.mxu0 %v4369
        %v4812 = vpop.f32.mrf.mxu0
        %v4813 = vadd.f32 %v4564, %v4812
        %v4814 = vpop.f32.mrf.mxu0
        %v4815 = vpop.f32.mrf.mxu0
        %v4816 = vadd.f32 %v4564, %v4815
        %v4817 = vpop.f32.mrf.mxu0
        %4818 = vmatprep.mubr.bf16.mxu0 %v4500
        %4819 = vmatmul.mubr.bf16.gmra.mxu0 %v4372
        %v4820 = vpop.f32.mrf.mxu0
        %v4821 = vadd.f32 %v4564, %v4820
        %v4822 = vpop.f32.mrf.mxu0
        %v4823 = vpop.f32.mrf.mxu0
        %v4824 = vadd.f32 %v4564, %v4823
        %v4825 = vpop.f32.mrf.mxu0
        %4826 = vmatprep.mubr.bf16.mxu0 %v4503
        %4827 = vmatmul.mubr.bf16.gmra.mxu0 %v4375
        %v4828 = vpop.f32.mrf.mxu0
        %v4829 = vadd.f32 %v4564, %v4828
        %v4830 = vpop.f32.mrf.mxu0
        %v4831 = vpop.f32.mrf.mxu0
        %v4832 = vadd.f32 %v4564, %v4831
        %v4833 = vpop.f32.mrf.mxu0
        %4834 = vmatprep.mubr.bf16.mxu0 %v4506
        %4835 = vmatmul.mubr.bf16.gmra.mxu0 %v4378
        %v4836 = vpop.f32.mrf.mxu0
        %v4837 = vadd.f32 %v4564, %v4836
        %v4838 = vpop.f32.mrf.mxu0
        %v4839 = vpop.f32.mrf.mxu0
        %v4840 = vadd.f32 %v4564, %v4839
        %v4841 = vpop.f32.mrf.mxu0
        %4842 = vmatprep.mubr.bf16.mxu0 %v4509
        %4843 = vmatmul.mubr.bf16.gmra.mxu0 %v4381
        %v4844 = vpop.f32.mrf.mxu0
        %v4845 = vadd.f32 %v4564, %v4844
        %v4846 = vpop.f32.mrf.mxu0
        %v4847 = vpop.f32.mrf.mxu0
        %v4848 = vadd.f32 %v4564, %v4847
        %v4849 = vpop.f32.mrf.mxu0
        %4850 = vmatprep.mubr.bf16.mxu0 %v4512
        %4851 = vmatmul.mubr.bf16.gmra.mxu0 %v4384
        %v4852 = vpop.f32.mrf.mxu0
        %v4853 = vadd.f32 %v4564, %v4852
        %v4854 = vpop.f32.mrf.mxu0
        %v4855 = vpop.f32.mrf.mxu0
        %v4856 = vadd.f32 %v4564, %v4855
        %v4857 = vpop.f32.mrf.mxu0
        %4858 = vmatprep.mubr.bf16.mxu0 %v4515
        %4859 = vmatmul.mubr.bf16.gmra.mxu0 %v4387
        %v4860 = vpop.f32.mrf.mxu0
        %v4861 = vadd.f32 %v4564, %v4860
        %v4862 = vpop.f32.mrf.mxu0
        %v4863 = vpop.f32.mrf.mxu0
        %v4864 = vadd.f32 %v4564, %v4863
        %v4865 = vpop.f32.mrf.mxu0
        %4866 = vmatprep.mubr.bf16.mxu0 %v4518
        %4867 = vmatmul.mubr.bf16.gmra.mxu0 %v4390
        %v4868 = vpop.f32.mrf.mxu0
        %v4869 = vadd.f32 %v4564, %v4868
        %v4870 = vpop.f32.mrf.mxu0
        %v4871 = vpop.f32.mrf.mxu0
        %v4872 = vadd.f32 %v4564, %v4871
        %v4873 = vpop.f32.mrf.mxu0
        %4874 = vmatprep.mubr.bf16.mxu0 %v4521
        %4875 = vmatmul.mubr.bf16.gmra.mxu0 %v4393
        %v4876 = vpop.f32.mrf.mxu0
        %v4877 = vadd.f32 %v4564, %v4876
        %v4878 = vpop.f32.mrf.mxu0
        %v4879 = vpop.f32.mrf.mxu0
        %v4880 = vadd.f32 %v4564, %v4879
        %v4881 = vpop.f32.mrf.mxu0
        %4882 = vdwg.mxu0
        %4883 = vmatprep.subr.bf16.mxu0 0
        %4884 = vmatpush1.bf16.msra.mxu0 0
        %4885 = vmatprep.subr.bf16.mxu0 0
        %4886 = vmatpush1.bf16.msra.mxu0 0
        %4887 = vmatprep.subr.bf16.mxu0 0
        %4888 = vmatpush1.bf16.msra.mxu0 0
        %4889 = vmatprep.subr.bf16.mxu0 0
        %4890 = vmatpush1.bf16.msra.mxu0 0
        %4891 = vmatprep.subr.bf16.mxu0 0
        %4892 = vmatpush1.bf16.msra.mxu0 0
        %4893 = vmatprep.subr.bf16.mxu0 0
        %4894 = vmatpush1.bf16.msra.mxu0 0
        %4895 = vmatprep.subr.bf16.mxu0 0
        %4896 = vmatpush1.bf16.msra.mxu0 %v4655
        %4897 = vmatprep.subr.bf16.mxu0 0
        %4898 = vmatpush1.bf16.msra.mxu0 %v4654
        %4899 = vmatprep.subr.bf16.mxu0 0
        %4900 = vmatpush2.bf16.msra.mxu0 0
        %4901 = vmatprep.subr.bf16.mxu0 0
        %4902 = vmatpush2.bf16.msra.mxu0 0
        %4903 = vmatprep.subr.bf16.mxu0 0
        %4904 = vmatpush2.bf16.msra.mxu0 0
        %4905 = vmatprep.subr.bf16.mxu0 0
        %4906 = vmatpush2.bf16.msra.mxu0 0
        %4907 = vmatprep.subr.bf16.mxu0 0
        %4908 = vmatpush2.bf16.msra.mxu0 0
        %4909 = vmatprep.subr.bf16.mxu0 0
        %4910 = vmatpush2.bf16.msra.mxu0 0
        %4911 = vmatprep.subr.bf16.mxu0 0
        %4912 = vmatpush2.bf16.msra.mxu0 0
        %4913 = vmatprep.subr.bf16.mxu0 0
        %4914 = vmatpush2.bf16.msra.mxu0 0
        %4915 = vmatprep.mubr.bf16.mxu0 0
        %4916 = vmatmul.mubr.bf16.gmra.mxu0 %v4675
        %v4917 = vpop.f32.mrf.mxu0
        %v4918 = vadd.f32 %v4757, %v4917
        %v4919 = vpop.f32.mrf.mxu0
        %v4920 = vpop.f32.mrf.mxu0
        %v4921 = vadd.f32 %v4760, %v4920
        %v4922 = vpop.f32.mrf.mxu0
        %4923 = vmatprep.mubr.bf16.mxu0 0
        %4924 = vmatmul.mubr.bf16.gmra.mxu0 %v4678
        %v4925 = vpop.f32.mrf.mxu0
        %v4926 = vadd.f32 %v4765, %v4925
        %v4927 = vpop.f32.mrf.mxu0
        %v4928 = vpop.f32.mrf.mxu0
        %v4929 = vadd.f32 %v4768, %v4928
        %v4930 = vpop.f32.mrf.mxu0
        %4931 = vmatprep.mubr.bf16.mxu0 0
        %4932 = vmatmul.mubr.bf16.gmra.mxu0 %v4681
        %v4933 = vpop.f32.mrf.mxu0
        %v4934 = vadd.f32 %v4773, %v4933
        %v4935 = vpop.f32.mrf.mxu0
        %v4936 = vpop.f32.mrf.mxu0
        %v4937 = vadd.f32 %v4776, %v4936
        %v4938 = vpop.f32.mrf.mxu0
        %4939 = vmatprep.mubr.bf16.mxu0 0
        %4940 = vmatmul.mubr.bf16.gmra.mxu0 %v4684
        %v4941 = vpop.f32.mrf.mxu0
        %v4942 = vadd.f32 %v4781, %v4941
        %v4943 = vpop.f32.mrf.mxu0
        %v4944 = vpop.f32.mrf.mxu0
        %v4945 = vadd.f32 %v4784, %v4944
        %v4946 = vpop.f32.mrf.mxu0
        %4947 = vmatprep.mubr.bf16.mxu0 0
        %4948 = vmatmul.mubr.bf16.gmra.mxu0 %v4687
        %v4949 = vpop.f32.mrf.mxu0
        %v4950 = vadd.f32 %v4789, %v4949
        %v4951 = vpop.f32.mrf.mxu0
        %v4952 = vpop.f32.mrf.mxu0
        %v4953 = vadd.f32 %v4792, %v4952
        %v4954 = vpop.f32.mrf.mxu0
        %4955 = vmatprep.mubr.bf16.mxu0 0
        %4956 = vmatmul.mubr.bf16.gmra.mxu0 %v4690
        %v4957 = vpop.f32.mrf.mxu0
        %v4958 = vadd.f32 %v4797, %v4957
        %v4959 = vpop.f32.mrf.mxu0
        %v4960 = vpop.f32.mrf.mxu0
        %v4961 = vadd.f32 %v4800, %v4960
        %v4962 = vpop.f32.mrf.mxu0
        %4963 = vmatprep.mubr.bf16.mxu0 0
        %4964 = vmatmul.mubr.bf16.gmra.mxu0 %v4693
        %v4965 = vpop.f32.mrf.mxu0
        %v4966 = vadd.f32 %v4805, %v4965
        %v4967 = vpop.f32.mrf.mxu0
        %v4968 = vpop.f32.mrf.mxu0
        %v4969 = vadd.f32 %v4808, %v4968
        %v4970 = vpop.f32.mrf.mxu0
        %4971 = vmatprep.mubr.bf16.mxu0 0
        %4972 = vmatmul.mubr.bf16.gmra.mxu0 %v4696
        %v4973 = vpop.f32.mrf.mxu0
        %v4974 = vadd.f32 %v4813, %v4973
        %v4975 = vpop.f32.mrf.mxu0
        %v4976 = vpop.f32.mrf.mxu0
        %v4977 = vadd.f32 %v4816, %v4976
        %v4978 = vpop.f32.mrf.mxu0
        %4979 = vmatprep.mubr.bf16.mxu0 0
        %4980 = vmatmul.mubr.bf16.gmra.mxu0 %v4699
        %v4981 = vpop.f32.mrf.mxu0
        %v4982 = vadd.f32 %v4821, %v4981
        %v4983 = vpop.f32.mrf.mxu0
        %v4984 = vpop.f32.mrf.mxu0
        %v4985 = vadd.f32 %v4824, %v4984
        %v4986 = vpop.f32.mrf.mxu0
        %4987 = vmatprep.mubr.bf16.mxu0 0
        %4988 = vmatmul.mubr.bf16.gmra.mxu0 %v4702
        %v4989 = vpop.f32.mrf.mxu0
        %v4990 = vadd.f32 %v4829, %v4989
        %v4991 = vpop.f32.mrf.mxu0
        %v4992 = vpop.f32.mrf.mxu0
        %v4993 = vadd.f32 %v4832, %v4992
        %v4994 = vpop.f32.mrf.mxu0
        %4995 = vmatprep.mubr.bf16.mxu0 0
        %4996 = vmatmul.mubr.bf16.gmra.mxu0 %v4705
        %v4997 = vpop.f32.mrf.mxu0
        %v4998 = vadd.f32 %v4837, %v4997
        %v4999 = vpop.f32.mrf.mxu0
        %v5000 = vpop.f32.mrf.mxu0
        %v5001 = vadd.f32 %v4840, %v5000
        %v5002 = vpop.f32.mrf.mxu0
        %5003 = vmatprep.mubr.bf16.mxu0 0
        %5004 = vmatmul.mubr.bf16.gmra.mxu0 %v4708
        %v5005 = vpop.f32.mrf.mxu0
        %v5006 = vadd.f32 %v4845, %v5005
        %v5007 = vpop.f32.mrf.mxu0
        %v5008 = vpop.f32.mrf.mxu0
        %v5009 = vadd.f32 %v4848, %v5008
        %v5010 = vpop.f32.mrf.mxu0
        %5011 = vmatprep.mubr.bf16.mxu0 0
        %5012 = vmatmul.mubr.bf16.gmra.mxu0 %v4711
        %v5013 = vpop.f32.mrf.mxu0
        %v5014 = vadd.f32 %v4853, %v5013
        %v5015 = vpop.f32.mrf.mxu0
        %v5016 = vpop.f32.mrf.mxu0
        %v5017 = vadd.f32 %v4856, %v5016
        %v5018 = vpop.f32.mrf.mxu0
        %5019 = vmatprep.mubr.bf16.mxu0 0
        %5020 = vmatmul.mubr.bf16.gmra.mxu0 %v4714
        %v5021 = vpop.f32.mrf.mxu0
        %v5022 = vadd.f32 %v4861, %v5021
        %v5023 = vpop.f32.mrf.mxu0
        %v5024 = vpop.f32.mrf.mxu0
        %v5025 = vadd.f32 %v4864, %v5024
        %v5026 = vpop.f32.mrf.mxu0
        %5027 = vmatprep.mubr.bf16.mxu0 0
        %5028 = vmatmul.mubr.bf16.gmra.mxu0 %v4717
        %v5029 = vpop.f32.mrf.mxu0
        %v5030 = vadd.f32 %v4869, %v5029
        %v5031 = vpop.f32.mrf.mxu0
        %v5032 = vpop.f32.mrf.mxu0
        %v5033 = vadd.f32 %v4872, %v5032
        %v5034 = vpop.f32.mrf.mxu0
        %5035 = vmatprep.mubr.bf16.mxu0 0
        %5036 = vmatmul.mubr.bf16.gmra.mxu0 %v4720
        %v5037 = vpop.f32.mrf.mxu0
        %v5038 = vadd.f32 %v4877, %v5037
        %v5039 = vpop.f32.mrf.mxu0
        %v5040 = vpop.f32.mrf.mxu0
        %v5041 = vadd.f32 %v4880, %v5040
        %v5042 = vpop.f32.mrf.mxu0
        %5043 = vdwg.mxu0
        %v5044 = vmax.f32 %v4918, 0.0
        %v5045 = vmax.f32 %v4921, 0.0
        %v5046 = vmax.f32 %v4926, 0.0
        %v5047 = vmax.f32 %v4929, 0.0
        %v5048 = vmax.f32 %v4934, 0.0
        %v5049 = vmax.f32 %v4937, 0.0
        %v5050 = vmax.f32 %v4942, 0.0
        %v5051 = vmax.f32 %v4945, 0.0
        %v5052 = vmax.f32 %v4950, 0.0
        %v5053 = vmax.f32 %v4953, 0.0
        %v5054 = vmax.f32 %v4958, 0.0
        %v5055 = vmax.f32 %v4961, 0.0
        %v5056 = vmax.f32 %v4966, 0.0
        %v5057 = vmax.f32 %v4969, 0.0
        %v5058 = vmax.f32 %v4974, 0.0
        %v5059 = vmax.f32 %v4977, 0.0
        %v5060 = vmax.f32 %v4982, 0.0
        %v5061 = vmax.f32 %v4985, 0.0
        %v5062 = vmax.f32 %v4990, 0.0
        %v5063 = vmax.f32 %v4993, 0.0
        %v5064 = vmax.f32 %v4998, 0.0
        %v5065 = vmax.f32 %v5001, 0.0
        %v5066 = vmax.f32 %v5006, 0.0
        %v5067 = vmax.f32 %v5009, 0.0
        %v5068 = vmax.f32 %v5014, 0.0
        %v5069 = vmax.f32 %v5017, 0.0
        %v5070 = vmax.f32 %v5022, 0.0
        %v5071 = vmax.f32 %v5025, 0.0
        %v5072 = vmax.f32 %v5030, 0.0
        %v5073 = vmax.f32 %v5033, 0.0
        %v5074 = vmax.f32 %v5038, 0.0
        %v5075 = vmax.f32 %v5041, 0.0
        %v5076 = vpack.c.bf16 %v5045, %v5044
        %v5077 = vpack.c.bf16 %v5047, %v5046
        %v5078 = vpack.c.bf16 %v5049, %v5048
        %v5079 = vpack.c.bf16 %v5051, %v5050
        %v5080 = vpack.c.bf16 %v5053, %v5052
        %v5081 = vpack.c.bf16 %v5055, %v5054
        %v5082 = vpack.c.bf16 %v5057, %v5056
        %v5083 = vpack.c.bf16 %v5059, %v5058
        %v5084 = vpack.c.bf16 %v5061, %v5060
        %v5085 = vpack.c.bf16 %v5063, %v5062
        %v5086 = vpack.c.bf16 %v5065, %v5064
        %v5087 = vpack.c.bf16 %v5067, %v5066
        %v5088 = vpack.c.bf16 %v5069, %v5068
        %v5089 = vpack.c.bf16 %v5071, %v5070
        %v5090 = vpack.c.bf16 %v5073, %v5072
        %v5091 = vpack.c.bf16 %v5075, %v5074
        %v5092 = vld [vmem:[%s7] sm:$0xf]
        %v5093 = vld [vmem:[%s7 + $0x4] sm:$0xf]
        %v5094 = vld [vmem:[%s7 + $0x8] sm:$0xf]
        %v5095 = vld [vmem:[%s7 + $0xc] sm:$0xf]
        %v5096 = vld [vmem:[%s8] sm:$0x1]
        %v5098 = vlaneseq
        %v5099 = vshrl.u32 %v5098, 7
        %v5100 = vsub.s32 0, %v5099
        %v5101 = vrot.slane %v5096, %v5100
        %v5107 = vunpack.c.l.b16 %v5092
        %v5108 = vunpack.c.l.b16 %v5093
        %v5109 = vunpack.c.l.b16 %v5094
        %v5110 = vunpack.c.l.b16 %v5095
        %v5111 = vpack.c.b16 %v5108, %v5107
        %v5112 = vpack.c.b16 %v5110, %v5109
        %v5116 = vsel %vm4264, %v5076, 0
        %v5119 = vsel %vm4264, %v5077, 0
        %v5122 = vsel %vm4264, %v5078, 0
        %v5125 = vsel %vm4264, %v5079, 0
        %v5128 = vsel %vm4264, %v5080, 0
        %v5131 = vsel %vm4264, %v5081, 0
        %v5134 = vsel %vm4264, %v5082, 0
        %v5137 = vsel %vm4264, %v5083, 0
        %v5140 = vsel %vm4264, %v5084, 0
        %v5143 = vsel %vm4264, %v5085, 0
        %v5146 = vsel %vm4264, %v5086, 0
        %v5149 = vsel %vm4264, %v5087, 0
        %v5152 = vsel %vm4264, %v5088, 0
        %v5155 = vsel %vm4264, %v5089, 0
        %v5158 = vsel %vm4264, %v5090, 0
        %v5161 = vsel %vm4264, %v5091, 0
        %5163 = vmatprep.subr.bf16.mxu0 0
        %5164 = vmatpush1.bf16.msra.mxu0 0
        %5165 = vmatprep.subr.bf16.mxu0 0
        %5166 = vmatpush1.bf16.msra.mxu0 0
        %5167 = vmatprep.subr.bf16.mxu0 0
        %5168 = vmatpush1.bf16.msra.mxu0 0
        %5169 = vmatprep.subr.bf16.mxu0 0
        %5170 = vmatpush1.bf16.msra.mxu0 0
        %5171 = vmatprep.subr.bf16.mxu0 0
        %5172 = vmatpush1.bf16.msra.mxu0 0
        %5173 = vmatprep.subr.bf16.mxu0 0
        %5174 = vmatpush1.bf16.msra.mxu0 0
        %5175 = vmatprep.subr.bf16.mxu0 0
        %5176 = vmatpush1.bf16.msra.mxu0 %v5112
        %5177 = vmatprep.subr.bf16.mxu0 0
        %5178 = vmatpush1.bf16.msra.mxu0 %v5111
        %5179 = vmatprep.subr.bf16.mxu0 0
        %5180 = vmatpush2.bf16.msra.mxu0 0
        %5181 = vmatprep.subr.bf16.mxu0 0
        %5182 = vmatpush2.bf16.msra.mxu0 0
        %5183 = vmatprep.subr.bf16.mxu0 0
        %5184 = vmatpush2.bf16.msra.mxu0 0
        %5185 = vmatprep.subr.bf16.mxu0 0
        %5186 = vmatpush2.bf16.msra.mxu0 0
        %5187 = vmatprep.subr.bf16.mxu0 0
        %5188 = vmatpush2.bf16.msra.mxu0 0
        %5189 = vmatprep.subr.bf16.mxu0 0
        %5190 = vmatpush2.bf16.msra.mxu0 0
        %5191 = vmatprep.subr.bf16.mxu0 0
        %5192 = vmatpush2.bf16.msra.mxu0 0
        %5193 = vmatprep.subr.bf16.mxu0 0
        %5194 = vmatpush2.bf16.msra.mxu0 0
        %5195 = vmatprep.mubr.bf16.mxu0 0
        %5196 = vmatmul.mubr.bf16.gmra.mxu0 %v5116
        %v5197 = vpop.f32.mrf.mxu0
        %v5198 = vadd.f32 %v5101, %v5197
        %v5199 = vpop.f32.mrf.mxu0
        %v5200 = vpop.f32.mrf.mxu0
        %v5201 = vadd.f32 %v5101, %v5200
        %v5202 = vpop.f32.mrf.mxu0
        %5203 = vmatprep.mubr.bf16.mxu0 0
        %5204 = vmatmul.mubr.bf16.gmra.mxu0 %v5119
        %v5205 = vpop.f32.mrf.mxu0
        %v5206 = vadd.f32 %v5101, %v5205
        %v5207 = vpop.f32.mrf.mxu0
        %v5208 = vpop.f32.mrf.mxu0
        %v5209 = vadd.f32 %v5101, %v5208
        %v5210 = vpop.f32.mrf.mxu0
        %5211 = vmatprep.mubr.bf16.mxu0 0
        %5212 = vmatmul.mubr.bf16.gmra.mxu0 %v5122
        %v5213 = vpop.f32.mrf.mxu0
        %v5214 = vadd.f32 %v5101, %v5213
        %v5215 = vpop.f32.mrf.mxu0
        %v5216 = vpop.f32.mrf.mxu0
        %v5217 = vadd.f32 %v5101, %v5216
        %v5218 = vpop.f32.mrf.mxu0
        %5219 = vmatprep.mubr.bf16.mxu0 0
        %5220 = vmatmul.mubr.bf16.gmra.mxu0 %v5125
        %v5221 = vpop.f32.mrf.mxu0
        %v5222 = vadd.f32 %v5101, %v5221
        %v5223 = vpop.f32.mrf.mxu0
        %v5224 = vpop.f32.mrf.mxu0
        %v5225 = vadd.f32 %v5101, %v5224
        %v5226 = vpop.f32.mrf.mxu0
        %5227 = vmatprep.mubr.bf16.mxu0 0
        %5228 = vmatmul.mubr.bf16.gmra.mxu0 %v5128
        %v5229 = vpop.f32.mrf.mxu0
        %v5230 = vadd.f32 %v5101, %v5229
        %v5231 = vpop.f32.mrf.mxu0
        %v5232 = vpop.f32.mrf.mxu0
        %v5233 = vadd.f32 %v5101, %v5232
        %v5234 = vpop.f32.mrf.mxu0
        %5235 = vmatprep.mubr.bf16.mxu0 0
        %5236 = vmatmul.mubr.bf16.gmra.mxu0 %v5131
        %v5237 = vpop.f32.mrf.mxu0
        %v5238 = vadd.f32 %v5101, %v5237
        %v5239 = vpop.f32.mrf.mxu0
        %v5240 = vpop.f32.mrf.mxu0
        %v5241 = vadd.f32 %v5101, %v5240
        %v5242 = vpop.f32.mrf.mxu0
        %5243 = vmatprep.mubr.bf16.mxu0 0
        %5244 = vmatmul.mubr.bf16.gmra.mxu0 %v5134
        %v5245 = vpop.f32.mrf.mxu0
        %v5246 = vadd.f32 %v5101, %v5245
        %v5247 = vpop.f32.mrf.mxu0
        %v5248 = vpop.f32.mrf.mxu0
        %v5249 = vadd.f32 %v5101, %v5248
        %v5250 = vpop.f32.mrf.mxu0
        %5251 = vmatprep.mubr.bf16.mxu0 0
        %5252 = vmatmul.mubr.bf16.gmra.mxu0 %v5137
        %v5253 = vpop.f32.mrf.mxu0
        %v5254 = vadd.f32 %v5101, %v5253
        %v5255 = vpop.f32.mrf.mxu0
        %v5256 = vpop.f32.mrf.mxu0
        %v5257 = vadd.f32 %v5101, %v5256
        %v5258 = vpop.f32.mrf.mxu0
        %5259 = vmatprep.mubr.bf16.mxu0 0
        %5260 = vmatmul.mubr.bf16.gmra.mxu0 %v5140
        %v5261 = vpop.f32.mrf.mxu0
        %v5262 = vadd.f32 %v5101, %v5261
        %v5263 = vpop.f32.mrf.mxu0
        %v5264 = vpop.f32.mrf.mxu0
        %v5265 = vadd.f32 %v5101, %v5264
        %v5266 = vpop.f32.mrf.mxu0
        %5267 = vmatprep.mubr.bf16.mxu0 0
        %5268 = vmatmul.mubr.bf16.gmra.mxu0 %v5143
        %v5269 = vpop.f32.mrf.mxu0
        %v5270 = vadd.f32 %v5101, %v5269
        %v5271 = vpop.f32.mrf.mxu0
        %v5272 = vpop.f32.mrf.mxu0
        %v5273 = vadd.f32 %v5101, %v5272
        %v5274 = vpop.f32.mrf.mxu0
        %5275 = vmatprep.mubr.bf16.mxu0 0
        %5276 = vmatmul.mubr.bf16.gmra.mxu0 %v5146
        %v5277 = vpop.f32.mrf.mxu0
        %v5278 = vadd.f32 %v5101, %v5277
        %v5279 = vpop.f32.mrf.mxu0
        %v5280 = vpop.f32.mrf.mxu0
        %v5281 = vadd.f32 %v5101, %v5280
        %v5282 = vpop.f32.mrf.mxu0
        %5283 = vmatprep.mubr.bf16.mxu0 0
        %5284 = vmatmul.mubr.bf16.gmra.mxu0 %v5149
        %v5285 = vpop.f32.mrf.mxu0
        %v5286 = vadd.f32 %v5101, %v5285
        %v5287 = vpop.f32.mrf.mxu0
        %v5288 = vpop.f32.mrf.mxu0
        %v5289 = vadd.f32 %v5101, %v5288
        %v5290 = vpop.f32.mrf.mxu0
        %5291 = vmatprep.mubr.bf16.mxu0 0
        %5292 = vmatmul.mubr.bf16.gmra.mxu0 %v5152
        %v5293 = vpop.f32.mrf.mxu0
        %v5294 = vadd.f32 %v5101, %v5293
        %v5295 = vpop.f32.mrf.mxu0
        %v5296 = vpop.f32.mrf.mxu0
        %v5297 = vadd.f32 %v5101, %v5296
        %v5298 = vpop.f32.mrf.mxu0
        %5299 = vmatprep.mubr.bf16.mxu0 0
        %5300 = vmatmul.mubr.bf16.gmra.mxu0 %v5155
        %v5301 = vpop.f32.mrf.mxu0
        %v5302 = vadd.f32 %v5101, %v5301
        %v5303 = vpop.f32.mrf.mxu0
        %v5304 = vpop.f32.mrf.mxu0
        %v5305 = vadd.f32 %v5101, %v5304
        %v5306 = vpop.f32.mrf.mxu0
        %5307 = vmatprep.mubr.bf16.mxu0 0
        %5308 = vmatmul.mubr.bf16.gmra.mxu0 %v5158
        %v5309 = vpop.f32.mrf.mxu0
        %v5310 = vadd.f32 %v5101, %v5309
        %v5311 = vpop.f32.mrf.mxu0
        %v5312 = vpop.f32.mrf.mxu0
        %v5313 = vadd.f32 %v5101, %v5312
        %v5314 = vpop.f32.mrf.mxu0
        %5315 = vmatprep.mubr.bf16.mxu0 0
        %5316 = vmatmul.mubr.bf16.gmra.mxu0 %v5161
        %v5317 = vpop.f32.mrf.mxu0
        %v5318 = vadd.f32 %v5101, %v5317
        %v5319 = vpop.f32.mrf.mxu0
        %v5320 = vpop.f32.mrf.mxu0
        %v5321 = vadd.f32 %v5101, %v5320
        %v5322 = vpop.f32.mrf.mxu0
        %5323 = vdwg.mxu0
        %v5324 = vld [vmem:[%s425] sm:$0xff]
        %v5325 = vld [vmem:[%s425 + $0x8] sm:$0xff]
        %v5326 = vld [vmem:[%s425 + $0x10] sm:$0xff]
        %v5327 = vld [vmem:[%s425 + $0x18] sm:$0xff]
        %v5328 = vld [vmem:[%s425 + $0x20] sm:$0xff]
        %v5329 = vld [vmem:[%s425 + $0x28] sm:$0xff]
        %v5330 = vld [vmem:[%s425 + $0x30] sm:$0xff]
        %v5331 = vld [vmem:[%s425 + $0x38] sm:$0xff]
        %v5332 = vld [vmem:[%s425 + $0x40] sm:$0xff]
        %v5333 = vld [vmem:[%s425 + $0x48] sm:$0xff]
        %v5334 = vld [vmem:[%s425 + $0x50] sm:$0xff]
        %v5335 = vld [vmem:[%s425 + $0x58] sm:$0xff]
        %v5336 = vld [vmem:[%s425 + $0x60] sm:$0xff]
        %v5337 = vld [vmem:[%s425 + $0x68] sm:$0xff]
        %v5338 = vld [vmem:[%s425 + $0x70] sm:$0xff]
        %v5339 = vld [vmem:[%s425 + $0x78] sm:$0xff]
        %v5340 = vld [vmem:[%s425 + $0x80] sm:$0xff]
        %v5341 = vld [vmem:[%s425 + $0x88] sm:$0xff]
        %v5342 = vld [vmem:[%s425 + $0x90] sm:$0xff]
        %v5343 = vld [vmem:[%s425 + $0x98] sm:$0xff]
        %v5344 = vld [vmem:[%s425 + $0xa0] sm:$0xff]
        %v5345 = vld [vmem:[%s425 + $0xa8] sm:$0xff]
        %v5346 = vld [vmem:[%s425 + $0xb0] sm:$0xff]
        %v5347 = vld [vmem:[%s425 + $0xb8] sm:$0xff]
        %v5348 = vld [vmem:[%s425 + $0xc0] sm:$0xff]
        %v5349 = vld [vmem:[%s425 + $0xc8] sm:$0xff]
        %v5350 = vld [vmem:[%s425 + $0xd0] sm:$0xff]
        %v5351 = vld [vmem:[%s425 + $0xd8] sm:$0xff]
        %v5352 = vld [vmem:[%s425 + $0xe0] sm:$0xff]
        %v5353 = vld [vmem:[%s425 + $0xe8] sm:$0xff]
        %v5354 = vld [vmem:[%s425 + $0xf0] sm:$0xff]
        %v5355 = vld [vmem:[%s425 + $0xf8] sm:$0xff]
        %v5356 = vadd.f32 %v5198, %v5324
        %v5357 = vadd.f32 %v5201, %v5325
        %v5358 = vadd.f32 %v5206, %v5326
        %v5359 = vadd.f32 %v5209, %v5327
        %v5360 = vadd.f32 %v5214, %v5328
        %v5361 = vadd.f32 %v5217, %v5329
        %v5362 = vadd.f32 %v5222, %v5330
        %v5363 = vadd.f32 %v5225, %v5331
        %v5364 = vadd.f32 %v5230, %v5332
        %v5365 = vadd.f32 %v5233, %v5333
        %v5366 = vadd.f32 %v5238, %v5334
        %v5367 = vadd.f32 %v5241, %v5335
        %v5368 = vadd.f32 %v5246, %v5336
        %v5369 = vadd.f32 %v5249, %v5337
        %v5370 = vadd.f32 %v5254, %v5338
        %v5371 = vadd.f32 %v5257, %v5339
        %v5372 = vadd.f32 %v5262, %v5340
        %v5373 = vadd.f32 %v5265, %v5341
        %v5374 = vadd.f32 %v5270, %v5342
        %v5375 = vadd.f32 %v5273, %v5343
        %v5376 = vadd.f32 %v5278, %v5344
        %v5377 = vadd.f32 %v5281, %v5345
        %v5378 = vadd.f32 %v5286, %v5346
        %v5379 = vadd.f32 %v5289, %v5347
        %v5380 = vadd.f32 %v5294, %v5348
        %v5381 = vadd.f32 %v5297, %v5349
        %v5382 = vadd.f32 %v5302, %v5350
        %v5383 = vadd.f32 %v5305, %v5351
        %v5384 = vadd.f32 %v5310, %v5352
        %v5385 = vadd.f32 %v5313, %v5353
        %v5386 = vadd.f32 %v5318, %v5354
        %v5387 = vadd.f32 %v5321, %v5355
        %v5388 = vmax.f32 %v5356, 0.0
        %v5389 = vmax.f32 %v5357, 0.0
        %v5390 = vmax.f32 %v5358, 0.0
        %v5391 = vmax.f32 %v5359, 0.0
        %v5392 = vmax.f32 %v5360, 0.0
        %v5393 = vmax.f32 %v5361, 0.0
        %v5394 = vmax.f32 %v5362, 0.0
        %v5395 = vmax.f32 %v5363, 0.0
        %v5396 = vmax.f32 %v5364, 0.0
        %v5397 = vmax.f32 %v5365, 0.0
        %v5398 = vmax.f32 %v5366, 0.0
        %v5399 = vmax.f32 %v5367, 0.0
        %v5400 = vmax.f32 %v5368, 0.0
        %v5401 = vmax.f32 %v5369, 0.0
        %v5402 = vmax.f32 %v5370, 0.0
        %v5403 = vmax.f32 %v5371, 0.0
        %v5404 = vmax.f32 %v5372, 0.0
        %v5405 = vmax.f32 %v5373, 0.0
        %v5406 = vmax.f32 %v5374, 0.0
        %v5407 = vmax.f32 %v5375, 0.0
        %v5408 = vmax.f32 %v5376, 0.0
        %v5409 = vmax.f32 %v5377, 0.0
        %v5410 = vmax.f32 %v5378, 0.0
        %v5411 = vmax.f32 %v5379, 0.0
        %v5412 = vmax.f32 %v5380, 0.0
        %v5413 = vmax.f32 %v5381, 0.0
        %v5414 = vmax.f32 %v5382, 0.0
        %v5415 = vmax.f32 %v5383, 0.0
        %v5416 = vmax.f32 %v5384, 0.0
        %v5417 = vmax.f32 %v5385, 0.0
        %v5418 = vmax.f32 %v5386, 0.0
        %v5419 = vmax.f32 %v5387, 0.0
        %5420 = vst [vmem:[%s478] sm:$0xff] %v5388
        %5421 = vst [vmem:[%s478 + $0x8] sm:$0xff] %v5389
        %5422 = vst [vmem:[%s478 + $0x10] sm:$0xff] %v5390
        %5423 = vst [vmem:[%s478 + $0x18] sm:$0xff] %v5391
        %5424 = vst [vmem:[%s478 + $0x20] sm:$0xff] %v5392
        %5425 = vst [vmem:[%s478 + $0x28] sm:$0xff] %v5393
        %5426 = vst [vmem:[%s478 + $0x30] sm:$0xff] %v5394
        %5427 = vst [vmem:[%s478 + $0x38] sm:$0xff] %v5395
        %5428 = vst [vmem:[%s478 + $0x40] sm:$0xff] %v5396
        %5429 = vst [vmem:[%s478 + $0x48] sm:$0xff] %v5397
        %5430 = vst [vmem:[%s478 + $0x50] sm:$0xff] %v5398
        %5431 = vst [vmem:[%s478 + $0x58] sm:$0xff] %v5399
        %5432 = vst [vmem:[%s478 + $0x60] sm:$0xff] %v5400
        %5433 = vst [vmem:[%s478 + $0x68] sm:$0xff] %v5401
        %5434 = vst [vmem:[%s478 + $0x70] sm:$0xff] %v5402
        %5435 = vst [vmem:[%s478 + $0x78] sm:$0xff] %v5403
        %5436 = vst [vmem:[%s478 + $0x80] sm:$0xff] %v5404
        %5437 = vst [vmem:[%s478 + $0x88] sm:$0xff] %v5405
        %5438 = vst [vmem:[%s478 + $0x90] sm:$0xff] %v5406
        %5439 = vst [vmem:[%s478 + $0x98] sm:$0xff] %v5407
        %5440 = vst [vmem:[%s478 + $0xa0] sm:$0xff] %v5408
        %5441 = vst [vmem:[%s478 + $0xa8] sm:$0xff] %v5409
        %5442 = vst [vmem:[%s478 + $0xb0] sm:$0xff] %v5410
        %5443 = vst [vmem:[%s478 + $0xb8] sm:$0xff] %v5411
        %5444 = vst [vmem:[%s478 + $0xc0] sm:$0xff] %v5412
        %5445 = vst [vmem:[%s478 + $0xc8] sm:$0xff] %v5413
        %5446 = vst [vmem:[%s478 + $0xd0] sm:$0xff] %v5414
        %5447 = vst [vmem:[%s478 + $0xd8] sm:$0xff] %v5415
        %5448 = vst [vmem:[%s478 + $0xe0] sm:$0xff] %v5416
        %5449 = vst [vmem:[%s478 + $0xe8] sm:$0xff] %v5417
        %5450 = vst [vmem:[%s478 + $0xf0] sm:$0xff] %v5418
        %5451 = vst [vmem:[%s478 + $0xf8] sm:$0xff] %v5419
        %s5452 = sand.u32 %s277, 1
        %s5453 = scalar_lea.sflag [#allocation5], %s5452
        %s5454 = sand.u32 %s277, 1
        %s5455 = smul.addr %s5454, 256
        %s5456 = scalar_lea.vmem [#allocation9], %s5455
        // Predicated region
        $region73: #{tpu_custom_call.1} parent=55 // pred_check
          %p5457 = pneg %p287
        $region74: #{tpu_custom_call.1} parent=55 // pred_check_branch
          %5459 = sbr.rel (%p5457) target = $region76
        $region75: #{tpu_custom_call.1} parent=55 // pred_region
          %s5460 = smul.u32 16, %s34
          %s5462 = ssub.s32 4096, 4096
          %5463 = vsyncadd %s5453, %s5462
          %s5464 = smul.addr %s5460, 2
          %s5465 = smul.addr %s33, 32
          %s5466 = sadd.s32 %s5464, %s5465
          %s5467 = smul.addr %s5466, 128
          %s5468 = scalar_lea.hbm %s9, %s5467
          %s5469 = sshll.u32 %s5456, 4
          %s5470 = int_to_ptr.vmem [resolvable:$true] %s5469
          %5475 = dma.vmem_to_hbm [thread:$0]  %s5470, 4096, %s5468, %s5453, 128, 128, 8
        $region76: #{tpu_custom_call.1} parent=55 // pred_fallthru
          _
      $region56: #{tpu_custom_call.1} parent=5 // pred_fallthru
        _
      %p5476 = scmp.le.s32.totalorder 2, %s24
      // Predicated region
      $region77: #{tpu_custom_call.1} parent=5 // pred_check
        %p5477 = pneg %p5476
      $region78: #{tpu_custom_call.1} parent=5 // pred_check_branch
        %5479 = sbr.rel (%p5477) target = $region80
      $region79: #{tpu_custom_call.1} parent=5 // pred_region
        %s5480 = ssub.s32 %s24, 2
        // Predicated region
        $region81: #{tpu_custom_call.1} parent=79 // pred_check
          %p5481 = pneg %p293
        $region82: #{tpu_custom_call.1} parent=79 // pred_check_branch
          %5483 = sbr.rel (%p5481) target = $region84
        $region83: #{tpu_custom_call.1} parent=79 // pred_region
          %s5484 = sand.u32 %s278, 1
          %s5485 = scalar_lea.sflag [#allocation5], %s5484
          %s5486 = sand.u32 %s278, 1
          %s5487 = smul.addr %s5486, 256
          %s5488 = scalar_lea.vmem [#allocation9], %s5487
          %5489 = dma.done %s5485, 4096
        $region84: #{tpu_custom_call.1} parent=79 // pred_fallthru
          _
      $region80: #{tpu_custom_call.1} parent=5 // pred_fallthru
        _
    $region6: #{tpu_custom_call.1} parent=1 // loop_footer
      %s28 = sadd.s32 1, %s24
    $region7: #{tpu_custom_call.1} parent=1 // loop_footer_branch
      %23 = sbr.rel target = $region3
    $region8: #{tpu_custom_call.1} parent=1 // loop_exit
      _
    %5490 = vsyncpa [#allocation4], 1
    %s5491 = scalar_lea.sflag [#allocation4], 1
    %5492 = vsyncpa %s5491, 1
    %5493 = vsyncpa [#allocation7], 1
    %s5494 = scalar_lea.sflag [#allocation7], 1
    %5495 = vsyncpa %s5494, 1
    %5496 = vsyncpa [#allocation5], 1
    %s5497 = scalar_lea.sflag [#allocation5], 1
    %5498 = vsyncpa %s5497, 1

</llo_original>
